<compile_context>
chip_gen: v5e
topology: v5e:2x2
jax: 0.10.0
libtpu: 0.0.40
codegen_flags: <defaults>
</compile_context>

<pallas_src>
import numpy as np
import jax
import jax.numpy as jnp
from jax import lax
from jax.experimental import pallas as pl
from jax.experimental.pallas import tpu as pltpu

NEG = -1e9        # finite "minus infinity" for padded softmax lanes (never NaN)
TB_MAX = 256      # max batch tile (MXU-filling, ~10 MiB VMEM/step incl. pipeline bufs)


def _round_up(x, m):
    return -(-x // m) * m


def _detect_bf16_eup():
    """bf16 VPU/EUP exists on v6e/v7x; keep f32 elementwise on older chips."""
    try:
        kind = jax.devices()[0].device_kind.lower()
    except Exception:
        return True
    return not any(t in kind for t in ("v2", "v3", "v4", "v5"))


_BF16_TANH = _detect_bf16_eup()


# ----------------------------------------------------------------------------- kernel
def _make_kernel(TB, bf16_tanh):
    act_dt = jnp.bfloat16 if bf16_tanh else jnp.float32

    def kernel(p1_ref, p2_ref, w1_ref, w2_ref, fcw_ref, b_ref, out_ref):
        # bias slab rows live at 8-row (sublane-aligned) stride
        def brow(e, w):
            return b_ref[e * 8:e * 8 + 1, :w]                       # (1, w) f32

        def branch(p_ref, s):
            w1 = w1_ref[s * 256:s * 256 + 250, :]                   # (250,160) bf16
            b1b = jnp.broadcast_to(brow(s, 160), (TB, 160))         # hoisted out of loop
            c2 = jnp.zeros((TB, 128), jnp.float32)
            # conv1 (one output row per step) + folded avg-pool + conv2 accumulation
            for qy in range(10):
                h = jnp.dot(p_ref[qy], w1,
                            preferred_element_type=jnp.float32)     # (TB,160)
                h = jnp.tanh((h + b1b).astype(act_dt))               # bf16 EUP on v6e/v7x
                wq = w2_ref[qy * 160:(qy + 1) * 160,
                            s * 128:(s + 1) * 128]                  # (160,128) bf16
                c2 = c2 + jnp.dot(h.astype(jnp.bfloat16), wq,
                                  preferred_element_type=jnp.float32)
            c2 = jnp.tanh((c2 + jnp.broadcast_to(brow(2 + s, 128),
                                                 (TB, 128))).astype(act_dt))
            # fc1 + relu  (bf16 x bf16 single-pass MXU, f32 accumulate)
            y = jnp.dot(c2.astype(jnp.bfloat16), fcw_ref[s * 128:(s + 1) * 128, :],
                        preferred_element_type=jnp.float32) + brow(4 + s, 128)
            y = jnp.maximum(y, 0.0)
            # fc2 + log_softmax (padded logit lanes carry a -1e9 bias)
            z = jnp.dot(y.astype(jnp.bfloat16),
                        fcw_ref[256 + s * 128:256 + (s + 1) * 128, :],
                        preferred_element_type=jnp.float32) + brow(6 + s, 128)
            z = z - jnp.max(z, axis=1, keepdims=True)
            return z - jnp.log(jnp.sum(jnp.exp(z), axis=1, keepdims=True))

        o1 = branch(p1_ref, 0)
        o2 = branch(p2_ref, 1)
        pair = jnp.concatenate([o1, o2], axis=1).astype(jnp.bfloat16)   # (TB,256)
        pair = jnp.maximum(
            jnp.dot(pair, fcw_ref[512:768, :],
                    preferred_element_type=jnp.float32) + brow(8, 128), 0.0)
        pair = jnp.maximum(
            jnp.dot(pair.astype(jnp.bfloat16), fcw_ref[768:896, :],
                    preferred_element_type=jnp.float32) + brow(9, 128), 0.0)
        logits = jnp.dot(pair.astype(jnp.bfloat16), fcw_ref[896:1024, :],
                         preferred_element_type=jnp.float32) + brow(10, 128)
        out_ref[...] = 1.0 / (1.0 + jnp.exp(-logits))               # sigmoid, lane-dense

    return kernel


# ----------------------------------------------------------------------------- glue
def _patches(im):
    """(B,14,14) -> (10, B, 250) bf16; [qy, b, qx*25 + dy*5 + dx] = im[b, qy+dy, qx+dx]."""
    B = im.shape[0]
    cols = [im[:, dy:dy + 10, dx:dx + 10] for dy in range(5) for dx in range(5)]
    st = jnp.stack(cols, axis=-1)                  # (B, 10, 10, 25) = [b, qy, qx, k]
    st = jnp.transpose(st, (1, 0, 2, 3))           # (10, B, 10, 25)
    return st.reshape(10, B, 250).astype(jnp.bfloat16)


def _pack_params(params):
    f32 = jnp.float32

    def branch_pack(cw1, cb1, cw2, cb2, f1w, f1b, f2w, f2b):
        # conv1: (16,1,5,5) -> block-diagonal over the 10 output columns: (256,160)
        w1 = cw1.reshape(16, 25).T.astype(f32)                       # (25,16) [k,c]
        w1rep = jnp.kron(jnp.eye(10, dtype=f32), w1)                 # (250,160)
        w1rep = jnp.pad(w1rep, ((0, 6), (0, 0)))                     # (256,160)
        b1rep = jnp.tile(cb1.astype(f32), 10)                        # (160,)
        # conv2 with 2x2/2 avg-pool folded in: (1600,128)
        w2 = jnp.transpose(cw2.astype(f32), (2, 3, 1, 0))            # (ky,kx,c,o)
        w2 = jnp.repeat(jnp.repeat(w2, 2, axis=0), 2, axis=1) * 0.25 # (10,10,16,120)
        w2 = jnp.pad(w2.reshape(1600, 120), ((0, 0), (0, 8)))        # (1600,128)
        b2 = jnp.pad(cb2.astype(f32), (0, 8))                        # (128,)
        # fc1 (120->82) and fc2 (82->10), zero-padded to 128 lanes
        fc1 = jnp.pad(f1w.T.astype(f32), ((0, 8), (0, 46)))          # (128,128)
        fb1 = jnp.pad(f1b.astype(f32), (0, 46))                      # (128,)
        fc2 = jnp.pad(f2w.T.astype(f32), ((0, 46), (0, 118)))        # (128,128)
        fb2 = jnp.pad(f2b.astype(f32), (0, 118), constant_values=NEG)
        return w1rep, b1rep, w2, b2, fc1, fb1, fc2, fb2

    a = branch_pack(params["conv1_w"], params["conv1_b"],
                    params["conv2_w"], params["conv2_b"],
                    params["fc1_w"], params["fc1_b"],
                    params["fc2_w"], params["fc2_b"])
    b = branch_pack(params["conv1_2_w"], params["conv1_2_b"],
                    params["conv2_2_w"], params["conv2_2_b"],
                    params["fc1_2_w"], params["fc1_2_b"],
                    params["fc2_2_w"], params["fc2_2_b"])

    w1_pair = jnp.concatenate([a[0], b[0]], axis=0).astype(jnp.bfloat16)  # (512,160)
    w2_pair = jnp.concatenate([a[2], b[2]], axis=1).astype(jnp.bfloat16)  # (1600,256)

    # head: fc3 (20->100), fc4 (100->100), fc5 (100->2), padded to 128 lanes.
    # Rows hit by padded (-1e9) log-softmax lanes stay exactly zero.
    w3t = params["fc3_w"].T.astype(f32)                              # (20,100)
    w3 = jnp.zeros((256, 128), f32)
    w3 = w3.at[0:10, 0:100].set(w3t[0:10])
    w3 = w3.at[128:138, 0:100].set(w3t[10:20])
    b3 = jnp.pad(params["fc3_b"].astype(f32), (0, 28))
    w4 = jnp.pad(params["fc4_w"].T.astype(f32), ((0, 28), (0, 28)))
    b4 = jnp.pad(params["fc4_b"].astype(f32), (0, 28))
    w5 = jnp.pad(params["fc5_w"].T.astype(f32), ((0, 28), (0, 126)))
    b5 = jnp.pad(params["fc5_b"].astype(f32), (0, 126))

    # all fc weights as one bf16 slab (single-pass MXU, half the DMA/VMEM)
    fcw = jnp.concatenate([a[4], b[4], a[6], b[6], w3, w4, w5],
                          axis=0).astype(jnp.bfloat16)               # (1024,128)

    bias = jnp.zeros((88, 160), f32)
    entries = [a[1], b[1], a[3], b[3], a[5], b[5], a[7], b[7], b3, b4, b5]
    for e, v in enumerate(entries):
        bias = bias.at[e * 8, :v.shape[0]].set(v)
    return w1_pair, w2_pair, fcw, bias


def _tiling(B):
    """Return (padded_B, TB): TB is 16-aligned (bf16 sublanes), <= TB_MAX, and the
    padded batch is a whole number of tiles so large batches give a multi-step
    parallel grid (megacore sharding on v7x)."""
    if B <= TB_MAX:
        TB = _round_up(max(B, 1), 16)
        return TB, TB
    n_tiles = -(-B // TB_MAX)
    TB = _round_up(-(-B // n_tiles), 16)
    return n_tiles * TB, TB


def sub_lenet5_forward(im1, im2, params):
    im1 = im1.reshape(-1, 14, 14).astype(jnp.float32)
    im2 = im2.reshape(-1, 14, 14).astype(jnp.float32)
    B = im1.shape[0]
    Bp, TB = _tiling(B)
    if Bp != B:
        pad = ((0, Bp - B), (0, 0), (0, 0))
        im1 = jnp.pad(im1, pad)
        im2 = jnp.pad(im2, pad)
    grid = (Bp // TB,)

    p1 = _patches(im1)
    p2 = _patches(im2)
    w1_pair, w2_pair, fcw, bias = _pack_params(params)

    out = pl.pallas_call(
        _make_kernel(TB, _BF16_TANH),
        out_shape=jax.ShapeDtypeStruct((Bp, 128), jnp.float32),
        grid=grid,
        in_specs=[
            pl.BlockSpec((10, TB, 250), lambda i: (0, i, 0)),   # patches branch 1
            pl.BlockSpec((10, TB, 250), lambda i: (0, i, 0)),   # patches branch 2
            pl.BlockSpec((512, 160), lambda i: (0, 0)),         # conv1 weights (both)
            pl.BlockSpec((1600, 256), lambda i: (0, 0)),        # conv2+pool weights (both)
            pl.BlockSpec((1024, 128), lambda i: (0, 0)),        # all fc weights (bf16)
            pl.BlockSpec((88, 160), lambda i: (0, 0)),          # all biases (f32)
        ],
        out_specs=pl.BlockSpec((TB, 128), lambda i: (i, 0)),
        compiler_params=pltpu.CompilerParams(
            dimension_semantics=("parallel",),
            vmem_limit_bytes=48 * 1024 * 1024),
    )(p1, p2, w1_pair, w2_pair, fcw, bias)
    return out[:B, :2]


# ----------------------------------------------------------------------------- params
def init_params(key):
    def uniform(k, shape, fan_in):
        bound = 1.0 / np.sqrt(fan_in)
        return jax.random.uniform(k, shape, jnp.float32, -bound, bound)

    layers = [
        ("conv1", (16, 1, 5, 5), 25), ("conv2", (120, 16, 5, 5), 16 * 25),
        ("fc1", (82, 120), 120), ("fc2", (10, 82), 82),
        ("conv1_2", (16, 1, 5, 5), 25), ("conv2_2", (120, 16, 5, 5), 16 * 25),
        ("fc1_2", (82, 120), 120), ("fc2_2", (10, 82), 82),
        ("fc3", (100, 20), 20), ("fc4", (100, 100), 100), ("fc5", (2, 100), 100),
    ]
    keys = jax.random.split(key, 2 * len(layers))
    params = {}
    for i, (name, shape, fan_in) in enumerate(layers):
        params[name + "_w"] = uniform(keys[2 * i], shape, fan_in)
        params[name + "_b"] = uniform(keys[2 * i + 1], (shape[0],), fan_in)
    return params


# ----------------------------------------------------------------------------- pure-JAX reference
def ref_forward(im1, im2, params):
    def branch(im, pw1, pb1, pw2, pb2, fw1, fb1, fw2, fb2):
        x = im.reshape(-1, 1, 14, 14).astype(jnp.float32)
        y = lax.conv_general_dilated(x, pw1, (1, 1), "VALID",
                                     dimension_numbers=("NCHW", "OIHW", "NCHW"))
        y = jnp.tanh(y + pb1[None, :, None, None])
        y = lax.reduce_window(y, 0.0, lax.add, (1, 1, 2, 2), (1, 1, 2, 2), "VALID") * 0.25
        y = lax.conv_general_dilated(y, pw2, (1, 1), "VALID",
                                     dimension_numbers=("NCHW", "OIHW", "NCHW"))
        y = jnp.tanh(y + pb2[None, :, None, None])
        y = y.reshape(y.shape[0], y.shape[1])
        y = jax.nn.relu(y @ fw1.T + fb1)
        return jax.nn.log_softmax(y @ fw2.T + fb2, axis=1)

    o1 = branch(im1, params["conv1_w"], params["conv1_b"], params["conv2_w"], params["conv2_b"],
                params["fc1_w"], params["fc1_b"], params["fc2_w"], params["fc2_b"])
    o2 = branch(im2, params["conv1_2_w"], params["conv1_2_b"], params["conv2_2_w"], params["conv2_2_b"],
                params["fc1_2_w"], params["fc1_2_b"], params["fc2_2_w"], params["fc2_2_b"])
    pair = jnp.concatenate([o1, o2], axis=1)
    pair = jax.nn.relu(pair @ params["fc3_w"].T + params["fc3_b"])
    pair = jax.nn.relu(pair @ params["fc4_w"].T + params["fc4_b"])
    return jax.nn.sigmoid(pair @ params["fc5_w"].T + params["fc5_b"])


# ----------------------------------------------------------------------------- main
if __name__ == "__main__":
    key = jax.random.PRNGKey(0)
    pkey, k1, k2 = jax.random.split(key, 3)
    params = init_params(pkey)

    B = 8
    im1 = jax.random.normal(k1, (B, 14, 14), jnp.float32)
    im2 = jax.random.normal(k2, (B, 14, 14), jnp.float32)

    out = jax.block_until_ready(jax.jit(sub_lenet5_forward)(im1, im2, params))
    ref = jax.block_until_ready(ref_forward(im1, im2, params))

    assert out.shape == (B, 2) and out.dtype == jnp.float32
    np.testing.assert_allclose(np.asarray(out), np.asarray(ref), rtol=2e-2, atol=2e-2)
    print("KERNEL_OK")
</pallas_src>

<mosaic_0001>
module attributes {stable_mosaic.version = 11 : i64} {
  func.func @kernel(%arg0: i32, %arg1: memref<10x16x250xbf16, #tpu.memory_space<vmem>>, %arg2: memref<10x16x250xbf16, #tpu.memory_space<vmem>>, %arg3: memref<512x160xbf16, #tpu.memory_space<vmem>>, %arg4: memref<1600x256xbf16, #tpu.memory_space<vmem>>, %arg5: memref<1024x128xbf16, #tpu.memory_space<vmem>>, %arg6: memref<88x160xf32, #tpu.memory_space<vmem>>, %arg7: memref<16x128xf32, #tpu.memory_space<vmem>>) attributes {dimension_semantics = [#tpu.dimension_semantics<parallel>], iteration_bounds = array<i64: 1>, scalar_prefetch = 0 : i64, scratch_operands = 0 : i64, tpu.core_type = #tpu.core_type<tc>, window_params = [{transform_indices = @transform_0, window_bounds = array<i64: 10, 16, 250>}, {transform_indices = @transform_1, window_bounds = array<i64: 10, 16, 250>}, {pipeline_mode = #tpu.pipeline_mode<synchronous>, transform_indices = @transform_2, window_bounds = array<i64: 512, 160>}, {pipeline_mode = #tpu.pipeline_mode<synchronous>, transform_indices = @transform_3, window_bounds = array<i64: 1600, 256>}, {pipeline_mode = #tpu.pipeline_mode<synchronous>, transform_indices = @transform_4, window_bounds = array<i64: 1024, 128>}, {pipeline_mode = #tpu.pipeline_mode<synchronous>, transform_indices = @transform_5, window_bounds = array<i64: 88, 160>}, {transform_indices = @transform_6, window_bounds = array<i64: 16, 128>}]} {
    %c0 = arith.constant 0 : index
    %c0_0 = arith.constant 0 : index
    %0 = vector.load %arg3[%c0, %c0_0] : memref<512x160xbf16, #tpu.memory_space<vmem>>, vector<250x160xbf16>
    %c0_1 = arith.constant 0 : index
    %c0_2 = arith.constant 0 : index
    %1 = vector.load %arg6[%c0_1, %c0_2] : memref<88x160xf32, #tpu.memory_space<vmem>>, vector<1x160xf32>
    %2 = vector.shape_cast %1 : vector<1x160xf32> to vector<1x160xf32>
    %3 = vector.broadcast %2 : vector<1x160xf32> to vector<16x160xf32>
    %cst = arith.constant 0.000000e+00 : f32
    %4 = vector.broadcast %cst : f32 to vector<16x128xf32>
    %c0_3 = arith.constant 0 : index
    %c0_4 = arith.constant 0 : index
    %c0_5 = arith.constant 0 : index
    %5 = vector.load %arg1[%c0_3, %c0_4, %c0_5] : memref<10x16x250xbf16, #tpu.memory_space<vmem>>, vector<1x16x250xbf16>
    %6 = vector.shape_cast %5 : vector<1x16x250xbf16> to vector<16x250xbf16>
    %cst_6 = arith.constant dense<0.000000e+00> : vector<16x160xf32>
    %7 = tpu.matmul %6, %0, %cst_6 {dimension_numbers = #tpu.dot_dimension_numbers<[1], [0], [0], [1], [0, 0, 1, 1], [], []>} : vector<16x250xbf16>, vector<250x160xbf16>, vector<16x160xf32> -> vector<16x160xf32>
    %8 = arith.addf %7, %3 : vector<16x160xf32>
    %9 = arith.truncf %8 : vector<16x160xf32> to vector<16x160xbf16>
    %10 = math.tanh %9 : vector<16x160xbf16>
    %c0_7 = arith.constant 0 : index
    %c0_8 = arith.constant 0 : index
    %11 = vector.load %arg4[%c0_7, %c0_8] : memref<1600x256xbf16, #tpu.memory_space<vmem>>, vector<160x128xbf16>
    %cst_9 = arith.constant dense<0.000000e+00> : vector<16x128xf32>
    %12 = tpu.matmul %10, %11, %cst_9 {dimension_numbers = #tpu.dot_dimension_numbers<[1], [0], [0], [1], [0, 0, 1, 1], [], []>} : vector<16x160xbf16>, vector<160x128xbf16>, vector<16x128xf32> -> vector<16x128xf32>
    %13 = arith.addf %4, %12 : vector<16x128xf32>
    %c1 = arith.constant 1 : index
    %c0_10 = arith.constant 0 : index
    %c0_11 = arith.constant 0 : index
    %14 = vector.load %arg1[%c1, %c0_10, %c0_11] : memref<10x16x250xbf16, #tpu.memory_space<vmem>>, vector<1x16x250xbf16>
    %15 = vector.shape_cast %14 : vector<1x16x250xbf16> to vector<16x250xbf16>
    %cst_12 = arith.constant dense<0.000000e+00> : vector<16x160xf32>
    %16 = tpu.matmul %15, %0, %cst_12 {dimension_numbers = #tpu.dot_dimension_numbers<[1], [0], [0], [1], [0, 0, 1, 1], [], []>} : vector<16x250xbf16>, vector<250x160xbf16>, vector<16x160xf32> -> vector<16x160xf32>
    %17 = arith.addf %16, %3 : vector<16x160xf32>
    %18 = arith.truncf %17 : vector<16x160xf32> to vector<16x160xbf16>
    %19 = math.tanh %18 : vector<16x160xbf16>
    %c160 = arith.constant 160 : index
    %c0_13 = arith.constant 0 : index
    %20 = vector.load %arg4[%c160, %c0_13] : memref<1600x256xbf16, #tpu.memory_space<vmem>>, vector<160x128xbf16>
    %cst_14 = arith.constant dense<0.000000e+00> : vector<16x128xf32>
    %21 = tpu.matmul %19, %20, %cst_14 {dimension_numbers = #tpu.dot_dimension_numbers<[1], [0], [0], [1], [0, 0, 1, 1], [], []>} : vector<16x160xbf16>, vector<160x128xbf16>, vector<16x128xf32> -> vector<16x128xf32>
    %22 = arith.addf %13, %21 : vector<16x128xf32>
    %c2 = arith.constant 2 : index
    %c0_15 = arith.constant 0 : index
    %c0_16 = arith.constant 0 : index
    %23 = vector.load %arg1[%c2, %c0_15, %c0_16] : memref<10x16x250xbf16, #tpu.memory_space<vmem>>, vector<1x16x250xbf16>
    %24 = vector.shape_cast %23 : vector<1x16x250xbf16> to vector<16x250xbf16>
    %cst_17 = arith.constant dense<0.000000e+00> : vector<16x160xf32>
    %25 = tpu.matmul %24, %0, %cst_17 {dimension_numbers = #tpu.dot_dimension_numbers<[1], [0], [0], [1], [0, 0, 1, 1], [], []>} : vector<16x250xbf16>, vector<250x160xbf16>, vector<16x160xf32> -> vector<16x160xf32>
    %26 = arith.addf %25, %3 : vector<16x160xf32>
    %27 = arith.truncf %26 : vector<16x160xf32> to vector<16x160xbf16>
    %28 = math.tanh %27 : vector<16x160xbf16>
    %c320 = arith.constant 320 : index
    %c0_18 = arith.constant 0 : index
    %29 = vector.load %arg4[%c320, %c0_18] : memref<1600x256xbf16, #tpu.memory_space<vmem>>, vector<160x128xbf16>
    %cst_19 = arith.constant dense<0.000000e+00> : vector<16x128xf32>
    %30 = tpu.matmul %28, %29, %cst_19 {dimension_numbers = #tpu.dot_dimension_numbers<[1], [0], [0], [1], [0, 0, 1, 1], [], []>} : vector<16x160xbf16>, vector<160x128xbf16>, vector<16x128xf32> -> vector<16x128xf32>
    %31 = arith.addf %22, %30 : vector<16x128xf32>
    %c3 = arith.constant 3 : index
    %c0_20 = arith.constant 0 : index
    %c0_21 = arith.constant 0 : index
    %32 = vector.load %arg1[%c3, %c0_20, %c0_21] : memref<10x16x250xbf16, #tpu.memory_space<vmem>>, vector<1x16x250xbf16>
    %33 = vector.shape_cast %32 : vector<1x16x250xbf16> to vector<16x250xbf16>
    %cst_22 = arith.constant dense<0.000000e+00> : vector<16x160xf32>
    %34 = tpu.matmul %33, %0, %cst_22 {dimension_numbers = #tpu.dot_dimension_numbers<[1], [0], [0], [1], [0, 0, 1, 1], [], []>} : vector<16x250xbf16>, vector<250x160xbf16>, vector<16x160xf32> -> vector<16x160xf32>
    %35 = arith.addf %34, %3 : vector<16x160xf32>
    %36 = arith.truncf %35 : vector<16x160xf32> to vector<16x160xbf16>
    %37 = math.tanh %36 : vector<16x160xbf16>
    %c480 = arith.constant 480 : index
    %c0_23 = arith.constant 0 : index
    %38 = vector.load %arg4[%c480, %c0_23] : memref<1600x256xbf16, #tpu.memory_space<vmem>>, vector<160x128xbf16>
    %cst_24 = arith.constant dense<0.000000e+00> : vector<16x128xf32>
    %39 = tpu.matmul %37, %38, %cst_24 {dimension_numbers = #tpu.dot_dimension_numbers<[1], [0], [0], [1], [0, 0, 1, 1], [], []>} : vector<16x160xbf16>, vector<160x128xbf16>, vector<16x128xf32> -> vector<16x128xf32>
    %40 = arith.addf %31, %39 : vector<16x128xf32>
    %c4 = arith.constant 4 : index
    %c0_25 = arith.constant 0 : index
    %c0_26 = arith.constant 0 : index
    %41 = vector.load %arg1[%c4, %c0_25, %c0_26] : memref<10x16x250xbf16, #tpu.memory_space<vmem>>, vector<1x16x250xbf16>
    %42 = vector.shape_cast %41 : vector<1x16x250xbf16> to vector<16x250xbf16>
    %cst_27 = arith.constant dense<0.000000e+00> : vector<16x160xf32>
    %43 = tpu.matmul %42, %0, %cst_27 {dimension_numbers = #tpu.dot_dimension_numbers<[1], [0], [0], [1], [0, 0, 1, 1], [], []>} : vector<16x250xbf16>, vector<250x160xbf16>, vector<16x160xf32> -> vector<16x160xf32>
    %44 = arith.addf %43, %3 : vector<16x160xf32>
    %45 = arith.truncf %44 : vector<16x160xf32> to vector<16x160xbf16>
    %46 = math.tanh %45 : vector<16x160xbf16>
    %c640 = arith.constant 640 : index
    %c0_28 = arith.constant 0 : index
    %47 = vector.load %arg4[%c640, %c0_28] : memref<1600x256xbf16, #tpu.memory_space<vmem>>, vector<160x128xbf16>
    %cst_29 = arith.constant dense<0.000000e+00> : vector<16x128xf32>
    %48 = tpu.matmul %46, %47, %cst_29 {dimension_numbers = #tpu.dot_dimension_numbers<[1], [0], [0], [1], [0, 0, 1, 1], [], []>} : vector<16x160xbf16>, vector<160x128xbf16>, vector<16x128xf32> -> vector<16x128xf32>
    %49 = arith.addf %40, %48 : vector<16x128xf32>
    %c5 = arith.constant 5 : index
    %c0_30 = arith.constant 0 : index
    %c0_31 = arith.constant 0 : index
    %50 = vector.load %arg1[%c5, %c0_30, %c0_31] : memref<10x16x250xbf16, #tpu.memory_space<vmem>>, vector<1x16x250xbf16>
    %51 = vector.shape_cast %50 : vector<1x16x250xbf16> to vector<16x250xbf16>
    %cst_32 = arith.constant dense<0.000000e+00> : vector<16x160xf32>
    %52 = tpu.matmul %51, %0, %cst_32 {dimension_numbers = #tpu.dot_dimension_numbers<[1], [0], [0], [1], [0, 0, 1, 1], [], []>} : vector<16x250xbf16>, vector<250x160xbf16>, vector<16x160xf32> -> vector<16x160xf32>
    %53 = arith.addf %52, %3 : vector<16x160xf32>
    %54 = arith.truncf %53 : vector<16x160xf32> to vector<16x160xbf16>
    %55 = math.tanh %54 : vector<16x160xbf16>
    %c800 = arith.constant 800 : index
    %c0_33 = arith.constant 0 : index
    %56 = vector.load %arg4[%c800, %c0_33] : memref<1600x256xbf16, #tpu.memory_space<vmem>>, vector<160x128xbf16>
    %cst_34 = arith.constant dense<0.000000e+00> : vector<16x128xf32>
    %57 = tpu.matmul %55, %56, %cst_34 {dimension_numbers = #tpu.dot_dimension_numbers<[1], [0], [0], [1], [0, 0, 1, 1], [], []>} : vector<16x160xbf16>, vector<160x128xbf16>, vector<16x128xf32> -> vector<16x128xf32>
    %58 = arith.addf %49, %57 : vector<16x128xf32>
    %c6 = arith.constant 6 : index
    %c0_35 = arith.constant 0 : index
    %c0_36 = arith.constant 0 : index
    %59 = vector.load %arg1[%c6, %c0_35, %c0_36] : memref<10x16x250xbf16, #tpu.memory_space<vmem>>, vector<1x16x250xbf16>
    %60 = vector.shape_cast %59 : vector<1x16x250xbf16> to vector<16x250xbf16>
    %cst_37 = arith.constant dense<0.000000e+00> : vector<16x160xf32>
    %61 = tpu.matmul %60, %0, %cst_37 {dimension_numbers = #tpu.dot_dimension_numbers<[1], [0], [0], [1], [0, 0, 1, 1], [], []>} : vector<16x250xbf16>, vector<250x160xbf16>, vector<16x160xf32> -> vector<16x160xf32>
    %62 = arith.addf %61, %3 : vector<16x160xf32>
    %63 = arith.truncf %62 : vector<16x160xf32> to vector<16x160xbf16>
    %64 = math.tanh %63 : vector<16x160xbf16>
    %c960 = arith.constant 960 : index
    %c0_38 = arith.constant 0 : index
    %65 = vector.load %arg4[%c960, %c0_38] : memref<1600x256xbf16, #tpu.memory_space<vmem>>, vector<160x128xbf16>
    %cst_39 = arith.constant dense<0.000000e+00> : vector<16x128xf32>
    %66 = tpu.matmul %64, %65, %cst_39 {dimension_numbers = #tpu.dot_dimension_numbers<[1], [0], [0], [1], [0, 0, 1, 1], [], []>} : vector<16x160xbf16>, vector<160x128xbf16>, vector<16x128xf32> -> vector<16x128xf32>
    %67 = arith.addf %58, %66 : vector<16x128xf32>
    %c7 = arith.constant 7 : index
    %c0_40 = arith.constant 0 : index
    %c0_41 = arith.constant 0 : index
    %68 = vector.load %arg1[%c7, %c0_40, %c0_41] : memref<10x16x250xbf16, #tpu.memory_space<vmem>>, vector<1x16x250xbf16>
    %69 = vector.shape_cast %68 : vector<1x16x250xbf16> to vector<16x250xbf16>
    %cst_42 = arith.constant dense<0.000000e+00> : vector<16x160xf32>
    %70 = tpu.matmul %69, %0, %cst_42 {dimension_numbers = #tpu.dot_dimension_numbers<[1], [0], [0], [1], [0, 0, 1, 1], [], []>} : vector<16x250xbf16>, vector<250x160xbf16>, vector<16x160xf32> -> vector<16x160xf32>
    %71 = arith.addf %70, %3 : vector<16x160xf32>
    %72 = arith.truncf %71 : vector<16x160xf32> to vector<16x160xbf16>
    %73 = math.tanh %72 : vector<16x160xbf16>
    %c1120 = arith.constant 1120 : index
    %c0_43 = arith.constant 0 : index
    %74 = vector.load %arg4[%c1120, %c0_43] : memref<1600x256xbf16, #tpu.memory_space<vmem>>, vector<160x128xbf16>
    %cst_44 = arith.constant dense<0.000000e+00> : vector<16x128xf32>
    %75 = tpu.matmul %73, %74, %cst_44 {dimension_numbers = #tpu.dot_dimension_numbers<[1], [0], [0], [1], [0, 0, 1, 1], [], []>} : vector<16x160xbf16>, vector<160x128xbf16>, vector<16x128xf32> -> vector<16x128xf32>
    %76 = arith.addf %67, %75 : vector<16x128xf32>
    %c8 = arith.constant 8 : index
    %c0_45 = arith.constant 0 : index
    %c0_46 = arith.constant 0 : index
    %77 = vector.load %arg1[%c8, %c0_45, %c0_46] : memref<10x16x250xbf16, #tpu.memory_space<vmem>>, vector<1x16x250xbf16>
    %78 = vector.shape_cast %77 : vector<1x16x250xbf16> to vector<16x250xbf16>
    %cst_47 = arith.constant dense<0.000000e+00> : vector<16x160xf32>
    %79 = tpu.matmul %78, %0, %cst_47 {dimension_numbers = #tpu.dot_dimension_numbers<[1], [0], [0], [1], [0, 0, 1, 1], [], []>} : vector<16x250xbf16>, vector<250x160xbf16>, vector<16x160xf32> -> vector<16x160xf32>
    %80 = arith.addf %79, %3 : vector<16x160xf32>
    %81 = arith.truncf %80 : vector<16x160xf32> to vector<16x160xbf16>
    %82 = math.tanh %81 : vector<16x160xbf16>
    %c1280 = arith.constant 1280 : index
    %c0_48 = arith.constant 0 : index
    %83 = vector.load %arg4[%c1280, %c0_48] : memref<1600x256xbf16, #tpu.memory_space<vmem>>, vector<160x128xbf16>
    %cst_49 = arith.constant dense<0.000000e+00> : vector<16x128xf32>
    %84 = tpu.matmul %82, %83, %cst_49 {dimension_numbers = #tpu.dot_dimension_numbers<[1], [0], [0], [1], [0, 0, 1, 1], [], []>} : vector<16x160xbf16>, vector<160x128xbf16>, vector<16x128xf32> -> vector<16x128xf32>
    %85 = arith.addf %76, %84 : vector<16x128xf32>
    %c9 = arith.constant 9 : index
    %c0_50 = arith.constant 0 : index
    %c0_51 = arith.constant 0 : index
    %86 = vector.load %arg1[%c9, %c0_50, %c0_51] : memref<10x16x250xbf16, #tpu.memory_space<vmem>>, vector<1x16x250xbf16>
    %87 = vector.shape_cast %86 : vector<1x16x250xbf16> to vector<16x250xbf16>
    %cst_52 = arith.constant dense<0.000000e+00> : vector<16x160xf32>
    %88 = tpu.matmul %87, %0, %cst_52 {dimension_numbers = #tpu.dot_dimension_numbers<[1], [0], [0], [1], [0, 0, 1, 1], [], []>} : vector<16x250xbf16>, vector<250x160xbf16>, vector<16x160xf32> -> vector<16x160xf32>
    %89 = arith.addf %88, %3 : vector<16x160xf32>
    %90 = arith.truncf %89 : vector<16x160xf32> to vector<16x160xbf16>
    %91 = math.tanh %90 : vector<16x160xbf16>
    %c1440 = arith.constant 1440 : index
    %c0_53 = arith.constant 0 : index
    %92 = vector.load %arg4[%c1440, %c0_53] : memref<1600x256xbf16, #tpu.memory_space<vmem>>, vector<160x128xbf16>
    %cst_54 = arith.constant dense<0.000000e+00> : vector<16x128xf32>
    %93 = tpu.matmul %91, %92, %cst_54 {dimension_numbers = #tpu.dot_dimension_numbers<[1], [0], [0], [1], [0, 0, 1, 1], [], []>} : vector<16x160xbf16>, vector<160x128xbf16>, vector<16x128xf32> -> vector<16x128xf32>
    %94 = arith.addf %85, %93 : vector<16x128xf32>
    %c16 = arith.constant 16 : index
    %c0_55 = arith.constant 0 : index
    %95 = vector.load %arg6[%c16, %c0_55] : memref<88x160xf32, #tpu.memory_space<vmem>>, vector<1x128xf32>
    %96 = vector.shape_cast %95 : vector<1x128xf32> to vector<1x128xf32>
    %97 = vector.broadcast %96 : vector<1x128xf32> to vector<16x128xf32>
    %98 = arith.addf %94, %97 : vector<16x128xf32>
    %99 = arith.truncf %98 : vector<16x128xf32> to vector<16x128xbf16>
    %100 = math.tanh %99 : vector<16x128xbf16>
    %c0_56 = arith.constant 0 : index
    %c0_57 = arith.constant 0 : index
    %101 = vector.load %arg5[%c0_56, %c0_57] : memref<1024x128xbf16, #tpu.memory_space<vmem>>, vector<128x128xbf16>
    %cst_58 = arith.constant dense<0.000000e+00> : vector<16x128xf32>
    %102 = tpu.matmul %100, %101, %cst_58 {dimension_numbers = #tpu.dot_dimension_numbers<[1], [0], [0], [1], [0, 0, 1, 1], [], []>} : vector<16x128xbf16>, vector<128x128xbf16>, vector<16x128xf32> -> vector<16x128xf32>
    %c32 = arith.constant 32 : index
    %c0_59 = arith.constant 0 : index
    %103 = vector.load %arg6[%c32, %c0_59] : memref<88x160xf32, #tpu.memory_space<vmem>>, vector<1x128xf32>
    %104 = vector.broadcast %103 : vector<1x128xf32> to vector<16x128xf32>
    %105 = arith.addf %102, %104 : vector<16x128xf32>
    %cst_60 = arith.constant 0.000000e+00 : f32
    %106 = vector.broadcast %cst_60 : f32 to vector<16x128xf32>
    %107 = arith.maximumf %105, %106 : vector<16x128xf32>
    %108 = arith.truncf %107 : vector<16x128xf32> to vector<16x128xbf16>
    %c256 = arith.constant 256 : index
    %c0_61 = arith.constant 0 : index
    %109 = vector.load %arg5[%c256, %c0_61] : memref<1024x128xbf16, #tpu.memory_space<vmem>>, vector<128x128xbf16>
    %cst_62 = arith.constant dense<0.000000e+00> : vector<16x128xf32>
    %110 = tpu.matmul %108, %109, %cst_62 {dimension_numbers = #tpu.dot_dimension_numbers<[1], [0], [0], [1], [0, 0, 1, 1], [], []>} : vector<16x128xbf16>, vector<128x128xbf16>, vector<16x128xf32> -> vector<16x128xf32>
    %c48 = arith.constant 48 : index
    %c0_63 = arith.constant 0 : index
    %111 = vector.load %arg6[%c48, %c0_63] : memref<88x160xf32, #tpu.memory_space<vmem>>, vector<1x128xf32>
    %112 = vector.broadcast %111 : vector<1x128xf32> to vector<16x128xf32>
    %113 = arith.addf %110, %112 : vector<16x128xf32>
    %cst_64 = arith.constant dense<0xFF800000> : vector<16xf32>
    %114 = vector.multi_reduction <maximumf>, %113, %cst_64 [1] : vector<16x128xf32> to vector<16xf32>
    %115 = vector.shape_cast %114 : vector<16xf32> to vector<16x1xf32>
    %116 = vector.broadcast %115 : vector<16x1xf32> to vector<16x128xf32>
    %117 = arith.subf %113, %116 : vector<16x128xf32>
    %118 = math.exp %117 : vector<16x128xf32>
    %cst_65 = arith.constant dense<0.000000e+00> : vector<16xf32>
    %119 = vector.multi_reduction <add>, %118, %cst_65 [1] : vector<16x128xf32> to vector<16xf32>
    %120 = vector.shape_cast %119 : vector<16xf32> to vector<16x1xf32>
    %121 = math.log %120 : vector<16x1xf32>
    %122 = vector.broadcast %121 : vector<16x1xf32> to vector<16x128xf32>
    %123 = arith.subf %117, %122 : vector<16x128xf32>
    %c256_66 = arith.constant 256 : index
    %c0_67 = arith.constant 0 : index
    %124 = vector.load %arg3[%c256_66, %c0_67] : memref<512x160xbf16, #tpu.memory_space<vmem>>, vector<250x160xbf16>
    %c8_68 = arith.constant 8 : index
    %c0_69 = arith.constant 0 : index
    %125 = vector.load %arg6[%c8_68, %c0_69] : memref<88x160xf32, #tpu.memory_space<vmem>>, vector<1x160xf32>
    %126 = vector.shape_cast %125 : vector<1x160xf32> to vector<1x160xf32>
    %127 = vector.broadcast %126 : vector<1x160xf32> to vector<16x160xf32>
    %cst_70 = arith.constant 0.000000e+00 : f32
    %128 = vector.broadcast %cst_70 : f32 to vector<16x128xf32>
    %c0_71 = arith.constant 0 : index
    %c0_72 = arith.constant 0 : index
    %c0_73 = arith.constant 0 : index
    %129 = vector.load %arg2[%c0_71, %c0_72, %c0_73] : memref<10x16x250xbf16, #tpu.memory_space<vmem>>, vector<1x16x250xbf16>
    %130 = vector.shape_cast %129 : vector<1x16x250xbf16> to vector<16x250xbf16>
    %cst_74 = arith.constant dense<0.000000e+00> : vector<16x160xf32>
    %131 = tpu.matmul %130, %124, %cst_74 {dimension_numbers = #tpu.dot_dimension_numbers<[1], [0], [0], [1], [0, 0, 1, 1], [], []>} : vector<16x250xbf16>, vector<250x160xbf16>, vector<16x160xf32> -> vector<16x160xf32>
    %132 = arith.addf %131, %127 : vector<16x160xf32>
    %133 = arith.truncf %132 : vector<16x160xf32> to vector<16x160xbf16>
    %134 = math.tanh %133 : vector<16x160xbf16>
    %c0_75 = arith.constant 0 : index
    %c128 = arith.constant 128 : index
    %135 = vector.load %arg4[%c0_75, %c128] : memref<1600x256xbf16, #tpu.memory_space<vmem>>, vector<160x128xbf16>
    %cst_76 = arith.constant dense<0.000000e+00> : vector<16x128xf32>
    %136 = tpu.matmul %134, %135, %cst_76 {dimension_numbers = #tpu.dot_dimension_numbers<[1], [0], [0], [1], [0, 0, 1, 1], [], []>} : vector<16x160xbf16>, vector<160x128xbf16>, vector<16x128xf32> -> vector<16x128xf32>
    %137 = arith.addf %128, %136 : vector<16x128xf32>
    %c1_77 = arith.constant 1 : index
    %c0_78 = arith.constant 0 : index
    %c0_79 = arith.constant 0 : index
    %138 = vector.load %arg2[%c1_77, %c0_78, %c0_79] : memref<10x16x250xbf16, #tpu.memory_space<vmem>>, vector<1x16x250xbf16>
    %139 = vector.shape_cast %138 : vector<1x16x250xbf16> to vector<16x250xbf16>
    %cst_80 = arith.constant dense<0.000000e+00> : vector<16x160xf32>
    %140 = tpu.matmul %139, %124, %cst_80 {dimension_numbers = #tpu.dot_dimension_numbers<[1], [0], [0], [1], [0, 0, 1, 1], [], []>} : vector<16x250xbf16>, vector<250x160xbf16>, vector<16x160xf32> -> vector<16x160xf32>
    %141 = arith.addf %140, %127 : vector<16x160xf32>
    %142 = arith.truncf %141 : vector<16x160xf32> to vector<16x160xbf16>
    %143 = math.tanh %142 : vector<16x160xbf16>
    %c160_81 = arith.constant 160 : index
    %c128_82 = arith.constant 128 : index
    %144 = vector.load %arg4[%c160_81, %c128_82] : memref<1600x256xbf16, #tpu.memory_space<vmem>>, vector<160x128xbf16>
    %cst_83 = arith.constant dense<0.000000e+00> : vector<16x128xf32>
    %145 = tpu.matmul %143, %144, %cst_83 {dimension_numbers = #tpu.dot_dimension_numbers<[1], [0], [0], [1], [0, 0, 1, 1], [], []>} : vector<16x160xbf16>, vector<160x128xbf16>, vector<16x128xf32> -> vector<16x128xf32>
    %146 = arith.addf %137, %145 : vector<16x128xf32>
    %c2_84 = arith.constant 2 : index
    %c0_85 = arith.constant 0 : index
    %c0_86 = arith.constant 0 : index
    %147 = vector.load %arg2[%c2_84, %c0_85, %c0_86] : memref<10x16x250xbf16, #tpu.memory_space<vmem>>, vector<1x16x250xbf16>
    %148 = vector.shape_cast %147 : vector<1x16x250xbf16> to vector<16x250xbf16>
    %cst_87 = arith.constant dense<0.000000e+00> : vector<16x160xf32>
    %149 = tpu.matmul %148, %124, %cst_87 {dimension_numbers = #tpu.dot_dimension_numbers<[1], [0], [0], [1], [0, 0, 1, 1], [], []>} : vector<16x250xbf16>, vector<250x160xbf16>, vector<16x160xf32> -> vector<16x160xf32>
    %150 = arith.addf %149, %127 : vector<16x160xf32>
    %151 = arith.truncf %150 : vector<16x160xf32> to vector<16x160xbf16>
    %152 = math.tanh %151 : vector<16x160xbf16>
    %c320_88 = arith.constant 320 : index
    %c128_89 = arith.constant 128 : index
    %153 = vector.load %arg4[%c320_88, %c128_89] : memref<1600x256xbf16, #tpu.memory_space<vmem>>, vector<160x128xbf16>
    %cst_90 = arith.constant dense<0.000000e+00> : vector<16x128xf32>
    %154 = tpu.matmul %152, %153, %cst_90 {dimension_numbers = #tpu.dot_dimension_numbers<[1], [0], [0], [1], [0, 0, 1, 1], [], []>} : vector<16x160xbf16>, vector<160x128xbf16>, vector<16x128xf32> -> vector<16x128xf32>
    %155 = arith.addf %146, %154 : vector<16x128xf32>
    %c3_91 = arith.constant 3 : index
    %c0_92 = arith.constant 0 : index
    %c0_93 = arith.constant 0 : index
    %156 = vector.load %arg2[%c3_91, %c0_92, %c0_93] : memref<10x16x250xbf16, #tpu.memory_space<vmem>>, vector<1x16x250xbf16>
    %157 = vector.shape_cast %156 : vector<1x16x250xbf16> to vector<16x250xbf16>
    %cst_94 = arith.constant dense<0.000000e+00> : vector<16x160xf32>
    %158 = tpu.matmul %157, %124, %cst_94 {dimension_numbers = #tpu.dot_dimension_numbers<[1], [0], [0], [1], [0, 0, 1, 1], [], []>} : vector<16x250xbf16>, vector<250x160xbf16>, vector<16x160xf32> -> vector<16x160xf32>
    %159 = arith.addf %158, %127 : vector<16x160xf32>
    %160 = arith.truncf %159 : vector<16x160xf32> to vector<16x160xbf16>
    %161 = math.tanh %160 : vector<16x160xbf16>
    %c480_95 = arith.constant 480 : index
    %c128_96 = arith.constant 128 : index
    %162 = vector.load %arg4[%c480_95, %c128_96] : memref<1600x256xbf16, #tpu.memory_space<vmem>>, vector<160x128xbf16>
    %cst_97 = arith.constant dense<0.000000e+00> : vector<16x128xf32>
    %163 = tpu.matmul %161, %162, %cst_97 {dimension_numbers = #tpu.dot_dimension_numbers<[1], [0], [0], [1], [0, 0, 1, 1], [], []>} : vector<16x160xbf16>, vector<160x128xbf16>, vector<16x128xf32> -> vector<16x128xf32>
    %164 = arith.addf %155, %163 : vector<16x128xf32>
    %c4_98 = arith.constant 4 : index
    %c0_99 = arith.constant 0 : index
    %c0_100 = arith.constant 0 : index
    %165 = vector.load %arg2[%c4_98, %c0_99, %c0_100] : memref<10x16x250xbf16, #tpu.memory_space<vmem>>, vector<1x16x250xbf16>
    %166 = vector.shape_cast %165 : vector<1x16x250xbf16> to vector<16x250xbf16>
    %cst_101 = arith.constant dense<0.000000e+00> : vector<16x160xf32>
    %167 = tpu.matmul %166, %124, %cst_101 {dimension_numbers = #tpu.dot_dimension_numbers<[1], [0], [0], [1], [0, 0, 1, 1], [], []>} : vector<16x250xbf16>, vector<250x160xbf16>, vector<16x160xf32> -> vector<16x160xf32>
    %168 = arith.addf %167, %127 : vector<16x160xf32>
    %169 = arith.truncf %168 : vector<16x160xf32> to vector<16x160xbf16>
    %170 = math.tanh %169 : vector<16x160xbf16>
    %c640_102 = arith.constant 640 : index
    %c128_103 = arith.constant 128 : index
    %171 = vector.load %arg4[%c640_102, %c128_103] : memref<1600x256xbf16, #tpu.memory_space<vmem>>, vector<160x128xbf16>
    %cst_104 = arith.constant dense<0.000000e+00> : vector<16x128xf32>
    %172 = tpu.matmul %170, %171, %cst_104 {dimension_numbers = #tpu.dot_dimension_numbers<[1], [0], [0], [1], [0, 0, 1, 1], [], []>} : vector<16x160xbf16>, vector<160x128xbf16>, vector<16x128xf32> -> vector<16x128xf32>
    %173 = arith.addf %164, %172 : vector<16x128xf32>
    %c5_105 = arith.constant 5 : index
    %c0_106 = arith.constant 0 : index
    %c0_107 = arith.constant 0 : index
    %174 = vector.load %arg2[%c5_105, %c0_106, %c0_107] : memref<10x16x250xbf16, #tpu.memory_space<vmem>>, vector<1x16x250xbf16>
    %175 = vector.shape_cast %174 : vector<1x16x250xbf16> to vector<16x250xbf16>
    %cst_108 = arith.constant dense<0.000000e+00> : vector<16x160xf32>
    %176 = tpu.matmul %175, %124, %cst_108 {dimension_numbers = #tpu.dot_dimension_numbers<[1], [0], [0], [1], [0, 0, 1, 1], [], []>} : vector<16x250xbf16>, vector<250x160xbf16>, vector<16x160xf32> -> vector<16x160xf32>
    %177 = arith.addf %176, %127 : vector<16x160xf32>
    %178 = arith.truncf %177 : vector<16x160xf32> to vector<16x160xbf16>
    %179 = math.tanh %178 : vector<16x160xbf16>
    %c800_109 = arith.constant 800 : index
    %c128_110 = arith.constant 128 : index
    %180 = vector.load %arg4[%c800_109, %c128_110] : memref<1600x256xbf16, #tpu.memory_space<vmem>>, vector<160x128xbf16>
    %cst_111 = arith.constant dense<0.000000e+00> : vector<16x128xf32>
    %181 = tpu.matmul %179, %180, %cst_111 {dimension_numbers = #tpu.dot_dimension_numbers<[1], [0], [0], [1], [0, 0, 1, 1], [], []>} : vector<16x160xbf16>, vector<160x128xbf16>, vector<16x128xf32> -> vector<16x128xf32>
    %182 = arith.addf %173, %181 : vector<16x128xf32>
    %c6_112 = arith.constant 6 : index
    %c0_113 = arith.constant 0 : index
    %c0_114 = arith.constant 0 : index
    %183 = vector.load %arg2[%c6_112, %c0_113, %c0_114] : memref<10x16x250xbf16, #tpu.memory_space<vmem>>, vector<1x16x250xbf16>
    %184 = vector.shape_cast %183 : vector<1x16x250xbf16> to vector<16x250xbf16>
    %cst_115 = arith.constant dense<0.000000e+00> : vector<16x160xf32>
    %185 = tpu.matmul %184, %124, %cst_115 {dimension_numbers = #tpu.dot_dimension_numbers<[1], [0], [0], [1], [0, 0, 1, 1], [], []>} : vector<16x250xbf16>, vector<250x160xbf16>, vector<16x160xf32> -> vector<16x160xf32>
    %186 = arith.addf %185, %127 : vector<16x160xf32>
    %187 = arith.truncf %186 : vector<16x160xf32> to vector<16x160xbf16>
    %188 = math.tanh %187 : vector<16x160xbf16>
    %c960_116 = arith.constant 960 : index
    %c128_117 = arith.constant 128 : index
    %189 = vector.load %arg4[%c960_116, %c128_117] : memref<1600x256xbf16, #tpu.memory_space<vmem>>, vector<160x128xbf16>
    %cst_118 = arith.constant dense<0.000000e+00> : vector<16x128xf32>
    %190 = tpu.matmul %188, %189, %cst_118 {dimension_numbers = #tpu.dot_dimension_numbers<[1], [0], [0], [1], [0, 0, 1, 1], [], []>} : vector<16x160xbf16>, vector<160x128xbf16>, vector<16x128xf32> -> vector<16x128xf32>
    %191 = arith.addf %182, %190 : vector<16x128xf32>
    %c7_119 = arith.constant 7 : index
    %c0_120 = arith.constant 0 : index
    %c0_121 = arith.constant 0 : index
    %192 = vector.load %arg2[%c7_119, %c0_120, %c0_121] : memref<10x16x250xbf16, #tpu.memory_space<vmem>>, vector<1x16x250xbf16>
    %193 = vector.shape_cast %192 : vector<1x16x250xbf16> to vector<16x250xbf16>
    %cst_122 = arith.constant dense<0.000000e+00> : vector<16x160xf32>
    %194 = tpu.matmul %193, %124, %cst_122 {dimension_numbers = #tpu.dot_dimension_numbers<[1], [0], [0], [1], [0, 0, 1, 1], [], []>} : vector<16x250xbf16>, vector<250x160xbf16>, vector<16x160xf32> -> vector<16x160xf32>
    %195 = arith.addf %194, %127 : vector<16x160xf32>
    %196 = arith.truncf %195 : vector<16x160xf32> to vector<16x160xbf16>
    %197 = math.tanh %196 : vector<16x160xbf16>
    %c1120_123 = arith.constant 1120 : index
    %c128_124 = arith.constant 128 : index
    %198 = vector.load %arg4[%c1120_123, %c128_124] : memref<1600x256xbf16, #tpu.memory_space<vmem>>, vector<160x128xbf16>
    %cst_125 = arith.constant dense<0.000000e+00> : vector<16x128xf32>
    %199 = tpu.matmul %197, %198, %cst_125 {dimension_numbers = #tpu.dot_dimension_numbers<[1], [0], [0], [1], [0, 0, 1, 1], [], []>} : vector<16x160xbf16>, vector<160x128xbf16>, vector<16x128xf32> -> vector<16x128xf32>
    %200 = arith.addf %191, %199 : vector<16x128xf32>
    %c8_126 = arith.constant 8 : index
    %c0_127 = arith.constant 0 : index
    %c0_128 = arith.constant 0 : index
    %201 = vector.load %arg2[%c8_126, %c0_127, %c0_128] : memref<10x16x250xbf16, #tpu.memory_space<vmem>>, vector<1x16x250xbf16>
    %202 = vector.shape_cast %201 : vector<1x16x250xbf16> to vector<16x250xbf16>
    %cst_129 = arith.constant dense<0.000000e+00> : vector<16x160xf32>
    %203 = tpu.matmul %202, %124, %cst_129 {dimension_numbers = #tpu.dot_dimension_numbers<[1], [0], [0], [1], [0, 0, 1, 1], [], []>} : vector<16x250xbf16>, vector<250x160xbf16>, vector<16x160xf32> -> vector<16x160xf32>
    %204 = arith.addf %203, %127 : vector<16x160xf32>
    %205 = arith.truncf %204 : vector<16x160xf32> to vector<16x160xbf16>
    %206 = math.tanh %205 : vector<16x160xbf16>
    %c1280_130 = arith.constant 1280 : index
    %c128_131 = arith.constant 128 : index
    %207 = vector.load %arg4[%c1280_130, %c128_131] : memref<1600x256xbf16, #tpu.memory_space<vmem>>, vector<160x128xbf16>
    %cst_132 = arith.constant dense<0.000000e+00> : vector<16x128xf32>
    %208 = tpu.matmul %206, %207, %cst_132 {dimension_numbers = #tpu.dot_dimension_numbers<[1], [0], [0], [1], [0, 0, 1, 1], [], []>} : vector<16x160xbf16>, vector<160x128xbf16>, vector<16x128xf32> -> vector<16x128xf32>
    %209 = arith.addf %200, %208 : vector<16x128xf32>
    %c9_133 = arith.constant 9 : index
    %c0_134 = arith.constant 0 : index
    %c0_135 = arith.constant 0 : index
    %210 = vector.load %arg2[%c9_133, %c0_134, %c0_135] : memref<10x16x250xbf16, #tpu.memory_space<vmem>>, vector<1x16x250xbf16>
    %211 = vector.shape_cast %210 : vector<1x16x250xbf16> to vector<16x250xbf16>
    %cst_136 = arith.constant dense<0.000000e+00> : vector<16x160xf32>
    %212 = tpu.matmul %211, %124, %cst_136 {dimension_numbers = #tpu.dot_dimension_numbers<[1], [0], [0], [1], [0, 0, 1, 1], [], []>} : vector<16x250xbf16>, vector<250x160xbf16>, vector<16x160xf32> -> vector<16x160xf32>
    %213 = arith.addf %212, %127 : vector<16x160xf32>
    %214 = arith.truncf %213 : vector<16x160xf32> to vector<16x160xbf16>
    %215 = math.tanh %214 : vector<16x160xbf16>
    %c1440_137 = arith.constant 1440 : index
    %c128_138 = arith.constant 128 : index
    %216 = vector.load %arg4[%c1440_137, %c128_138] : memref<1600x256xbf16, #tpu.memory_space<vmem>>, vector<160x128xbf16>
    %cst_139 = arith.constant dense<0.000000e+00> : vector<16x128xf32>
    %217 = tpu.matmul %215, %216, %cst_139 {dimension_numbers = #tpu.dot_dimension_numbers<[1], [0], [0], [1], [0, 0, 1, 1], [], []>} : vector<16x160xbf16>, vector<160x128xbf16>, vector<16x128xf32> -> vector<16x128xf32>
    %218 = arith.addf %209, %217 : vector<16x128xf32>
    %c24 = arith.constant 24 : index
    %c0_140 = arith.constant 0 : index
    %219 = vector.load %arg6[%c24, %c0_140] : memref<88x160xf32, #tpu.memory_space<vmem>>, vector<1x128xf32>
    %220 = vector.shape_cast %219 : vector<1x128xf32> to vector<1x128xf32>
    %221 = vector.broadcast %220 : vector<1x128xf32> to vector<16x128xf32>
    %222 = arith.addf %218, %221 : vector<16x128xf32>
    %223 = arith.truncf %222 : vector<16x128xf32> to vector<16x128xbf16>
    %224 = math.tanh %223 : vector<16x128xbf16>
    %c128_141 = arith.constant 128 : index
    %c0_142 = arith.constant 0 : index
    %225 = vector.load %arg5[%c128_141, %c0_142] : memref<1024x128xbf16, #tpu.memory_space<vmem>>, vector<128x128xbf16>
    %cst_143 = arith.constant dense<0.000000e+00> : vector<16x128xf32>
    %226 = tpu.matmul %224, %225, %cst_143 {dimension_numbers = #tpu.dot_dimension_numbers<[1], [0], [0], [1], [0, 0, 1, 1], [], []>} : vector<16x128xbf16>, vector<128x128xbf16>, vector<16x128xf32> -> vector<16x128xf32>
    %c40 = arith.constant 40 : index
    %c0_144 = arith.constant 0 : index
    %227 = vector.load %arg6[%c40, %c0_144] : memref<88x160xf32, #tpu.memory_space<vmem>>, vector<1x128xf32>
    %228 = vector.broadcast %227 : vector<1x128xf32> to vector<16x128xf32>
    %229 = arith.addf %226, %228 : vector<16x128xf32>
    %cst_145 = arith.constant 0.000000e+00 : f32
    %230 = vector.broadcast %cst_145 : f32 to vector<16x128xf32>
    %231 = arith.maximumf %229, %230 : vector<16x128xf32>
    %232 = arith.truncf %231 : vector<16x128xf32> to vector<16x128xbf16>
    %c384 = arith.constant 384 : index
    %c0_146 = arith.constant 0 : index
    %233 = vector.load %arg5[%c384, %c0_146] : memref<1024x128xbf16, #tpu.memory_space<vmem>>, vector<128x128xbf16>
    %cst_147 = arith.constant dense<0.000000e+00> : vector<16x128xf32>
    %234 = tpu.matmul %232, %233, %cst_147 {dimension_numbers = #tpu.dot_dimension_numbers<[1], [0], [0], [1], [0, 0, 1, 1], [], []>} : vector<16x128xbf16>, vector<128x128xbf16>, vector<16x128xf32> -> vector<16x128xf32>
    %c56 = arith.constant 56 : index
    %c0_148 = arith.constant 0 : index
    %235 = vector.load %arg6[%c56, %c0_148] : memref<88x160xf32, #tpu.memory_space<vmem>>, vector<1x128xf32>
    %236 = vector.broadcast %235 : vector<1x128xf32> to vector<16x128xf32>
    %237 = arith.addf %234, %236 : vector<16x128xf32>
    %cst_149 = arith.constant dense<0xFF800000> : vector<16xf32>
    %238 = vector.multi_reduction <maximumf>, %237, %cst_149 [1] : vector<16x128xf32> to vector<16xf32>
    %239 = vector.shape_cast %238 : vector<16xf32> to vector<16x1xf32>
    %240 = vector.broadcast %239 : vector<16x1xf32> to vector<16x128xf32>
    %241 = arith.subf %237, %240 : vector<16x128xf32>
    %242 = math.exp %241 : vector<16x128xf32>
    %cst_150 = arith.constant dense<0.000000e+00> : vector<16xf32>
    %243 = vector.multi_reduction <add>, %242, %cst_150 [1] : vector<16x128xf32> to vector<16xf32>
    %244 = vector.shape_cast %243 : vector<16xf32> to vector<16x1xf32>
    %245 = math.log %244 : vector<16x1xf32>
    %246 = vector.broadcast %245 : vector<16x1xf32> to vector<16x128xf32>
    %247 = arith.subf %241, %246 : vector<16x128xf32>
    %248 = tpu.concatenate %123, %247 in 1 : vector<16x128xf32>, vector<16x128xf32> -> vector<16x256xf32>
    %249 = arith.truncf %248 : vector<16x256xf32> to vector<16x256xbf16>
    %c512 = arith.constant 512 : index
    %c0_151 = arith.constant 0 : index
    %250 = vector.load %arg5[%c512, %c0_151] : memref<1024x128xbf16, #tpu.memory_space<vmem>>, vector<256x128xbf16>
    %cst_152 = arith.constant dense<0.000000e+00> : vector<16x128xf32>
    %251 = tpu.matmul %249, %250, %cst_152 {dimension_numbers = #tpu.dot_dimension_numbers<[1], [0], [0], [1], [0, 0, 1, 1], [], []>} : vector<16x256xbf16>, vector<256x128xbf16>, vector<16x128xf32> -> vector<16x128xf32>
    %c64 = arith.constant 64 : index
    %c0_153 = arith.constant 0 : index
    %252 = vector.load %arg6[%c64, %c0_153] : memref<88x160xf32, #tpu.memory_space<vmem>>, vector<1x128xf32>
    %253 = vector.broadcast %252 : vector<1x128xf32> to vector<16x128xf32>
    %254 = arith.addf %251, %253 : vector<16x128xf32>
    %cst_154 = arith.constant 0.000000e+00 : f32
    %255 = vector.broadcast %cst_154 : f32 to vector<16x128xf32>
    %256 = arith.maximumf %254, %255 : vector<16x128xf32>
    %257 = arith.truncf %256 : vector<16x128xf32> to vector<16x128xbf16>
    %c768 = arith.constant 768 : index
    %c0_155 = arith.constant 0 : index
    %258 = vector.load %arg5[%c768, %c0_155] : memref<1024x128xbf16, #tpu.memory_space<vmem>>, vector<128x128xbf16>
    %cst_156 = arith.constant dense<0.000000e+00> : vector<16x128xf32>
    %259 = tpu.matmul %257, %258, %cst_156 {dimension_numbers = #tpu.dot_dimension_numbers<[1], [0], [0], [1], [0, 0, 1, 1], [], []>} : vector<16x128xbf16>, vector<128x128xbf16>, vector<16x128xf32> -> vector<16x128xf32>
    %c72 = arith.constant 72 : index
    %c0_157 = arith.constant 0 : index
    %260 = vector.load %arg6[%c72, %c0_157] : memref<88x160xf32, #tpu.memory_space<vmem>>, vector<1x128xf32>
    %261 = vector.broadcast %260 : vector<1x128xf32> to vector<16x128xf32>
    %262 = arith.addf %259, %261 : vector<16x128xf32>
    %cst_158 = arith.constant 0.000000e+00 : f32
    %263 = vector.broadcast %cst_158 : f32 to vector<16x128xf32>
    %264 = arith.maximumf %262, %263 : vector<16x128xf32>
    %265 = arith.truncf %264 : vector<16x128xf32> to vector<16x128xbf16>
    %c896 = arith.constant 896 : index
    %c0_159 = arith.constant 0 : index
    %266 = vector.load %arg5[%c896, %c0_159] : memref<1024x128xbf16, #tpu.memory_space<vmem>>, vector<128x128xbf16>
    %cst_160 = arith.constant dense<0.000000e+00> : vector<16x128xf32>
    %267 = tpu.matmul %265, %266, %cst_160 {dimension_numbers = #tpu.dot_dimension_numbers<[1], [0], [0], [1], [0, 0, 1, 1], [], []>} : vector<16x128xbf16>, vector<128x128xbf16>, vector<16x128xf32> -> vector<16x128xf32>
    %c80 = arith.constant 80 : index
    %c0_161 = arith.constant 0 : index
    %268 = vector.load %arg6[%c80, %c0_161] : memref<88x160xf32, #tpu.memory_space<vmem>>, vector<1x128xf32>
    %269 = vector.broadcast %268 : vector<1x128xf32> to vector<16x128xf32>
    %270 = arith.addf %267, %269 : vector<16x128xf32>
    %cst_162 = arith.constant 0.000000e+00 : f32
    %271 = vector.broadcast %cst_162 : f32 to vector<16x128xf32>
    %272 = arith.subf %271, %270 : vector<16x128xf32>
    %273 = math.exp %272 : vector<16x128xf32>
    %cst_163 = arith.constant 1.000000e+00 : f32
    %274 = vector.broadcast %cst_163 : f32 to vector<16x128xf32>
    %275 = arith.addf %274, %273 : vector<16x128xf32>
    %cst_164 = arith.constant 1.000000e+00 : f32
    %276 = vector.broadcast %cst_164 : f32 to vector<16x128xf32>
    %277 = arith.divf %276, %275 : vector<16x128xf32>
    %c0_165 = arith.constant 0 : index
    %c0_166 = arith.constant 0 : index
    %278 = vector.load %arg7[%c0_165, %c0_166] : memref<16x128xf32, #tpu.memory_space<vmem>>, vector<16x128xf32>
    tpu.vector_store %arg7[%c0_165, %c0_166], %277 {strides = array<i32>} : memref<16x128xf32, #tpu.memory_space<vmem>>, vector<16x128xf32>,
    return
  }
  func.func @transform_0(%arg0: i32) -> (i32, i32, i32) {
    %c0_i32 = arith.constant 0 : i32
    %c0_i32_0 = arith.constant 0 : i32
    %c0_i32_1 = arith.constant 0 : i32
    return %c0_i32, %arg0, %c0_i32_0 : i32, i32, i32
  }
  func.func @transform_1(%arg0: i32) -> (i32, i32, i32) {
    %c0_i32 = arith.constant 0 : i32
    %c0_i32_0 = arith.constant 0 : i32
    %c0_i32_1 = arith.constant 0 : i32
    return %c0_i32, %arg0, %c0_i32_0 : i32, i32, i32
  }
  func.func @transform_2(%arg0: i32) -> (i32, i32) {
    %c0_i32 = arith.constant 0 : i32
    %c0_i32_0 = arith.constant 0 : i32
    %c0_i32_1 = arith.constant 0 : i32
    return %c0_i32, %c0_i32_0 : i32, i32
  }
  func.func @transform_3(%arg0: i32) -> (i32, i32) {
    %c0_i32 = arith.constant 0 : i32
    %c0_i32_0 = arith.constant 0 : i32
    %c0_i32_1 = arith.constant 0 : i32
    return %c0_i32, %c0_i32_0 : i32, i32
  }
  func.func @transform_4(%arg0: i32) -> (i32, i32) {
    %c0_i32 = arith.constant 0 : i32
    %c0_i32_0 = arith.constant 0 : i32
    %c0_i32_1 = arith.constant 0 : i32
    return %c0_i32, %c0_i32_0 : i32, i32
  }
  func.func @transform_5(%arg0: i32) -> (i32, i32) {
    %c0_i32 = arith.constant 0 : i32
    %c0_i32_0 = arith.constant 0 : i32
    %c0_i32_1 = arith.constant 0 : i32
    return %c0_i32, %c0_i32_0 : i32, i32
  }
  func.func @transform_6(%arg0: i32) -> (i32, i32) {
    %c0_i32 = arith.constant 0 : i32
    %c0_i32_0 = arith.constant 0 : i32
    return %arg0, %c0_i32 : i32, i32
  }
}

</mosaic_0001>

<llo_original>
// kernel: tile.13
$region0: #{tile.13}
  #allocation0 [shape = 's32[1]{0}', space=sflag, size = 0x4, scoped, tag = 'scoped memory for tile.13']
  %s0 = inlined_call_operand.vmem [shape: f32[16], index: 0, kind: input, shape index: {}]
  %s1 = inlined_call_operand.vmem [shape: f32[10,16], index: 1, kind: output, shape index: {}]
  // Predicated region
  $region2: #{tile.13} parent=0 // pred_check
    _
  $region3: #{tile.13} parent=0 // pred_check_branch
    %3 = sbr.rel (0) target = $region5
  $region4: #{tile.13} parent=0 // pred_region
    _
  $region5: #{tile.13} parent=0 // pred_fallthru
    _
  %v4 = vld [vmem:[%s0] ss:$0 sm:$0xff]
  %5 = vst [vmem:[%s1] sm:$0xff] %v4
  %s6 = scalar_lea.vmem %s1, 8
  %7 = vst [vmem:[%s6] sm:$0xff] %v4

// kernel: sub_lenet5_forward.1
$region0: #{sub_lenet5_forward.1}
  #allocation0 [shape = 'u32[]', space=smem, size = 0x4, offset = 0x4, fixed_abs, tag = 'smem constant byte address 0x4 - core index']
  #allocation1 [shape = 'u32[72,128]{1,0:T(1,128)}', space=vmem, size = 0x9000, scoped, tag = 'internal scratch']
  %s0 = inlined_call_operand.vmem [shape: bf16[10,16,250], index: 0, kind: input, shape index: {}]
  %s1 = inlined_call_operand.vmem [shape: bf16[10,16,250], index: 1, kind: input, shape index: {}]
  %s2 = inlined_call_operand.vmem [shape: bf16[512,160], index: 2, kind: input, shape index: {}]
  %s3 = inlined_call_operand.vmem [shape: bf16[1600,256], index: 3, kind: input, shape index: {}]
  %s4 = inlined_call_operand.vmem [shape: bf16[1024,128], index: 4, kind: input, shape index: {}]
  %s5 = inlined_call_operand.vmem [shape: f32[88,160], index: 5, kind: input, shape index: {}]
  %s6 = inlined_call_operand.vmem [shape: f32[16,128], index: 6, kind: output, shape index: {}]
  %s7 = sld [smem:[#allocation0]]
  $region34: #{sub_lenet5_forward.1} parent=0
    _
  %s9 = ssub.s32 1, %s7
  %s10 = scalar_select 0, %s9, %s7
  // Predicated region
  $region2: #{sub_lenet5_forward.1} parent=0 // pred_check
    _
  $region3: #{sub_lenet5_forward.1} parent=0 // pred_check_branch
    %12 = sbr.rel (0) target = $region5
  $region4: #{sub_lenet5_forward.1} parent=0 // pred_region
    _
  $region5: #{sub_lenet5_forward.1} parent=0 // pred_fallthru
    _
  // Predicated region
  $region6: #{sub_lenet5_forward.1} parent=0 // pred_check
    _
  $region7: #{sub_lenet5_forward.1} parent=0 // pred_check_branch
    %14 = sbr.rel (0) target = $region9
  $region8: #{sub_lenet5_forward.1} parent=0 // pred_region
    _
  $region9: #{sub_lenet5_forward.1} parent=0 // pred_fallthru
    _
  // Predicated region
  $region10: #{sub_lenet5_forward.1} parent=0 // pred_check
    _
  $region11: #{sub_lenet5_forward.1} parent=0 // pred_check_branch
    %16 = sbr.rel (0) target = $region13
  $region12: #{sub_lenet5_forward.1} parent=0 // pred_region
    _
  $region13: #{sub_lenet5_forward.1} parent=0 // pred_fallthru
    _
  // Predicated region
  $region14: #{sub_lenet5_forward.1} parent=0 // pred_check
    _
  $region15: #{sub_lenet5_forward.1} parent=0 // pred_check_branch
    %18 = sbr.rel (0) target = $region17
  $region16: #{sub_lenet5_forward.1} parent=0 // pred_region
    _
  $region17: #{sub_lenet5_forward.1} parent=0 // pred_fallthru
    _
  // Predicated region
  $region18: #{sub_lenet5_forward.1} parent=0 // pred_check
    _
  $region19: #{sub_lenet5_forward.1} parent=0 // pred_check_branch
    %20 = sbr.rel (0) target = $region21
  $region20: #{sub_lenet5_forward.1} parent=0 // pred_region
    _
  $region21: #{sub_lenet5_forward.1} parent=0 // pred_fallthru
    _
  // Predicated region
  $region22: #{sub_lenet5_forward.1} parent=0 // pred_check
    _
  $region23: #{sub_lenet5_forward.1} parent=0 // pred_check_branch
    %22 = sbr.rel (0) target = $region25
  $region24: #{sub_lenet5_forward.1} parent=0 // pred_region
    _
  $region25: #{sub_lenet5_forward.1} parent=0 // pred_fallthru
    _
  %v24 = vld [vmem:[%s2] sm:$0xff]
  %v25 = vld [vmem:[%s2 + $0x8] sm:$0xff]
  %v26 = vld [vmem:[%s2 + $0x10] sm:$0xff]
  %v27 = vld [vmem:[%s2 + $0x18] sm:$0xff]
  %v28 = vld [vmem:[%s2 + $0x20] sm:$0xff]
  %v29 = vld [vmem:[%s2 + $0x28] sm:$0xff]
  %v30 = vld [vmem:[%s2 + $0x30] sm:$0xff]
  %v31 = vld [vmem:[%s2 + $0x38] sm:$0xff]
  %v32 = vld [vmem:[%s2 + $0x40] sm:$0xff]
  %v33 = vld [vmem:[%s2 + $0x48] sm:$0xff]
  %v34 = vld [vmem:[%s2 + $0x50] sm:$0xff]
  %v35 = vld [vmem:[%s2 + $0x58] sm:$0xff]
  %v36 = vld [vmem:[%s2 + $0x60] sm:$0xff]
  %v37 = vld [vmem:[%s2 + $0x68] sm:$0xff]
  %v38 = vld [vmem:[%s2 + $0x70] sm:$0xff]
  %v39 = vld [vmem:[%s2 + $0x78] sm:$0xff]
  %v40 = vld [vmem:[%s2 + $0x80] sm:$0xff]
  %v41 = vld [vmem:[%s2 + $0x88] sm:$0xff]
  %v42 = vld [vmem:[%s2 + $0x90] sm:$0xff]
  %v43 = vld [vmem:[%s2 + $0x98] sm:$0xff]
  %v44 = vld [vmem:[%s2 + $0xa0] sm:$0xff]
  %v45 = vld [vmem:[%s2 + $0xa8] sm:$0xff]
  %v46 = vld [vmem:[%s2 + $0xb0] sm:$0xff]
  %v47 = vld [vmem:[%s2 + $0xb8] sm:$0xff]
  %v48 = vld [vmem:[%s2 + $0xc0] sm:$0xff]
  %v49 = vld [vmem:[%s2 + $0xc8] sm:$0xff]
  %v50 = vld [vmem:[%s2 + $0xd0] sm:$0xff]
  %v51 = vld [vmem:[%s2 + $0xd8] sm:$0xff]
  %v52 = vld [vmem:[%s2 + $0xe0] sm:$0xff]
  %v53 = vld [vmem:[%s2 + $0xe8] sm:$0xff]
  %v54 = vld [vmem:[%s2 + $0xf0] sm:$0xff]
  %v55 = vld [vmem:[%s2 + $0xf8] sm:$0x11]
  %v56 = vld [vmem:[%s5] ss:$8 sm:$0x3]
  %v58 = vperm.slane %v56, 0
  %v59 = vperm.slane %v56, 1
  %v62 = vld [vmem:[%s0] sm:$0xff]
  %v63 = vld [vmem:[%s0 + $0x8] sm:$0xff]
  %v66 = vunpack.c.l.b16 %v62
  %v67 = vunpack.c.h.b16 %v62
  %v68 = vunpack.c.l.b16 %v63
  %v69 = vunpack.c.h.b16 %v63
  %v70 = vpack.c.b16 %v68, %v66
  %v71 = vpack.c.b16 %v69, %v67
  %v105 = vunpack.c.l.b16 %v24
  %v106 = vunpack.c.h.b16 %v24
  %v107 = vunpack.c.l.b16 %v25
  %v108 = vunpack.c.h.b16 %v25
  %v109 = vunpack.c.l.b16 %v26
  %v110 = vunpack.c.h.b16 %v26
  %v111 = vunpack.c.l.b16 %v27
  %v112 = vunpack.c.h.b16 %v27
  %v113 = vunpack.c.l.b16 %v28
  %v114 = vunpack.c.h.b16 %v28
  %v115 = vunpack.c.l.b16 %v29
  %v116 = vunpack.c.h.b16 %v29
  %v117 = vunpack.c.l.b16 %v30
  %v118 = vunpack.c.h.b16 %v30
  %v119 = vunpack.c.l.b16 %v31
  %v120 = vunpack.c.h.b16 %v31
  %v121 = vunpack.c.l.b16 %v32
  %v122 = vunpack.c.h.b16 %v32
  %v123 = vunpack.c.l.b16 %v33
  %v124 = vunpack.c.h.b16 %v33
  %v125 = vunpack.c.l.b16 %v34
  %v126 = vunpack.c.h.b16 %v34
  %v127 = vunpack.c.l.b16 %v35
  %v128 = vunpack.c.h.b16 %v35
  %v129 = vunpack.c.l.b16 %v36
  %v130 = vunpack.c.h.b16 %v36
  %v131 = vunpack.c.l.b16 %v37
  %v132 = vunpack.c.h.b16 %v37
  %v133 = vunpack.c.l.b16 %v38
  %v134 = vunpack.c.h.b16 %v38
  %v135 = vunpack.c.l.b16 %v39
  %v136 = vunpack.c.h.b16 %v39
  %v137 = vunpack.c.l.b16 %v40
  %v138 = vunpack.c.h.b16 %v40
  %v139 = vunpack.c.l.b16 %v41
  %v140 = vunpack.c.h.b16 %v41
  %v141 = vunpack.c.l.b16 %v42
  %v142 = vunpack.c.h.b16 %v42
  %v143 = vunpack.c.l.b16 %v43
  %v144 = vunpack.c.h.b16 %v43
  %v145 = vunpack.c.l.b16 %v44
  %v146 = vunpack.c.h.b16 %v44
  %v147 = vunpack.c.l.b16 %v45
  %v148 = vunpack.c.h.b16 %v45
  %v149 = vunpack.c.l.b16 %v46
  %v150 = vunpack.c.h.b16 %v46
  %v151 = vunpack.c.l.b16 %v47
  %v152 = vunpack.c.h.b16 %v47
  %v153 = vunpack.c.l.b16 %v48
  %v154 = vunpack.c.h.b16 %v48
  %v155 = vunpack.c.l.b16 %v49
  %v156 = vunpack.c.h.b16 %v49
  %v157 = vunpack.c.l.b16 %v50
  %v158 = vunpack.c.h.b16 %v50
  %v159 = vunpack.c.l.b16 %v51
  %v160 = vunpack.c.h.b16 %v51
  %v161 = vunpack.c.l.b16 %v52
  %v162 = vunpack.c.h.b16 %v52
  %v163 = vunpack.c.l.b16 %v53
  %v164 = vunpack.c.h.b16 %v53
  %v165 = vunpack.c.l.b16 %v54
  %v166 = vunpack.c.h.b16 %v54
  %v167 = vunpack.c.l.b16 %v55
  %v168 = vunpack.c.h.b16 %v55
  %v169 = vpack.c.b16 %v107, %v105
  %v170 = vpack.c.b16 %v108, %v106
  %v171 = vpack.c.b16 %v111, %v109
  %v172 = vpack.c.b16 %v112, %v110
  %v173 = vpack.c.b16 %v115, %v113
  %v174 = vpack.c.b16 %v116, %v114
  %v175 = vpack.c.b16 %v119, %v117
  %v176 = vpack.c.b16 %v120, %v118
  %v177 = vpack.c.b16 %v123, %v121
  %v178 = vpack.c.b16 %v124, %v122
  %v179 = vpack.c.b16 %v127, %v125
  %v180 = vpack.c.b16 %v128, %v126
  %v181 = vpack.c.b16 %v131, %v129
  %v182 = vpack.c.b16 %v132, %v130
  %v183 = vpack.c.b16 %v135, %v133
  %v184 = vpack.c.b16 %v136, %v134
  %v185 = vpack.c.b16 %v139, %v137
  %v186 = vpack.c.b16 %v140, %v138
  %v187 = vpack.c.b16 %v143, %v141
  %v188 = vpack.c.b16 %v144, %v142
  %v189 = vpack.c.b16 %v147, %v145
  %v190 = vpack.c.b16 %v148, %v146
  %v191 = vpack.c.b16 %v151, %v149
  %v192 = vpack.c.b16 %v152, %v150
  %v193 = vpack.c.b16 %v155, %v153
  %v194 = vpack.c.b16 %v156, %v154
  %v195 = vpack.c.b16 %v159, %v157
  %v196 = vpack.c.b16 %v160, %v158
  %v197 = vpack.c.b16 %v163, %v161
  %v198 = vpack.c.b16 %v164, %v162
  %v199 = vpack.c.b16 %v167, %v165
  %v200 = vpack.c.b16 %v168, %v166
  %vm231 = vcmask 998400
  %v233 = vsel %vm231, %v71, 0
  %vm235 = vcmask 1044480
  %v237 = vsel %vm235, %v199, 0
  %v240 = vsel %vm235, %v200, 0
  %242 = vmatpush.bf16.msra.mxu0 %v183
  %243 = vmatpush.bf16.msra.mxu0 %v181
  %244 = vmatpush.bf16.msra.mxu0 %v179
  %245 = vmatpush.bf16.msra.mxu0 %v177
  %246 = vmatpush.bf16.msra.mxu0 %v175
  %247 = vmatpush.bf16.msra.mxu0 %v173
  %248 = vmatpush.bf16.msra.mxu0 %v171
  %249 = vmatpush.bf16.msra.mxu0 %v169
  %250 = vmatmul.bf16.gmra.mxu0 %v70
  %v251 = vpop.f32.mrf.mxu0
  %v252 = vadd.f32 %v58, %v251
  %v253 = vpop.f32.mrf.mxu0
  %v254 = vadd.f32 %v58, %v253
  %255 = vdwg.mxu0
  %256 = vmatpush.bf16.msra.mxu0 %v237
  %257 = vmatpush.bf16.msra.mxu0 %v197
  %258 = vmatpush.bf16.msra.mxu0 %v195
  %259 = vmatpush.bf16.msra.mxu0 %v193
  %260 = vmatpush.bf16.msra.mxu0 %v191
  %261 = vmatpush.bf16.msra.mxu0 %v189
  %262 = vmatpush.bf16.msra.mxu0 %v187
  %263 = vmatpush.bf16.msra.mxu0 %v185
  %264 = vmatmul.bf16.gmra.mxu0 %v233
  %v265 = vpop.f32.mrf.mxu0
  %v266 = vadd.f32 %v252, %v265
  %v267 = vpop.f32.mrf.mxu0
  %v268 = vadd.f32 %v254, %v267
  %269 = vdwg.mxu0
  %270 = vmatpush.bf16.msra.mxu0 %v184
  %271 = vmatpush.bf16.msra.mxu0 %v182
  %272 = vmatpush.bf16.msra.mxu0 %v180
  %273 = vmatpush.bf16.msra.mxu0 %v178
  %274 = vmatpush.bf16.msra.mxu0 %v176
  %275 = vmatpush.bf16.msra.mxu0 %v174
  %276 = vmatpush.bf16.msra.mxu0 %v172
  %277 = vmatpush.bf16.msra.mxu0 %v170
  %278 = vmatmul.bf16.gmra.mxu0 %v70
  %v279 = vpop.f32.mrf.mxu0
  %v280 = vadd.f32 %v59, %v279
  %v281 = vpop.f32.mrf.mxu0
  %v282 = vadd.f32 %v59, %v281
  %283 = vdwg.mxu0
  %284 = vmatpush.bf16.msra.mxu0 %v240
  %285 = vmatpush.bf16.msra.mxu0 %v198
  %286 = vmatpush.bf16.msra.mxu0 %v196
  %287 = vmatpush.bf16.msra.mxu0 %v194
  %288 = vmatpush.bf16.msra.mxu0 %v192
  %289 = vmatpush.bf16.msra.mxu0 %v190
  %290 = vmatpush.bf16.msra.mxu0 %v188
  %291 = vmatpush.bf16.msra.mxu0 %v186
  %292 = vmatmul.bf16.gmra.mxu0 %v233
  %v293 = vpop.f32.mrf.mxu0
  %v294 = vadd.f32 %v280, %v293
  %v295 = vpop.f32.mrf.mxu0
  %v296 = vadd.f32 %v282, %v295
  %297 = vdwg.mxu0
  %v298 = vpack.c.bf16 %v268, %v266
  %v299 = vpack.c.bf16 %v296, %v294
  %v300 = vunpack.c.l.bf16 %v298
  %v301 = vunpack.c.l.bf16 %v299
  %v302 = vunpack.c.h.bf16 %v298
  %v303 = vunpack.c.h.bf16 %v299
  %v304 = vtanh.pop %v300
  %v305 = vtanh.pop %v301
  %v306 = vtanh.pop %v302
  %v307 = vtanh.pop %v303
  %v308 = vpack.c.bf16 %v306, %v304
  %v309 = vpack.c.bf16 %v307, %v305
  %v310 = vld [vmem:[%s3] sm:$0xf]
  %v311 = vld [vmem:[%s3 + $0x8] sm:$0xf]
  %v312 = vld [vmem:[%s3 + $0x10] sm:$0xf]
  %v313 = vld [vmem:[%s3 + $0x18] sm:$0xf]
  %v314 = vld [vmem:[%s3 + $0x20] sm:$0xf]
  %v315 = vld [vmem:[%s3 + $0x28] sm:$0xf]
  %v316 = vld [vmem:[%s3 + $0x30] sm:$0xf]
  %v317 = vld [vmem:[%s3 + $0x38] sm:$0xf]
  %v318 = vld [vmem:[%s3 + $0x40] sm:$0xf]
  %v319 = vld [vmem:[%s3 + $0x48] sm:$0xf]
  %v320 = vld [vmem:[%s3 + $0x50] sm:$0xf]
  %v321 = vld [vmem:[%s3 + $0x58] sm:$0xf]
  %v322 = vld [vmem:[%s3 + $0x60] sm:$0xf]
  %v323 = vld [vmem:[%s3 + $0x68] sm:$0xf]
  %v324 = vld [vmem:[%s3 + $0x70] sm:$0xf]
  %v325 = vld [vmem:[%s3 + $0x78] sm:$0xf]
  %v326 = vld [vmem:[%s3 + $0x80] sm:$0xf]
  %v327 = vld [vmem:[%s3 + $0x88] sm:$0xf]
  %v328 = vld [vmem:[%s3 + $0x90] sm:$0xf]
  %v329 = vld [vmem:[%s3 + $0x98] sm:$0xf]
  %s330 = scalar_lea.vmem %s0, 16
  %v331 = vld [vmem:[%s330] sm:$0xff]
  %v332 = vld [vmem:[%s330 + $0x8] sm:$0xff]
  %v335 = vunpack.c.l.b16 %v331
  %v336 = vunpack.c.h.b16 %v331
  %v337 = vunpack.c.l.b16 %v332
  %v338 = vunpack.c.h.b16 %v332
  %v339 = vpack.c.b16 %v337, %v335
  %v340 = vpack.c.b16 %v338, %v336
  %v343 = vsel %vm231, %v340, 0
  %345 = vmatpush.bf16.msra.mxu0 %v183
  %346 = vmatpush.bf16.msra.mxu0 %v181
  %347 = vmatpush.bf16.msra.mxu0 %v179
  %348 = vmatpush.bf16.msra.mxu0 %v177
  %349 = vmatpush.bf16.msra.mxu0 %v175
  %350 = vmatpush.bf16.msra.mxu0 %v173
  %351 = vmatpush.bf16.msra.mxu0 %v171
  %352 = vmatpush.bf16.msra.mxu0 %v169
  %353 = vmatmul.bf16.gmra.mxu0 %v339
  %v354 = vpop.f32.mrf.mxu0
  %v355 = vadd.f32 %v58, %v354
  %v356 = vpop.f32.mrf.mxu0
  %v357 = vadd.f32 %v58, %v356
  %358 = vdwg.mxu0
  %359 = vmatpush.bf16.msra.mxu0 %v237
  %360 = vmatpush.bf16.msra.mxu0 %v197
  %361 = vmatpush.bf16.msra.mxu0 %v195
  %362 = vmatpush.bf16.msra.mxu0 %v193
  %363 = vmatpush.bf16.msra.mxu0 %v191
  %364 = vmatpush.bf16.msra.mxu0 %v189
  %365 = vmatpush.bf16.msra.mxu0 %v187
  %366 = vmatpush.bf16.msra.mxu0 %v185
  %367 = vmatmul.bf16.gmra.mxu0 %v343
  %v368 = vpop.f32.mrf.mxu0
  %v369 = vadd.f32 %v355, %v368
  %v370 = vpop.f32.mrf.mxu0
  %v371 = vadd.f32 %v357, %v370
  %372 = vdwg.mxu0
  %373 = vmatpush.bf16.msra.mxu0 %v184
  %374 = vmatpush.bf16.msra.mxu0 %v182
  %375 = vmatpush.bf16.msra.mxu0 %v180
  %376 = vmatpush.bf16.msra.mxu0 %v178
  %377 = vmatpush.bf16.msra.mxu0 %v176
  %378 = vmatpush.bf16.msra.mxu0 %v174
  %379 = vmatpush.bf16.msra.mxu0 %v172
  %380 = vmatpush.bf16.msra.mxu0 %v170
  %381 = vmatmul.bf16.gmra.mxu0 %v339
  %v382 = vpop.f32.mrf.mxu0
  %v383 = vadd.f32 %v59, %v382
  %v384 = vpop.f32.mrf.mxu0
  %v385 = vadd.f32 %v59, %v384
  %386 = vdwg.mxu0
  %387 = vmatpush.bf16.msra.mxu0 %v240
  %388 = vmatpush.bf16.msra.mxu0 %v198
  %389 = vmatpush.bf16.msra.mxu0 %v196
  %390 = vmatpush.bf16.msra.mxu0 %v194
  %391 = vmatpush.bf16.msra.mxu0 %v192
  %392 = vmatpush.bf16.msra.mxu0 %v190
  %393 = vmatpush.bf16.msra.mxu0 %v188
  %394 = vmatpush.bf16.msra.mxu0 %v186
  %395 = vmatmul.bf16.gmra.mxu0 %v343
  %v396 = vpop.f32.mrf.mxu0
  %v397 = vadd.f32 %v383, %v396
  %v398 = vpop.f32.mrf.mxu0
  %v399 = vadd.f32 %v385, %v398
  %400 = vdwg.mxu0
  %v401 = vpack.c.bf16 %v371, %v369
  %v402 = vpack.c.bf16 %v399, %v397
  %v403 = vunpack.c.l.bf16 %v401
  %v404 = vunpack.c.l.bf16 %v402
  %v405 = vunpack.c.h.bf16 %v401
  %v406 = vunpack.c.h.bf16 %v402
  %v407 = vtanh.pop %v403
  %v408 = vtanh.pop %v404
  %v409 = vtanh.pop %v405
  %v410 = vtanh.pop %v406
  %v411 = vpack.c.bf16 %v409, %v407
  %v412 = vpack.c.bf16 %v410, %v408
  %v413 = vld [vmem:[%s3 + $0xa0] sm:$0xf]
  %v414 = vld [vmem:[%s3 + $0xa8] sm:$0xf]
  %v415 = vld [vmem:[%s3 + $0xb0] sm:$0xf]
  %v416 = vld [vmem:[%s3 + $0xb8] sm:$0xf]
  %v417 = vld [vmem:[%s3 + $0xc0] sm:$0xf]
  %v418 = vld [vmem:[%s3 + $0xc8] sm:$0xf]
  %v419 = vld [vmem:[%s3 + $0xd0] sm:$0xf]
  %v420 = vld [vmem:[%s3 + $0xd8] sm:$0xf]
  %v421 = vld [vmem:[%s3 + $0xe0] sm:$0xf]
  %v422 = vld [vmem:[%s3 + $0xe8] sm:$0xf]
  %v423 = vld [vmem:[%s3 + $0xf0] sm:$0xf]
  %v424 = vld [vmem:[%s3 + $0xf8] sm:$0xf]
  %v425 = vld [vmem:[%s3 + $0x100] sm:$0xf]
  %v426 = vld [vmem:[%s3 + $0x108] sm:$0xf]
  %v427 = vld [vmem:[%s3 + $0x110] sm:$0xf]
  %v428 = vld [vmem:[%s3 + $0x118] sm:$0xf]
  %v429 = vld [vmem:[%s3 + $0x120] sm:$0xf]
  %v430 = vld [vmem:[%s3 + $0x128] sm:$0xf]
  %v431 = vld [vmem:[%s3 + $0x130] sm:$0xf]
  %v432 = vld [vmem:[%s3 + $0x138] sm:$0xf]
  %v453 = vunpack.c.l.b16 %v413
  %v454 = vunpack.c.l.b16 %v414
  %v455 = vunpack.c.l.b16 %v415
  %v456 = vunpack.c.l.b16 %v416
  %v457 = vunpack.c.l.b16 %v417
  %v458 = vunpack.c.l.b16 %v418
  %v459 = vunpack.c.l.b16 %v419
  %v460 = vunpack.c.l.b16 %v420
  %v461 = vunpack.c.l.b16 %v421
  %v462 = vunpack.c.l.b16 %v422
  %v463 = vunpack.c.l.b16 %v423
  %v464 = vunpack.c.l.b16 %v424
  %v465 = vunpack.c.l.b16 %v425
  %v466 = vunpack.c.l.b16 %v426
  %v467 = vunpack.c.l.b16 %v427
  %v468 = vunpack.c.l.b16 %v428
  %v469 = vunpack.c.l.b16 %v429
  %v470 = vunpack.c.l.b16 %v430
  %v471 = vunpack.c.l.b16 %v431
  %v472 = vunpack.c.l.b16 %v432
  %v473 = vpack.c.b16 %v454, %v453
  %v474 = vpack.c.b16 %v456, %v455
  %v475 = vpack.c.b16 %v458, %v457
  %v476 = vpack.c.b16 %v460, %v459
  %v477 = vpack.c.b16 %v462, %v461
  %v478 = vpack.c.b16 %v464, %v463
  %v479 = vpack.c.b16 %v466, %v465
  %v480 = vpack.c.b16 %v468, %v467
  %v481 = vpack.c.b16 %v470, %v469
  %v482 = vpack.c.b16 %v472, %v471
  %vm493 = vcmask 261120
  %v495 = vsel %vm493, %v412, 0
  %497 = vmatpush.bf16.msra.mxu0 %v480
  %498 = vmatpush.bf16.msra.mxu0 %v479
  %499 = vmatpush.bf16.msra.mxu0 %v478
  %500 = vmatpush.bf16.msra.mxu0 %v477
  %501 = vmatpush.bf16.msra.mxu0 %v476
  %502 = vmatpush.bf16.msra.mxu0 %v475
  %503 = vmatpush.bf16.msra.mxu0 %v474
  %504 = vmatpush.bf16.msra.mxu0 %v473
  %505 = vmatmul.bf16.gmra.mxu0 %v411
  %v506 = vpop.f32.mrf.mxu0
  %v507 = vadd.f32 0.0, %v506
  %v508 = vpop.f32.mrf.mxu0
  %v509 = vadd.f32 0.0, %v508
  %510 = vdwg.mxu0
  %511 = vmatpush.bf16.msra.mxu0 0
  %512 = vmatpush.bf16.msra.mxu0 0
  %513 = vmatpush.bf16.msra.mxu0 0
  %514 = vmatpush.bf16.msra.mxu0 0
  %515 = vmatpush.bf16.msra.mxu0 0
  %516 = vmatpush.bf16.msra.mxu0 0
  %517 = vmatpush.bf16.msra.mxu0 %v482
  %518 = vmatpush.bf16.msra.mxu0 %v481
  %519 = vmatmul.bf16.gmra.mxu0 %v495
  %v520 = vpop.f32.mrf.mxu0
  %v521 = vadd.f32 %v507, %v520
  %v522 = vpop.f32.mrf.mxu0
  %v523 = vadd.f32 %v509, %v522
  %524 = vdwg.mxu0
  %v545 = vunpack.c.l.b16 %v310
  %v546 = vunpack.c.l.b16 %v311
  %v547 = vunpack.c.l.b16 %v312
  %v548 = vunpack.c.l.b16 %v313
  %v549 = vunpack.c.l.b16 %v314
  %v550 = vunpack.c.l.b16 %v315
  %v551 = vunpack.c.l.b16 %v316
  %v552 = vunpack.c.l.b16 %v317
  %v553 = vunpack.c.l.b16 %v318
  %v554 = vunpack.c.l.b16 %v319
  %v555 = vunpack.c.l.b16 %v320
  %v556 = vunpack.c.l.b16 %v321
  %v557 = vunpack.c.l.b16 %v322
  %v558 = vunpack.c.l.b16 %v323
  %v559 = vunpack.c.l.b16 %v324
  %v560 = vunpack.c.l.b16 %v325
  %v561 = vunpack.c.l.b16 %v326
  %v562 = vunpack.c.l.b16 %v327
  %v563 = vunpack.c.l.b16 %v328
  %v564 = vunpack.c.l.b16 %v329
  %v565 = vpack.c.b16 %v546, %v545
  %v566 = vpack.c.b16 %v548, %v547
  %v567 = vpack.c.b16 %v550, %v549
  %v568 = vpack.c.b16 %v552, %v551
  %v569 = vpack.c.b16 %v554, %v553
  %v570 = vpack.c.b16 %v556, %v555
  %v571 = vpack.c.b16 %v558, %v557
  %v572 = vpack.c.b16 %v560, %v559
  %v573 = vpack.c.b16 %v562, %v561
  %v574 = vpack.c.b16 %v564, %v563
  %v586 = vsel %vm493, %v309, 0
  %588 = vmatpush.bf16.msra.mxu0 %v572
  %589 = vmatpush.bf16.msra.mxu0 %v571
  %590 = vmatpush.bf16.msra.mxu0 %v570
  %591 = vmatpush.bf16.msra.mxu0 %v569
  %592 = vmatpush.bf16.msra.mxu0 %v568
  %593 = vmatpush.bf16.msra.mxu0 %v567
  %594 = vmatpush.bf16.msra.mxu0 %v566
  %595 = vmatpush.bf16.msra.mxu0 %v565
  %596 = vmatmul.bf16.gmra.mxu0 %v308
  %v597 = vpop.f32.mrf.mxu0
  %v598 = vadd.f32 %v521, %v597
  %v599 = vpop.f32.mrf.mxu0
  %v600 = vadd.f32 %v523, %v599
  %601 = vdwg.mxu0
  %602 = vmatpush.bf16.msra.mxu0 0
  %603 = vmatpush.bf16.msra.mxu0 0
  %604 = vmatpush.bf16.msra.mxu0 0
  %605 = vmatpush.bf16.msra.mxu0 0
  %606 = vmatpush.bf16.msra.mxu0 0
  %607 = vmatpush.bf16.msra.mxu0 0
  %608 = vmatpush.bf16.msra.mxu0 %v574
  %609 = vmatpush.bf16.msra.mxu0 %v573
  %610 = vmatmul.bf16.gmra.mxu0 %v586
  %v611 = vpop.f32.mrf.mxu0
  %v612 = vadd.f32 %v598, %v611
  %v613 = vpop.f32.mrf.mxu0
  %v614 = vadd.f32 %v600, %v613
  %615 = vdwg.mxu0
  %s616 = scalar_lea.vmem %s0, 32
  %v617 = vld [vmem:[%s616] sm:$0xff]
  %v618 = vld [vmem:[%s616 + $0x8] sm:$0xff]
  %v621 = vunpack.c.l.b16 %v617
  %v622 = vunpack.c.h.b16 %v617
  %v623 = vunpack.c.l.b16 %v618
  %v624 = vunpack.c.h.b16 %v618
  %v625 = vpack.c.b16 %v623, %v621
  %v626 = vpack.c.b16 %v624, %v622
  %v629 = vsel %vm231, %v626, 0
  %631 = vmatpush.bf16.msra.mxu0 %v183
  %632 = vmatpush.bf16.msra.mxu0 %v181
  %633 = vmatpush.bf16.msra.mxu0 %v179
  %634 = vmatpush.bf16.msra.mxu0 %v177
  %635 = vmatpush.bf16.msra.mxu0 %v175
  %636 = vmatpush.bf16.msra.mxu0 %v173
  %637 = vmatpush.bf16.msra.mxu0 %v171
  %638 = vmatpush.bf16.msra.mxu0 %v169
  %639 = vmatmul.bf16.gmra.mxu0 %v625
  %v640 = vpop.f32.mrf.mxu0
  %v641 = vadd.f32 %v58, %v640
  %v642 = vpop.f32.mrf.mxu0
  %v643 = vadd.f32 %v58, %v642
  %644 = vdwg.mxu0
  %645 = vmatpush.bf16.msra.mxu0 %v237
  %646 = vmatpush.bf16.msra.mxu0 %v197
  %647 = vmatpush.bf16.msra.mxu0 %v195
  %648 = vmatpush.bf16.msra.mxu0 %v193
  %649 = vmatpush.bf16.msra.mxu0 %v191
  %650 = vmatpush.bf16.msra.mxu0 %v189
  %651 = vmatpush.bf16.msra.mxu0 %v187
  %652 = vmatpush.bf16.msra.mxu0 %v185
  %653 = vmatmul.bf16.gmra.mxu0 %v629
  %v654 = vpop.f32.mrf.mxu0
  %v655 = vadd.f32 %v641, %v654
  %v656 = vpop.f32.mrf.mxu0
  %v657 = vadd.f32 %v643, %v656
  %658 = vdwg.mxu0
  %659 = vmatpush.bf16.msra.mxu0 %v184
  %660 = vmatpush.bf16.msra.mxu0 %v182
  %661 = vmatpush.bf16.msra.mxu0 %v180
  %662 = vmatpush.bf16.msra.mxu0 %v178
  %663 = vmatpush.bf16.msra.mxu0 %v176
  %664 = vmatpush.bf16.msra.mxu0 %v174
  %665 = vmatpush.bf16.msra.mxu0 %v172
  %666 = vmatpush.bf16.msra.mxu0 %v170
  %667 = vmatmul.bf16.gmra.mxu0 %v625
  %v668 = vpop.f32.mrf.mxu0
  %v669 = vadd.f32 %v59, %v668
  %v670 = vpop.f32.mrf.mxu0
  %v671 = vadd.f32 %v59, %v670
  %672 = vdwg.mxu0
  %673 = vmatpush.bf16.msra.mxu0 %v240
  %674 = vmatpush.bf16.msra.mxu0 %v198
  %675 = vmatpush.bf16.msra.mxu0 %v196
  %676 = vmatpush.bf16.msra.mxu0 %v194
  %677 = vmatpush.bf16.msra.mxu0 %v192
  %678 = vmatpush.bf16.msra.mxu0 %v190
  %679 = vmatpush.bf16.msra.mxu0 %v188
  %680 = vmatpush.bf16.msra.mxu0 %v186
  %681 = vmatmul.bf16.gmra.mxu0 %v629
  %v682 = vpop.f32.mrf.mxu0
  %v683 = vadd.f32 %v669, %v682
  %v684 = vpop.f32.mrf.mxu0
  %v685 = vadd.f32 %v671, %v684
  %686 = vdwg.mxu0
  %v687 = vpack.c.bf16 %v657, %v655
  %v688 = vpack.c.bf16 %v685, %v683
  %v689 = vunpack.c.l.bf16 %v687
  %v690 = vunpack.c.l.bf16 %v688
  %v691 = vunpack.c.h.bf16 %v687
  %v692 = vunpack.c.h.bf16 %v688
  %v693 = vtanh.pop %v689
  %v694 = vtanh.pop %v690
  %v695 = vtanh.pop %v691
  %v696 = vtanh.pop %v692
  %v697 = vpack.c.bf16 %v695, %v693
  %v698 = vpack.c.bf16 %v696, %v694
  %v699 = vld [vmem:[%s3 + $0x140] sm:$0xf]
  %v700 = vld [vmem:[%s3 + $0x148] sm:$0xf]
  %v701 = vld [vmem:[%s3 + $0x150] sm:$0xf]
  %v702 = vld [vmem:[%s3 + $0x158] sm:$0xf]
  %v703 = vld [vmem:[%s3 + $0x160] sm:$0xf]
  %v704 = vld [vmem:[%s3 + $0x168] sm:$0xf]
  %v705 = vld [vmem:[%s3 + $0x170] sm:$0xf]
  %v706 = vld [vmem:[%s3 + $0x178] sm:$0xf]
  %v707 = vld [vmem:[%s3 + $0x180] sm:$0xf]
  %v708 = vld [vmem:[%s3 + $0x188] sm:$0xf]
  %v709 = vld [vmem:[%s3 + $0x190] sm:$0xf]
  %v710 = vld [vmem:[%s3 + $0x198] sm:$0xf]
  %v711 = vld [vmem:[%s3 + $0x1a0] sm:$0xf]
  %v712 = vld [vmem:[%s3 + $0x1a8] sm:$0xf]
  %v713 = vld [vmem:[%s3 + $0x1b0] sm:$0xf]
  %v714 = vld [vmem:[%s3 + $0x1b8] sm:$0xf]
  %v715 = vld [vmem:[%s3 + $0x1c0] sm:$0xf]
  %v716 = vld [vmem:[%s3 + $0x1c8] sm:$0xf]
  %v717 = vld [vmem:[%s3 + $0x1d0] sm:$0xf]
  %v718 = vld [vmem:[%s3 + $0x1d8] sm:$0xf]
  %v739 = vunpack.c.l.b16 %v699
  %v740 = vunpack.c.l.b16 %v700
  %v741 = vunpack.c.l.b16 %v701
  %v742 = vunpack.c.l.b16 %v702
  %v743 = vunpack.c.l.b16 %v703
  %v744 = vunpack.c.l.b16 %v704
  %v745 = vunpack.c.l.b16 %v705
  %v746 = vunpack.c.l.b16 %v706
  %v747 = vunpack.c.l.b16 %v707
  %v748 = vunpack.c.l.b16 %v708
  %v749 = vunpack.c.l.b16 %v709
  %v750 = vunpack.c.l.b16 %v710
  %v751 = vunpack.c.l.b16 %v711
  %v752 = vunpack.c.l.b16 %v712
  %v753 = vunpack.c.l.b16 %v713
  %v754 = vunpack.c.l.b16 %v714
  %v755 = vunpack.c.l.b16 %v715
  %v756 = vunpack.c.l.b16 %v716
  %v757 = vunpack.c.l.b16 %v717
  %v758 = vunpack.c.l.b16 %v718
  %v759 = vpack.c.b16 %v740, %v739
  %v760 = vpack.c.b16 %v742, %v741
  %v761 = vpack.c.b16 %v744, %v743
  %v762 = vpack.c.b16 %v746, %v745
  %v763 = vpack.c.b16 %v748, %v747
  %v764 = vpack.c.b16 %v750, %v749
  %v765 = vpack.c.b16 %v752, %v751
  %v766 = vpack.c.b16 %v754, %v753
  %v767 = vpack.c.b16 %v756, %v755
  %v768 = vpack.c.b16 %v758, %v757
  %v780 = vsel %vm493, %v698, 0
  %782 = vmatpush.bf16.msra.mxu0 %v766
  %783 = vmatpush.bf16.msra.mxu0 %v765
  %784 = vmatpush.bf16.msra.mxu0 %v764
  %785 = vmatpush.bf16.msra.mxu0 %v763
  %786 = vmatpush.bf16.msra.mxu0 %v762
  %787 = vmatpush.bf16.msra.mxu0 %v761
  %788 = vmatpush.bf16.msra.mxu0 %v760
  %789 = vmatpush.bf16.msra.mxu0 %v759
  %790 = vmatmul.bf16.gmra.mxu0 %v697
  %v791 = vpop.f32.mrf.mxu0
  %v792 = vadd.f32 0.0, %v791
  %v793 = vpop.f32.mrf.mxu0
  %v794 = vadd.f32 0.0, %v793
  %795 = vdwg.mxu0
  %796 = vmatpush.bf16.msra.mxu0 0
  %797 = vmatpush.bf16.msra.mxu0 0
  %798 = vmatpush.bf16.msra.mxu0 0
  %799 = vmatpush.bf16.msra.mxu0 0
  %800 = vmatpush.bf16.msra.mxu0 0
  %801 = vmatpush.bf16.msra.mxu0 0
  %802 = vmatpush.bf16.msra.mxu0 %v768
  %803 = vmatpush.bf16.msra.mxu0 %v767
  %804 = vmatmul.bf16.gmra.mxu0 %v780
  %v805 = vpop.f32.mrf.mxu0
  %v806 = vadd.f32 %v792, %v805
  %v807 = vpop.f32.mrf.mxu0
  %v808 = vadd.f32 %v794, %v807
  %809 = vdwg.mxu0
  %v810 = vadd.f32 %v612, %v806
  %v811 = vadd.f32 %v614, %v808
  %s812 = scalar_lea.vmem %s0, 48
  %v813 = vld [vmem:[%s812] sm:$0xff]
  %v814 = vld [vmem:[%s812 + $0x8] sm:$0xff]
  %v817 = vunpack.c.l.b16 %v813
  %v818 = vunpack.c.h.b16 %v813
  %v819 = vunpack.c.l.b16 %v814
  %v820 = vunpack.c.h.b16 %v814
  %v821 = vpack.c.b16 %v819, %v817
  %v822 = vpack.c.b16 %v820, %v818
  %v825 = vsel %vm231, %v822, 0
  %827 = vmatpush.bf16.msra.mxu0 %v183
  %828 = vmatpush.bf16.msra.mxu0 %v181
  %829 = vmatpush.bf16.msra.mxu0 %v179
  %830 = vmatpush.bf16.msra.mxu0 %v177
  %831 = vmatpush.bf16.msra.mxu0 %v175
  %832 = vmatpush.bf16.msra.mxu0 %v173
  %833 = vmatpush.bf16.msra.mxu0 %v171
  %834 = vmatpush.bf16.msra.mxu0 %v169
  %835 = vmatmul.bf16.gmra.mxu0 %v821
  %v836 = vpop.f32.mrf.mxu0
  %v837 = vadd.f32 %v58, %v836
  %v838 = vpop.f32.mrf.mxu0
  %v839 = vadd.f32 %v58, %v838
  %840 = vdwg.mxu0
  %841 = vmatpush.bf16.msra.mxu0 %v237
  %842 = vmatpush.bf16.msra.mxu0 %v197
  %843 = vmatpush.bf16.msra.mxu0 %v195
  %844 = vmatpush.bf16.msra.mxu0 %v193
  %845 = vmatpush.bf16.msra.mxu0 %v191
  %846 = vmatpush.bf16.msra.mxu0 %v189
  %847 = vmatpush.bf16.msra.mxu0 %v187
  %848 = vmatpush.bf16.msra.mxu0 %v185
  %849 = vmatmul.bf16.gmra.mxu0 %v825
  %v850 = vpop.f32.mrf.mxu0
  %v851 = vadd.f32 %v837, %v850
  %v852 = vpop.f32.mrf.mxu0
  %v853 = vadd.f32 %v839, %v852
  %854 = vdwg.mxu0
  %855 = vmatpush.bf16.msra.mxu0 %v184
  %856 = vmatpush.bf16.msra.mxu0 %v182
  %857 = vmatpush.bf16.msra.mxu0 %v180
  %858 = vmatpush.bf16.msra.mxu0 %v178
  %859 = vmatpush.bf16.msra.mxu0 %v176
  %860 = vmatpush.bf16.msra.mxu0 %v174
  %861 = vmatpush.bf16.msra.mxu0 %v172
  %862 = vmatpush.bf16.msra.mxu0 %v170
  %863 = vmatmul.bf16.gmra.mxu0 %v821
  %v864 = vpop.f32.mrf.mxu0
  %v865 = vadd.f32 %v59, %v864
  %v866 = vpop.f32.mrf.mxu0
  %v867 = vadd.f32 %v59, %v866
  %868 = vdwg.mxu0
  %869 = vmatpush.bf16.msra.mxu0 %v240
  %870 = vmatpush.bf16.msra.mxu0 %v198
  %871 = vmatpush.bf16.msra.mxu0 %v196
  %872 = vmatpush.bf16.msra.mxu0 %v194
  %873 = vmatpush.bf16.msra.mxu0 %v192
  %874 = vmatpush.bf16.msra.mxu0 %v190
  %875 = vmatpush.bf16.msra.mxu0 %v188
  %876 = vmatpush.bf16.msra.mxu0 %v186
  %877 = vmatmul.bf16.gmra.mxu0 %v825
  %v878 = vpop.f32.mrf.mxu0
  %v879 = vadd.f32 %v865, %v878
  %v880 = vpop.f32.mrf.mxu0
  %v881 = vadd.f32 %v867, %v880
  %882 = vdwg.mxu0
  %v883 = vpack.c.bf16 %v853, %v851
  %v884 = vpack.c.bf16 %v881, %v879
  %v885 = vunpack.c.l.bf16 %v883
  %v886 = vunpack.c.l.bf16 %v884
  %v887 = vunpack.c.h.bf16 %v883
  %v888 = vunpack.c.h.bf16 %v884
  %v889 = vtanh.pop %v885
  %v890 = vtanh.pop %v886
  %v891 = vtanh.pop %v887
  %v892 = vtanh.pop %v888
  %v893 = vpack.c.bf16 %v891, %v889
  %v894 = vpack.c.bf16 %v892, %v890
  %v895 = vld [vmem:[%s3 + $0x1e0] sm:$0xf]
  %v896 = vld [vmem:[%s3 + $0x1e8] sm:$0xf]
  %v897 = vld [vmem:[%s3 + $0x1f0] sm:$0xf]
  %v898 = vld [vmem:[%s3 + $0x1f8] sm:$0xf]
  %v899 = vld [vmem:[%s3 + $0x200] sm:$0xf]
  %v900 = vld [vmem:[%s3 + $0x208] sm:$0xf]
  %v901 = vld [vmem:[%s3 + $0x210] sm:$0xf]
  %v902 = vld [vmem:[%s3 + $0x218] sm:$0xf]
  %v903 = vld [vmem:[%s3 + $0x220] sm:$0xf]
  %v904 = vld [vmem:[%s3 + $0x228] sm:$0xf]
  %v905 = vld [vmem:[%s3 + $0x230] sm:$0xf]
  %v906 = vld [vmem:[%s3 + $0x238] sm:$0xf]
  %v907 = vld [vmem:[%s3 + $0x240] sm:$0xf]
  %v908 = vld [vmem:[%s3 + $0x248] sm:$0xf]
  %v909 = vld [vmem:[%s3 + $0x250] sm:$0xf]
  %v910 = vld [vmem:[%s3 + $0x258] sm:$0xf]
  %v911 = vld [vmem:[%s3 + $0x260] sm:$0xf]
  %v912 = vld [vmem:[%s3 + $0x268] sm:$0xf]
  %v913 = vld [vmem:[%s3 + $0x270] sm:$0xf]
  %v914 = vld [vmem:[%s3 + $0x278] sm:$0xf]
  %v935 = vunpack.c.l.b16 %v895
  %v936 = vunpack.c.l.b16 %v896
  %v937 = vunpack.c.l.b16 %v897
  %v938 = vunpack.c.l.b16 %v898
  %v939 = vunpack.c.l.b16 %v899
  %v940 = vunpack.c.l.b16 %v900
  %v941 = vunpack.c.l.b16 %v901
  %v942 = vunpack.c.l.b16 %v902
  %v943 = vunpack.c.l.b16 %v903
  %v944 = vunpack.c.l.b16 %v904
  %v945 = vunpack.c.l.b16 %v905
  %v946 = vunpack.c.l.b16 %v906
  %v947 = vunpack.c.l.b16 %v907
  %v948 = vunpack.c.l.b16 %v908
  %v949 = vunpack.c.l.b16 %v909
  %v950 = vunpack.c.l.b16 %v910
  %v951 = vunpack.c.l.b16 %v911
  %v952 = vunpack.c.l.b16 %v912
  %v953 = vunpack.c.l.b16 %v913
  %v954 = vunpack.c.l.b16 %v914
  %v955 = vpack.c.b16 %v936, %v935
  %v956 = vpack.c.b16 %v938, %v937
  %v957 = vpack.c.b16 %v940, %v939
  %v958 = vpack.c.b16 %v942, %v941
  %v959 = vpack.c.b16 %v944, %v943
  %v960 = vpack.c.b16 %v946, %v945
  %v961 = vpack.c.b16 %v948, %v947
  %v962 = vpack.c.b16 %v950, %v949
  %v963 = vpack.c.b16 %v952, %v951
  %v964 = vpack.c.b16 %v954, %v953
  %v976 = vsel %vm493, %v894, 0
  %978 = vmatpush.bf16.msra.mxu0 %v962
  %979 = vmatpush.bf16.msra.mxu0 %v961
  %980 = vmatpush.bf16.msra.mxu0 %v960
  %981 = vmatpush.bf16.msra.mxu0 %v959
  %982 = vmatpush.bf16.msra.mxu0 %v958
  %983 = vmatpush.bf16.msra.mxu0 %v957
  %984 = vmatpush.bf16.msra.mxu0 %v956
  %985 = vmatpush.bf16.msra.mxu0 %v955
  %986 = vmatmul.bf16.gmra.mxu0 %v893
  %v987 = vpop.f32.mrf.mxu0
  %v988 = vadd.f32 0.0, %v987
  %v989 = vpop.f32.mrf.mxu0
  %v990 = vadd.f32 0.0, %v989
  %991 = vdwg.mxu0
  %992 = vmatpush.bf16.msra.mxu0 0
  %993 = vmatpush.bf16.msra.mxu0 0
  %994 = vmatpush.bf16.msra.mxu0 0
  %995 = vmatpush.bf16.msra.mxu0 0
  %996 = vmatpush.bf16.msra.mxu0 0
  %997 = vmatpush.bf16.msra.mxu0 0
  %998 = vmatpush.bf16.msra.mxu0 %v964
  %999 = vmatpush.bf16.msra.mxu0 %v963
  %1000 = vmatmul.bf16.gmra.mxu0 %v976
  %v1001 = vpop.f32.mrf.mxu0
  %v1002 = vadd.f32 %v988, %v1001
  %v1003 = vpop.f32.mrf.mxu0
  %v1004 = vadd.f32 %v990, %v1003
  %1005 = vdwg.mxu0
  %v1006 = vadd.f32 %v810, %v1002
  %v1007 = vadd.f32 %v811, %v1004
  %s1008 = scalar_lea.vmem %s0, 64
  %v1009 = vld [vmem:[%s1008] sm:$0xff]
  %v1010 = vld [vmem:[%s1008 + $0x8] sm:$0xff]
  %v1013 = vunpack.c.l.b16 %v1009
  %v1014 = vunpack.c.h.b16 %v1009
  %v1015 = vunpack.c.l.b16 %v1010
  %v1016 = vunpack.c.h.b16 %v1010
  %v1017 = vpack.c.b16 %v1015, %v1013
  %v1018 = vpack.c.b16 %v1016, %v1014
  %v1021 = vsel %vm231, %v1018, 0
  %1023 = vmatpush.bf16.msra.mxu0 %v183
  %1024 = vmatpush.bf16.msra.mxu0 %v181
  %1025 = vmatpush.bf16.msra.mxu0 %v179
  %1026 = vmatpush.bf16.msra.mxu0 %v177
  %1027 = vmatpush.bf16.msra.mxu0 %v175
  %1028 = vmatpush.bf16.msra.mxu0 %v173
  %1029 = vmatpush.bf16.msra.mxu0 %v171
  %1030 = vmatpush.bf16.msra.mxu0 %v169
  %1031 = vmatmul.bf16.gmra.mxu0 %v1017
  %v1032 = vpop.f32.mrf.mxu0
  %v1033 = vadd.f32 %v58, %v1032
  %v1034 = vpop.f32.mrf.mxu0
  %v1035 = vadd.f32 %v58, %v1034
  %1036 = vdwg.mxu0
  %1037 = vmatpush.bf16.msra.mxu0 %v237
  %1038 = vmatpush.bf16.msra.mxu0 %v197
  %1039 = vmatpush.bf16.msra.mxu0 %v195
  %1040 = vmatpush.bf16.msra.mxu0 %v193
  %1041 = vmatpush.bf16.msra.mxu0 %v191
  %1042 = vmatpush.bf16.msra.mxu0 %v189
  %1043 = vmatpush.bf16.msra.mxu0 %v187
  %1044 = vmatpush.bf16.msra.mxu0 %v185
  %1045 = vmatmul.bf16.gmra.mxu0 %v1021
  %v1046 = vpop.f32.mrf.mxu0
  %v1047 = vadd.f32 %v1033, %v1046
  %v1048 = vpop.f32.mrf.mxu0
  %v1049 = vadd.f32 %v1035, %v1048
  %1050 = vdwg.mxu0
  %1051 = vmatpush.bf16.msra.mxu0 %v184
  %1052 = vmatpush.bf16.msra.mxu0 %v182
  %1053 = vmatpush.bf16.msra.mxu0 %v180
  %1054 = vmatpush.bf16.msra.mxu0 %v178
  %1055 = vmatpush.bf16.msra.mxu0 %v176
  %1056 = vmatpush.bf16.msra.mxu0 %v174
  %1057 = vmatpush.bf16.msra.mxu0 %v172
  %1058 = vmatpush.bf16.msra.mxu0 %v170
  %1059 = vmatmul.bf16.gmra.mxu0 %v1017
  %v1060 = vpop.f32.mrf.mxu0
  %v1061 = vadd.f32 %v59, %v1060
  %v1062 = vpop.f32.mrf.mxu0
  %v1063 = vadd.f32 %v59, %v1062
  %1064 = vdwg.mxu0
  %1065 = vmatpush.bf16.msra.mxu0 %v240
  %1066 = vmatpush.bf16.msra.mxu0 %v198
  %1067 = vmatpush.bf16.msra.mxu0 %v196
  %1068 = vmatpush.bf16.msra.mxu0 %v194
  %1069 = vmatpush.bf16.msra.mxu0 %v192
  %1070 = vmatpush.bf16.msra.mxu0 %v190
  %1071 = vmatpush.bf16.msra.mxu0 %v188
  %1072 = vmatpush.bf16.msra.mxu0 %v186
  %1073 = vmatmul.bf16.gmra.mxu0 %v1021
  %v1074 = vpop.f32.mrf.mxu0
  %v1075 = vadd.f32 %v1061, %v1074
  %v1076 = vpop.f32.mrf.mxu0
  %v1077 = vadd.f32 %v1063, %v1076
  %1078 = vdwg.mxu0
  %v1079 = vpack.c.bf16 %v1049, %v1047
  %v1080 = vpack.c.bf16 %v1077, %v1075
  %v1081 = vunpack.c.l.bf16 %v1079
  %v1082 = vunpack.c.l.bf16 %v1080
  %v1083 = vunpack.c.h.bf16 %v1079
  %v1084 = vunpack.c.h.bf16 %v1080
  %v1085 = vtanh.pop %v1081
  %v1086 = vtanh.pop %v1082
  %v1087 = vtanh.pop %v1083
  %v1088 = vtanh.pop %v1084
  %v1089 = vpack.c.bf16 %v1087, %v1085
  %v1090 = vpack.c.bf16 %v1088, %v1086
  %v1091 = vld [vmem:[%s3 + $0x280] sm:$0xf]
  %v1092 = vld [vmem:[%s3 + $0x288] sm:$0xf]
  %v1093 = vld [vmem:[%s3 + $0x290] sm:$0xf]
  %v1094 = vld [vmem:[%s3 + $0x298] sm:$0xf]
  %v1095 = vld [vmem:[%s3 + $0x2a0] sm:$0xf]
  %v1096 = vld [vmem:[%s3 + $0x2a8] sm:$0xf]
  %v1097 = vld [vmem:[%s3 + $0x2b0] sm:$0xf]
  %v1098 = vld [vmem:[%s3 + $0x2b8] sm:$0xf]
  %v1099 = vld [vmem:[%s3 + $0x2c0] sm:$0xf]
  %v1100 = vld [vmem:[%s3 + $0x2c8] sm:$0xf]
  %v1101 = vld [vmem:[%s3 + $0x2d0] sm:$0xf]
  %v1102 = vld [vmem:[%s3 + $0x2d8] sm:$0xf]
  %v1103 = vld [vmem:[%s3 + $0x2e0] sm:$0xf]
  %v1104 = vld [vmem:[%s3 + $0x2e8] sm:$0xf]
  %v1105 = vld [vmem:[%s3 + $0x2f0] sm:$0xf]
  %v1106 = vld [vmem:[%s3 + $0x2f8] sm:$0xf]
  %v1107 = vld [vmem:[%s3 + $0x300] sm:$0xf]
  %v1108 = vld [vmem:[%s3 + $0x308] sm:$0xf]
  %v1109 = vld [vmem:[%s3 + $0x310] sm:$0xf]
  %v1110 = vld [vmem:[%s3 + $0x318] sm:$0xf]
  %v1131 = vunpack.c.l.b16 %v1091
  %v1132 = vunpack.c.l.b16 %v1092
  %v1133 = vunpack.c.l.b16 %v1093
  %v1134 = vunpack.c.l.b16 %v1094
  %v1135 = vunpack.c.l.b16 %v1095
  %v1136 = vunpack.c.l.b16 %v1096
  %v1137 = vunpack.c.l.b16 %v1097
  %v1138 = vunpack.c.l.b16 %v1098
  %v1139 = vunpack.c.l.b16 %v1099
  %v1140 = vunpack.c.l.b16 %v1100
  %v1141 = vunpack.c.l.b16 %v1101
  %v1142 = vunpack.c.l.b16 %v1102
  %v1143 = vunpack.c.l.b16 %v1103
  %v1144 = vunpack.c.l.b16 %v1104
  %v1145 = vunpack.c.l.b16 %v1105
  %v1146 = vunpack.c.l.b16 %v1106
  %v1147 = vunpack.c.l.b16 %v1107
  %v1148 = vunpack.c.l.b16 %v1108
  %v1149 = vunpack.c.l.b16 %v1109
  %v1150 = vunpack.c.l.b16 %v1110
  %v1151 = vpack.c.b16 %v1132, %v1131
  %v1152 = vpack.c.b16 %v1134, %v1133
  %v1153 = vpack.c.b16 %v1136, %v1135
  %v1154 = vpack.c.b16 %v1138, %v1137
  %v1155 = vpack.c.b16 %v1140, %v1139
  %v1156 = vpack.c.b16 %v1142, %v1141
  %v1157 = vpack.c.b16 %v1144, %v1143
  %v1158 = vpack.c.b16 %v1146, %v1145
  %v1159 = vpack.c.b16 %v1148, %v1147
  %v1160 = vpack.c.b16 %v1150, %v1149
  %v1172 = vsel %vm493, %v1090, 0
  %1174 = vmatpush.bf16.msra.mxu0 %v1158
  %1175 = vmatpush.bf16.msra.mxu0 %v1157
  %1176 = vmatpush.bf16.msra.mxu0 %v1156
  %1177 = vmatpush.bf16.msra.mxu0 %v1155
  %1178 = vmatpush.bf16.msra.mxu0 %v1154
  %1179 = vmatpush.bf16.msra.mxu0 %v1153
  %1180 = vmatpush.bf16.msra.mxu0 %v1152
  %1181 = vmatpush.bf16.msra.mxu0 %v1151
  %1182 = vmatmul.bf16.gmra.mxu0 %v1089
  %v1183 = vpop.f32.mrf.mxu0
  %v1184 = vadd.f32 0.0, %v1183
  %v1185 = vpop.f32.mrf.mxu0
  %v1186 = vadd.f32 0.0, %v1185
  %1187 = vdwg.mxu0
  %1188 = vmatpush.bf16.msra.mxu0 0
  %1189 = vmatpush.bf16.msra.mxu0 0
  %1190 = vmatpush.bf16.msra.mxu0 0
  %1191 = vmatpush.bf16.msra.mxu0 0
  %1192 = vmatpush.bf16.msra.mxu0 0
  %1193 = vmatpush.bf16.msra.mxu0 0
  %1194 = vmatpush.bf16.msra.mxu0 %v1160
  %1195 = vmatpush.bf16.msra.mxu0 %v1159
  %1196 = vmatmul.bf16.gmra.mxu0 %v1172
  %v1197 = vpop.f32.mrf.mxu0
  %v1198 = vadd.f32 %v1184, %v1197
  %v1199 = vpop.f32.mrf.mxu0
  %v1200 = vadd.f32 %v1186, %v1199
  %1201 = vdwg.mxu0
  %v1202 = vadd.f32 %v1006, %v1198
  %v1203 = vadd.f32 %v1007, %v1200
  %s1204 = scalar_lea.vmem %s0, 80
  %v1205 = vld [vmem:[%s1204] sm:$0xff]
  %v1206 = vld [vmem:[%s1204 + $0x8] sm:$0xff]
  %v1209 = vunpack.c.l.b16 %v1205
  %v1210 = vunpack.c.h.b16 %v1205
  %v1211 = vunpack.c.l.b16 %v1206
  %v1212 = vunpack.c.h.b16 %v1206
  %v1213 = vpack.c.b16 %v1211, %v1209
  %v1214 = vpack.c.b16 %v1212, %v1210
  %v1217 = vsel %vm231, %v1214, 0
  %1219 = vmatpush.bf16.msra.mxu0 %v183
  %1220 = vmatpush.bf16.msra.mxu0 %v181
  %1221 = vmatpush.bf16.msra.mxu0 %v179
  %1222 = vmatpush.bf16.msra.mxu0 %v177
  %1223 = vmatpush.bf16.msra.mxu0 %v175
  %1224 = vmatpush.bf16.msra.mxu0 %v173
  %1225 = vmatpush.bf16.msra.mxu0 %v171
  %1226 = vmatpush.bf16.msra.mxu0 %v169
  %1227 = vmatmul.bf16.gmra.mxu0 %v1213
  %v1228 = vpop.f32.mrf.mxu0
  %v1229 = vadd.f32 %v58, %v1228
  %v1230 = vpop.f32.mrf.mxu0
  %v1231 = vadd.f32 %v58, %v1230
  %1232 = vdwg.mxu0
  %1233 = vmatpush.bf16.msra.mxu0 %v237
  %1234 = vmatpush.bf16.msra.mxu0 %v197
  %1235 = vmatpush.bf16.msra.mxu0 %v195
  %1236 = vmatpush.bf16.msra.mxu0 %v193
  %1237 = vmatpush.bf16.msra.mxu0 %v191
  %1238 = vmatpush.bf16.msra.mxu0 %v189
  %1239 = vmatpush.bf16.msra.mxu0 %v187
  %1240 = vmatpush.bf16.msra.mxu0 %v185
  %1241 = vmatmul.bf16.gmra.mxu0 %v1217
  %v1242 = vpop.f32.mrf.mxu0
  %v1243 = vadd.f32 %v1229, %v1242
  %v1244 = vpop.f32.mrf.mxu0
  %v1245 = vadd.f32 %v1231, %v1244
  %1246 = vdwg.mxu0
  %1247 = vmatpush.bf16.msra.mxu0 %v184
  %1248 = vmatpush.bf16.msra.mxu0 %v182
  %1249 = vmatpush.bf16.msra.mxu0 %v180
  %1250 = vmatpush.bf16.msra.mxu0 %v178
  %1251 = vmatpush.bf16.msra.mxu0 %v176
  %1252 = vmatpush.bf16.msra.mxu0 %v174
  %1253 = vmatpush.bf16.msra.mxu0 %v172
  %1254 = vmatpush.bf16.msra.mxu0 %v170
  %1255 = vmatmul.bf16.gmra.mxu0 %v1213
  %v1256 = vpop.f32.mrf.mxu0
  %v1257 = vadd.f32 %v59, %v1256
  %v1258 = vpop.f32.mrf.mxu0
  %v1259 = vadd.f32 %v59, %v1258
  %1260 = vdwg.mxu0
  %1261 = vmatpush.bf16.msra.mxu0 %v240
  %1262 = vmatpush.bf16.msra.mxu0 %v198
  %1263 = vmatpush.bf16.msra.mxu0 %v196
  %1264 = vmatpush.bf16.msra.mxu0 %v194
  %1265 = vmatpush.bf16.msra.mxu0 %v192
  %1266 = vmatpush.bf16.msra.mxu0 %v190
  %1267 = vmatpush.bf16.msra.mxu0 %v188
  %1268 = vmatpush.bf16.msra.mxu0 %v186
  %1269 = vmatmul.bf16.gmra.mxu0 %v1217
  %v1270 = vpop.f32.mrf.mxu0
  %v1271 = vadd.f32 %v1257, %v1270
  %v1272 = vpop.f32.mrf.mxu0
  %v1273 = vadd.f32 %v1259, %v1272
  %1274 = vdwg.mxu0
  %v1275 = vpack.c.bf16 %v1245, %v1243
  %v1276 = vpack.c.bf16 %v1273, %v1271
  %v1277 = vunpack.c.l.bf16 %v1275
  %v1278 = vunpack.c.l.bf16 %v1276
  %v1279 = vunpack.c.h.bf16 %v1275
  %v1280 = vunpack.c.h.bf16 %v1276
  %v1281 = vtanh.pop %v1277
  %v1282 = vtanh.pop %v1278
  %v1283 = vtanh.pop %v1279
  %v1284 = vtanh.pop %v1280
  %v1285 = vpack.c.bf16 %v1283, %v1281
  %v1286 = vpack.c.bf16 %v1284, %v1282
  %v1287 = vld [vmem:[%s3 + $0x320] sm:$0xf]
  %v1288 = vld [vmem:[%s3 + $0x328] sm:$0xf]
  %v1289 = vld [vmem:[%s3 + $0x330] sm:$0xf]
  %v1290 = vld [vmem:[%s3 + $0x338] sm:$0xf]
  %v1291 = vld [vmem:[%s3 + $0x340] sm:$0xf]
  %v1292 = vld [vmem:[%s3 + $0x348] sm:$0xf]
  %v1293 = vld [vmem:[%s3 + $0x350] sm:$0xf]
  %v1294 = vld [vmem:[%s3 + $0x358] sm:$0xf]
  %v1295 = vld [vmem:[%s3 + $0x360] sm:$0xf]
  %v1296 = vld [vmem:[%s3 + $0x368] sm:$0xf]
  %v1297 = vld [vmem:[%s3 + $0x370] sm:$0xf]
  %v1298 = vld [vmem:[%s3 + $0x378] sm:$0xf]
  %v1299 = vld [vmem:[%s3 + $0x380] sm:$0xf]
  %v1300 = vld [vmem:[%s3 + $0x388] sm:$0xf]
  %v1301 = vld [vmem:[%s3 + $0x390] sm:$0xf]
  %v1302 = vld [vmem:[%s3 + $0x398] sm:$0xf]
  %v1303 = vld [vmem:[%s3 + $0x3a0] sm:$0xf]
  %v1304 = vld [vmem:[%s3 + $0x3a8] sm:$0xf]
  %v1305 = vld [vmem:[%s3 + $0x3b0] sm:$0xf]
  %v1306 = vld [vmem:[%s3 + $0x3b8] sm:$0xf]
  %v1327 = vunpack.c.l.b16 %v1287
  %v1328 = vunpack.c.l.b16 %v1288
  %v1329 = vunpack.c.l.b16 %v1289
  %v1330 = vunpack.c.l.b16 %v1290
  %v1331 = vunpack.c.l.b16 %v1291
  %v1332 = vunpack.c.l.b16 %v1292
  %v1333 = vunpack.c.l.b16 %v1293
  %v1334 = vunpack.c.l.b16 %v1294
  %v1335 = vunpack.c.l.b16 %v1295
  %v1336 = vunpack.c.l.b16 %v1296
  %v1337 = vunpack.c.l.b16 %v1297
  %v1338 = vunpack.c.l.b16 %v1298
  %v1339 = vunpack.c.l.b16 %v1299
  %v1340 = vunpack.c.l.b16 %v1300
  %v1341 = vunpack.c.l.b16 %v1301
  %v1342 = vunpack.c.l.b16 %v1302
  %v1343 = vunpack.c.l.b16 %v1303
  %v1344 = vunpack.c.l.b16 %v1304
  %v1345 = vunpack.c.l.b16 %v1305
  %v1346 = vunpack.c.l.b16 %v1306
  %v1347 = vpack.c.b16 %v1328, %v1327
  %v1348 = vpack.c.b16 %v1330, %v1329
  %v1349 = vpack.c.b16 %v1332, %v1331
  %v1350 = vpack.c.b16 %v1334, %v1333
  %v1351 = vpack.c.b16 %v1336, %v1335
  %v1352 = vpack.c.b16 %v1338, %v1337
  %v1353 = vpack.c.b16 %v1340, %v1339
  %v1354 = vpack.c.b16 %v1342, %v1341
  %v1355 = vpack.c.b16 %v1344, %v1343
  %v1356 = vpack.c.b16 %v1346, %v1345
  %v1368 = vsel %vm493, %v1286, 0
  %1370 = vmatpush.bf16.msra.mxu0 %v1354
  %1371 = vmatpush.bf16.msra.mxu0 %v1353
  %1372 = vmatpush.bf16.msra.mxu0 %v1352
  %1373 = vmatpush.bf16.msra.mxu0 %v1351
  %1374 = vmatpush.bf16.msra.mxu0 %v1350
  %1375 = vmatpush.bf16.msra.mxu0 %v1349
  %1376 = vmatpush.bf16.msra.mxu0 %v1348
  %1377 = vmatpush.bf16.msra.mxu0 %v1347
  %1378 = vmatmul.bf16.gmra.mxu0 %v1285
  %v1379 = vpop.f32.mrf.mxu0
  %v1380 = vadd.f32 0.0, %v1379
  %v1381 = vpop.f32.mrf.mxu0
  %v1382 = vadd.f32 0.0, %v1381
  %1383 = vdwg.mxu0
  %1384 = vmatpush.bf16.msra.mxu0 0
  %1385 = vmatpush.bf16.msra.mxu0 0
  %1386 = vmatpush.bf16.msra.mxu0 0
  %1387 = vmatpush.bf16.msra.mxu0 0
  %1388 = vmatpush.bf16.msra.mxu0 0
  %1389 = vmatpush.bf16.msra.mxu0 0
  %1390 = vmatpush.bf16.msra.mxu0 %v1356
  %1391 = vmatpush.bf16.msra.mxu0 %v1355
  %1392 = vmatmul.bf16.gmra.mxu0 %v1368
  %v1393 = vpop.f32.mrf.mxu0
  %v1394 = vadd.f32 %v1380, %v1393
  %v1395 = vpop.f32.mrf.mxu0
  %v1396 = vadd.f32 %v1382, %v1395
  %1397 = vdwg.mxu0
  %v1398 = vadd.f32 %v1202, %v1394
  %v1399 = vadd.f32 %v1203, %v1396
  %s1400 = scalar_lea.vmem %s0, 96
  %v1401 = vld [vmem:[%s1400] sm:$0xff]
  %v1402 = vld [vmem:[%s1400 + $0x8] sm:$0xff]
  %v1405 = vunpack.c.l.b16 %v1401
  %v1406 = vunpack.c.h.b16 %v1401
  %v1407 = vunpack.c.l.b16 %v1402
  %v1408 = vunpack.c.h.b16 %v1402
  %v1409 = vpack.c.b16 %v1407, %v1405
  %v1410 = vpack.c.b16 %v1408, %v1406
  %v1413 = vsel %vm231, %v1410, 0
  %1415 = vmatpush.bf16.msra.mxu0 %v183
  %1416 = vmatpush.bf16.msra.mxu0 %v181
  %1417 = vmatpush.bf16.msra.mxu0 %v179
  %1418 = vmatpush.bf16.msra.mxu0 %v177
  %1419 = vmatpush.bf16.msra.mxu0 %v175
  %1420 = vmatpush.bf16.msra.mxu0 %v173
  %1421 = vmatpush.bf16.msra.mxu0 %v171
  %1422 = vmatpush.bf16.msra.mxu0 %v169
  %1423 = vmatmul.bf16.gmra.mxu0 %v1409
  %v1424 = vpop.f32.mrf.mxu0
  %v1425 = vadd.f32 %v58, %v1424
  %v1426 = vpop.f32.mrf.mxu0
  %v1427 = vadd.f32 %v58, %v1426
  %1428 = vdwg.mxu0
  %1429 = vmatpush.bf16.msra.mxu0 %v237
  %1430 = vmatpush.bf16.msra.mxu0 %v197
  %1431 = vmatpush.bf16.msra.mxu0 %v195
  %1432 = vmatpush.bf16.msra.mxu0 %v193
  %1433 = vmatpush.bf16.msra.mxu0 %v191
  %1434 = vmatpush.bf16.msra.mxu0 %v189
  %1435 = vmatpush.bf16.msra.mxu0 %v187
  %1436 = vmatpush.bf16.msra.mxu0 %v185
  %1437 = vmatmul.bf16.gmra.mxu0 %v1413
  %v1438 = vpop.f32.mrf.mxu0
  %v1439 = vadd.f32 %v1425, %v1438
  %v1440 = vpop.f32.mrf.mxu0
  %v1441 = vadd.f32 %v1427, %v1440
  %1442 = vdwg.mxu0
  %1443 = vmatpush.bf16.msra.mxu0 %v184
  %1444 = vmatpush.bf16.msra.mxu0 %v182
  %1445 = vmatpush.bf16.msra.mxu0 %v180
  %1446 = vmatpush.bf16.msra.mxu0 %v178
  %1447 = vmatpush.bf16.msra.mxu0 %v176
  %1448 = vmatpush.bf16.msra.mxu0 %v174
  %1449 = vmatpush.bf16.msra.mxu0 %v172
  %1450 = vmatpush.bf16.msra.mxu0 %v170
  %1451 = vmatmul.bf16.gmra.mxu0 %v1409
  %v1452 = vpop.f32.mrf.mxu0
  %v1453 = vadd.f32 %v59, %v1452
  %v1454 = vpop.f32.mrf.mxu0
  %v1455 = vadd.f32 %v59, %v1454
  %1456 = vdwg.mxu0
  %1457 = vmatpush.bf16.msra.mxu0 %v240
  %1458 = vmatpush.bf16.msra.mxu0 %v198
  %1459 = vmatpush.bf16.msra.mxu0 %v196
  %1460 = vmatpush.bf16.msra.mxu0 %v194
  %1461 = vmatpush.bf16.msra.mxu0 %v192
  %1462 = vmatpush.bf16.msra.mxu0 %v190
  %1463 = vmatpush.bf16.msra.mxu0 %v188
  %1464 = vmatpush.bf16.msra.mxu0 %v186
  %1465 = vmatmul.bf16.gmra.mxu0 %v1413
  %v1466 = vpop.f32.mrf.mxu0
  %v1467 = vadd.f32 %v1453, %v1466
  %v1468 = vpop.f32.mrf.mxu0
  %v1469 = vadd.f32 %v1455, %v1468
  %1470 = vdwg.mxu0
  %v1471 = vpack.c.bf16 %v1441, %v1439
  %v1472 = vpack.c.bf16 %v1469, %v1467
  %v1473 = vunpack.c.l.bf16 %v1471
  %v1474 = vunpack.c.l.bf16 %v1472
  %v1475 = vunpack.c.h.bf16 %v1471
  %v1476 = vunpack.c.h.bf16 %v1472
  %v1477 = vtanh.pop %v1473
  %v1478 = vtanh.pop %v1474
  %v1479 = vtanh.pop %v1475
  %v1480 = vtanh.pop %v1476
  %v1481 = vpack.c.bf16 %v1479, %v1477
  %v1482 = vpack.c.bf16 %v1480, %v1478
  %v1483 = vld [vmem:[%s3 + $0x3c0] sm:$0xf]
  %v1484 = vld [vmem:[%s3 + $0x3c8] sm:$0xf]
  %v1485 = vld [vmem:[%s3 + $0x3d0] sm:$0xf]
  %v1486 = vld [vmem:[%s3 + $0x3d8] sm:$0xf]
  %v1487 = vld [vmem:[%s3 + $0x3e0] sm:$0xf]
  %v1488 = vld [vmem:[%s3 + $0x3e8] sm:$0xf]
  %v1489 = vld [vmem:[%s3 + $0x3f0] sm:$0xf]
  %v1490 = vld [vmem:[%s3 + $0x3f8] sm:$0xf]
  %v1491 = vld [vmem:[%s3 + $0x400] sm:$0xf]
  %v1492 = vld [vmem:[%s3 + $0x408] sm:$0xf]
  %v1493 = vld [vmem:[%s3 + $0x410] sm:$0xf]
  %v1494 = vld [vmem:[%s3 + $0x418] sm:$0xf]
  %v1495 = vld [vmem:[%s3 + $0x420] sm:$0xf]
  %v1496 = vld [vmem:[%s3 + $0x428] sm:$0xf]
  %v1497 = vld [vmem:[%s3 + $0x430] sm:$0xf]
  %v1498 = vld [vmem:[%s3 + $0x438] sm:$0xf]
  %v1499 = vld [vmem:[%s3 + $0x440] sm:$0xf]
  %v1500 = vld [vmem:[%s3 + $0x448] sm:$0xf]
  %v1501 = vld [vmem:[%s3 + $0x450] sm:$0xf]
  %v1502 = vld [vmem:[%s3 + $0x458] sm:$0xf]
  %v1523 = vunpack.c.l.b16 %v1483
  %v1524 = vunpack.c.l.b16 %v1484
  %v1525 = vunpack.c.l.b16 %v1485
  %v1526 = vunpack.c.l.b16 %v1486
  %v1527 = vunpack.c.l.b16 %v1487
  %v1528 = vunpack.c.l.b16 %v1488
  %v1529 = vunpack.c.l.b16 %v1489
  %v1530 = vunpack.c.l.b16 %v1490
  %v1531 = vunpack.c.l.b16 %v1491
  %v1532 = vunpack.c.l.b16 %v1492
  %v1533 = vunpack.c.l.b16 %v1493
  %v1534 = vunpack.c.l.b16 %v1494
  %v1535 = vunpack.c.l.b16 %v1495
  %v1536 = vunpack.c.l.b16 %v1496
  %v1537 = vunpack.c.l.b16 %v1497
  %v1538 = vunpack.c.l.b16 %v1498
  %v1539 = vunpack.c.l.b16 %v1499
  %v1540 = vunpack.c.l.b16 %v1500
  %v1541 = vunpack.c.l.b16 %v1501
  %v1542 = vunpack.c.l.b16 %v1502
  %v1543 = vpack.c.b16 %v1524, %v1523
  %v1544 = vpack.c.b16 %v1526, %v1525
  %v1545 = vpack.c.b16 %v1528, %v1527
  %v1546 = vpack.c.b16 %v1530, %v1529
  %v1547 = vpack.c.b16 %v1532, %v1531
  %v1548 = vpack.c.b16 %v1534, %v1533
  %v1549 = vpack.c.b16 %v1536, %v1535
  %v1550 = vpack.c.b16 %v1538, %v1537
  %v1551 = vpack.c.b16 %v1540, %v1539
  %v1552 = vpack.c.b16 %v1542, %v1541
  %v1564 = vsel %vm493, %v1482, 0
  %1566 = vmatpush.bf16.msra.mxu0 %v1550
  %1567 = vmatpush.bf16.msra.mxu0 %v1549
  %1568 = vmatpush.bf16.msra.mxu0 %v1548
  %1569 = vmatpush.bf16.msra.mxu0 %v1547
  %1570 = vmatpush.bf16.msra.mxu0 %v1546
  %1571 = vmatpush.bf16.msra.mxu0 %v1545
  %1572 = vmatpush.bf16.msra.mxu0 %v1544
  %1573 = vmatpush.bf16.msra.mxu0 %v1543
  %1574 = vmatmul.bf16.gmra.mxu0 %v1481
  %v1575 = vpop.f32.mrf.mxu0
  %v1576 = vadd.f32 0.0, %v1575
  %v1577 = vpop.f32.mrf.mxu0
  %v1578 = vadd.f32 0.0, %v1577
  %1579 = vdwg.mxu0
  %1580 = vmatpush.bf16.msra.mxu0 0
  %1581 = vmatpush.bf16.msra.mxu0 0
  %1582 = vmatpush.bf16.msra.mxu0 0
  %1583 = vmatpush.bf16.msra.mxu0 0
  %1584 = vmatpush.bf16.msra.mxu0 0
  %1585 = vmatpush.bf16.msra.mxu0 0
  %1586 = vmatpush.bf16.msra.mxu0 %v1552
  %1587 = vmatpush.bf16.msra.mxu0 %v1551
  %1588 = vmatmul.bf16.gmra.mxu0 %v1564
  %v1589 = vpop.f32.mrf.mxu0
  %v1590 = vadd.f32 %v1576, %v1589
  %v1591 = vpop.f32.mrf.mxu0
  %v1592 = vadd.f32 %v1578, %v1591
  %1593 = vdwg.mxu0
  %v1594 = vadd.f32 %v1398, %v1590
  %v1595 = vadd.f32 %v1399, %v1592
  %s1596 = scalar_lea.vmem %s0, 112
  %v1597 = vld [vmem:[%s1596] sm:$0xff]
  %v1598 = vld [vmem:[%s1596 + $0x8] sm:$0xff]
  %v1601 = vunpack.c.l.b16 %v1597
  %v1602 = vunpack.c.h.b16 %v1597
  %v1603 = vunpack.c.l.b16 %v1598
  %v1604 = vunpack.c.h.b16 %v1598
  %v1605 = vpack.c.b16 %v1603, %v1601
  %v1606 = vpack.c.b16 %v1604, %v1602
  %v1609 = vsel %vm231, %v1606, 0
  %1611 = vmatpush.bf16.msra.mxu0 %v183
  %1612 = vmatpush.bf16.msra.mxu0 %v181
  %1613 = vmatpush.bf16.msra.mxu0 %v179
  %1614 = vmatpush.bf16.msra.mxu0 %v177
  %1615 = vmatpush.bf16.msra.mxu0 %v175
  %1616 = vmatpush.bf16.msra.mxu0 %v173
  %1617 = vmatpush.bf16.msra.mxu0 %v171
  %1618 = vmatpush.bf16.msra.mxu0 %v169
  %1619 = vmatmul.bf16.gmra.mxu0 %v1605
  %v1620 = vpop.f32.mrf.mxu0
  %v1621 = vadd.f32 %v58, %v1620
  %v1622 = vpop.f32.mrf.mxu0
  %v1623 = vadd.f32 %v58, %v1622
  %1624 = vdwg.mxu0
  %1625 = vmatpush.bf16.msra.mxu0 %v237
  %1626 = vmatpush.bf16.msra.mxu0 %v197
  %1627 = vmatpush.bf16.msra.mxu0 %v195
  %1628 = vmatpush.bf16.msra.mxu0 %v193
  %1629 = vmatpush.bf16.msra.mxu0 %v191
  %1630 = vmatpush.bf16.msra.mxu0 %v189
  %1631 = vmatpush.bf16.msra.mxu0 %v187
  %1632 = vmatpush.bf16.msra.mxu0 %v185
  %1633 = vmatmul.bf16.gmra.mxu0 %v1609
  %v1634 = vpop.f32.mrf.mxu0
  %v1635 = vadd.f32 %v1621, %v1634
  %v1636 = vpop.f32.mrf.mxu0
  %v1637 = vadd.f32 %v1623, %v1636
  %1638 = vdwg.mxu0
  %1639 = vmatpush.bf16.msra.mxu0 %v184
  %1640 = vmatpush.bf16.msra.mxu0 %v182
  %1641 = vmatpush.bf16.msra.mxu0 %v180
  %1642 = vmatpush.bf16.msra.mxu0 %v178
  %1643 = vmatpush.bf16.msra.mxu0 %v176
  %1644 = vmatpush.bf16.msra.mxu0 %v174
  %1645 = vmatpush.bf16.msra.mxu0 %v172
  %1646 = vmatpush.bf16.msra.mxu0 %v170
  %1647 = vmatmul.bf16.gmra.mxu0 %v1605
  %v1648 = vpop.f32.mrf.mxu0
  %v1649 = vadd.f32 %v59, %v1648
  %v1650 = vpop.f32.mrf.mxu0
  %v1651 = vadd.f32 %v59, %v1650
  %1652 = vdwg.mxu0
  %1653 = vmatpush.bf16.msra.mxu0 %v240
  %1654 = vmatpush.bf16.msra.mxu0 %v198
  %1655 = vmatpush.bf16.msra.mxu0 %v196
  %1656 = vmatpush.bf16.msra.mxu0 %v194
  %1657 = vmatpush.bf16.msra.mxu0 %v192
  %1658 = vmatpush.bf16.msra.mxu0 %v190
  %1659 = vmatpush.bf16.msra.mxu0 %v188
  %1660 = vmatpush.bf16.msra.mxu0 %v186
  %1661 = vmatmul.bf16.gmra.mxu0 %v1609
  %v1662 = vpop.f32.mrf.mxu0
  %v1663 = vadd.f32 %v1649, %v1662
  %v1664 = vpop.f32.mrf.mxu0
  %v1665 = vadd.f32 %v1651, %v1664
  %1666 = vdwg.mxu0
  %v1667 = vpack.c.bf16 %v1637, %v1635
  %v1668 = vpack.c.bf16 %v1665, %v1663
  %v1669 = vunpack.c.l.bf16 %v1667
  %v1670 = vunpack.c.l.bf16 %v1668
  %v1671 = vunpack.c.h.bf16 %v1667
  %v1672 = vunpack.c.h.bf16 %v1668
  %v1673 = vtanh.pop %v1669
  %v1674 = vtanh.pop %v1670
  %v1675 = vtanh.pop %v1671
  %v1676 = vtanh.pop %v1672
  %v1677 = vpack.c.bf16 %v1675, %v1673
  %v1678 = vpack.c.bf16 %v1676, %v1674
  %v1679 = vld [vmem:[%s3 + $0x460] sm:$0xf]
  %v1680 = vld [vmem:[%s3 + $0x468] sm:$0xf]
  %v1681 = vld [vmem:[%s3 + $0x470] sm:$0xf]
  %v1682 = vld [vmem:[%s3 + $0x478] sm:$0xf]
  %v1683 = vld [vmem:[%s3 + $0x480] sm:$0xf]
  %v1684 = vld [vmem:[%s3 + $0x488] sm:$0xf]
  %v1685 = vld [vmem:[%s3 + $0x490] sm:$0xf]
  %v1686 = vld [vmem:[%s3 + $0x498] sm:$0xf]
  %v1687 = vld [vmem:[%s3 + $0x4a0] sm:$0xf]
  %v1688 = vld [vmem:[%s3 + $0x4a8] sm:$0xf]
  %v1689 = vld [vmem:[%s3 + $0x4b0] sm:$0xf]
  %v1690 = vld [vmem:[%s3 + $0x4b8] sm:$0xf]
  %v1691 = vld [vmem:[%s3 + $0x4c0] sm:$0xf]
  %v1692 = vld [vmem:[%s3 + $0x4c8] sm:$0xf]
  %v1693 = vld [vmem:[%s3 + $0x4d0] sm:$0xf]
  %v1694 = vld [vmem:[%s3 + $0x4d8] sm:$0xf]
  %v1695 = vld [vmem:[%s3 + $0x4e0] sm:$0xf]
  %v1696 = vld [vmem:[%s3 + $0x4e8] sm:$0xf]
  %v1697 = vld [vmem:[%s3 + $0x4f0] sm:$0xf]
  %v1698 = vld [vmem:[%s3 + $0x4f8] sm:$0xf]
  %v1719 = vunpack.c.l.b16 %v1679
  %v1720 = vunpack.c.l.b16 %v1680
  %v1721 = vunpack.c.l.b16 %v1681
  %v1722 = vunpack.c.l.b16 %v1682
  %v1723 = vunpack.c.l.b16 %v1683
  %v1724 = vunpack.c.l.b16 %v1684
  %v1725 = vunpack.c.l.b16 %v1685
  %v1726 = vunpack.c.l.b16 %v1686
  %v1727 = vunpack.c.l.b16 %v1687
  %v1728 = vunpack.c.l.b16 %v1688
  %v1729 = vunpack.c.l.b16 %v1689
  %v1730 = vunpack.c.l.b16 %v1690
  %v1731 = vunpack.c.l.b16 %v1691
  %v1732 = vunpack.c.l.b16 %v1692
  %v1733 = vunpack.c.l.b16 %v1693
  %v1734 = vunpack.c.l.b16 %v1694
  %v1735 = vunpack.c.l.b16 %v1695
  %v1736 = vunpack.c.l.b16 %v1696
  %v1737 = vunpack.c.l.b16 %v1697
  %v1738 = vunpack.c.l.b16 %v1698
  %v1739 = vpack.c.b16 %v1720, %v1719
  %v1740 = vpack.c.b16 %v1722, %v1721
  %v1741 = vpack.c.b16 %v1724, %v1723
  %v1742 = vpack.c.b16 %v1726, %v1725
  %v1743 = vpack.c.b16 %v1728, %v1727
  %v1744 = vpack.c.b16 %v1730, %v1729
  %v1745 = vpack.c.b16 %v1732, %v1731
  %v1746 = vpack.c.b16 %v1734, %v1733
  %v1747 = vpack.c.b16 %v1736, %v1735
  %v1748 = vpack.c.b16 %v1738, %v1737
  %v1760 = vsel %vm493, %v1678, 0
  %1762 = vmatpush.bf16.msra.mxu0 %v1746
  %1763 = vmatpush.bf16.msra.mxu0 %v1745
  %1764 = vmatpush.bf16.msra.mxu0 %v1744
  %1765 = vmatpush.bf16.msra.mxu0 %v1743
  %1766 = vmatpush.bf16.msra.mxu0 %v1742
  %1767 = vmatpush.bf16.msra.mxu0 %v1741
  %1768 = vmatpush.bf16.msra.mxu0 %v1740
  %1769 = vmatpush.bf16.msra.mxu0 %v1739
  %1770 = vmatmul.bf16.gmra.mxu0 %v1677
  %v1771 = vpop.f32.mrf.mxu0
  %v1772 = vadd.f32 0.0, %v1771
  %v1773 = vpop.f32.mrf.mxu0
  %v1774 = vadd.f32 0.0, %v1773
  %1775 = vdwg.mxu0
  %1776 = vmatpush.bf16.msra.mxu0 0
  %1777 = vmatpush.bf16.msra.mxu0 0
  %1778 = vmatpush.bf16.msra.mxu0 0
  %1779 = vmatpush.bf16.msra.mxu0 0
  %1780 = vmatpush.bf16.msra.mxu0 0
  %1781 = vmatpush.bf16.msra.mxu0 0
  %1782 = vmatpush.bf16.msra.mxu0 %v1748
  %1783 = vmatpush.bf16.msra.mxu0 %v1747
  %1784 = vmatmul.bf16.gmra.mxu0 %v1760
  %v1785 = vpop.f32.mrf.mxu0
  %v1786 = vadd.f32 %v1772, %v1785
  %v1787 = vpop.f32.mrf.mxu0
  %v1788 = vadd.f32 %v1774, %v1787
  %1789 = vdwg.mxu0
  %v1790 = vadd.f32 %v1594, %v1786
  %v1791 = vadd.f32 %v1595, %v1788
  %s1792 = scalar_lea.vmem %s0, 128
  %v1793 = vld [vmem:[%s1792] sm:$0xff]
  %v1794 = vld [vmem:[%s1792 + $0x8] sm:$0xff]
  %v1797 = vunpack.c.l.b16 %v1793
  %v1798 = vunpack.c.h.b16 %v1793
  %v1799 = vunpack.c.l.b16 %v1794
  %v1800 = vunpack.c.h.b16 %v1794
  %v1801 = vpack.c.b16 %v1799, %v1797
  %v1802 = vpack.c.b16 %v1800, %v1798
  %v1805 = vsel %vm231, %v1802, 0
  %1807 = vmatpush.bf16.msra.mxu0 %v183
  %1808 = vmatpush.bf16.msra.mxu0 %v181
  %1809 = vmatpush.bf16.msra.mxu0 %v179
  %1810 = vmatpush.bf16.msra.mxu0 %v177
  %1811 = vmatpush.bf16.msra.mxu0 %v175
  %1812 = vmatpush.bf16.msra.mxu0 %v173
  %1813 = vmatpush.bf16.msra.mxu0 %v171
  %1814 = vmatpush.bf16.msra.mxu0 %v169
  %1815 = vmatmul.bf16.gmra.mxu0 %v1801
  %v1816 = vpop.f32.mrf.mxu0
  %v1817 = vadd.f32 %v58, %v1816
  %v1818 = vpop.f32.mrf.mxu0
  %v1819 = vadd.f32 %v58, %v1818
  %1820 = vdwg.mxu0
  %1821 = vmatpush.bf16.msra.mxu0 %v237
  %1822 = vmatpush.bf16.msra.mxu0 %v197
  %1823 = vmatpush.bf16.msra.mxu0 %v195
  %1824 = vmatpush.bf16.msra.mxu0 %v193
  %1825 = vmatpush.bf16.msra.mxu0 %v191
  %1826 = vmatpush.bf16.msra.mxu0 %v189
  %1827 = vmatpush.bf16.msra.mxu0 %v187
  %1828 = vmatpush.bf16.msra.mxu0 %v185
  %1829 = vmatmul.bf16.gmra.mxu0 %v1805
  %v1830 = vpop.f32.mrf.mxu0
  %v1831 = vadd.f32 %v1817, %v1830
  %v1832 = vpop.f32.mrf.mxu0
  %v1833 = vadd.f32 %v1819, %v1832
  %1834 = vdwg.mxu0
  %1835 = vmatpush.bf16.msra.mxu0 %v184
  %1836 = vmatpush.bf16.msra.mxu0 %v182
  %1837 = vmatpush.bf16.msra.mxu0 %v180
  %1838 = vmatpush.bf16.msra.mxu0 %v178
  %1839 = vmatpush.bf16.msra.mxu0 %v176
  %1840 = vmatpush.bf16.msra.mxu0 %v174
  %1841 = vmatpush.bf16.msra.mxu0 %v172
  %1842 = vmatpush.bf16.msra.mxu0 %v170
  %1843 = vmatmul.bf16.gmra.mxu0 %v1801
  %v1844 = vpop.f32.mrf.mxu0
  %v1845 = vadd.f32 %v59, %v1844
  %v1846 = vpop.f32.mrf.mxu0
  %v1847 = vadd.f32 %v59, %v1846
  %1848 = vdwg.mxu0
  %1849 = vmatpush.bf16.msra.mxu0 %v240
  %1850 = vmatpush.bf16.msra.mxu0 %v198
  %1851 = vmatpush.bf16.msra.mxu0 %v196
  %1852 = vmatpush.bf16.msra.mxu0 %v194
  %1853 = vmatpush.bf16.msra.mxu0 %v192
  %1854 = vmatpush.bf16.msra.mxu0 %v190
  %1855 = vmatpush.bf16.msra.mxu0 %v188
  %1856 = vmatpush.bf16.msra.mxu0 %v186
  %1857 = vmatmul.bf16.gmra.mxu0 %v1805
  %v1858 = vpop.f32.mrf.mxu0
  %v1859 = vadd.f32 %v1845, %v1858
  %v1860 = vpop.f32.mrf.mxu0
  %v1861 = vadd.f32 %v1847, %v1860
  %1862 = vdwg.mxu0
  %v1863 = vpack.c.bf16 %v1833, %v1831
  %v1864 = vpack.c.bf16 %v1861, %v1859
  %v1865 = vunpack.c.l.bf16 %v1863
  %v1866 = vunpack.c.l.bf16 %v1864
  %v1867 = vunpack.c.h.bf16 %v1863
  %v1868 = vunpack.c.h.bf16 %v1864
  %v1869 = vtanh.pop %v1865
  %v1870 = vtanh.pop %v1866
  %v1871 = vtanh.pop %v1867
  %v1872 = vtanh.pop %v1868
  %v1873 = vpack.c.bf16 %v1871, %v1869
  %v1874 = vpack.c.bf16 %v1872, %v1870
  %v1875 = vld [vmem:[%s3 + $0x500] sm:$0xf]
  %v1876 = vld [vmem:[%s3 + $0x508] sm:$0xf]
  %v1877 = vld [vmem:[%s3 + $0x510] sm:$0xf]
  %v1878 = vld [vmem:[%s3 + $0x518] sm:$0xf]
  %v1879 = vld [vmem:[%s3 + $0x520] sm:$0xf]
  %v1880 = vld [vmem:[%s3 + $0x528] sm:$0xf]
  %v1881 = vld [vmem:[%s3 + $0x530] sm:$0xf]
  %v1882 = vld [vmem:[%s3 + $0x538] sm:$0xf]
  %v1883 = vld [vmem:[%s3 + $0x540] sm:$0xf]
  %v1884 = vld [vmem:[%s3 + $0x548] sm:$0xf]
  %v1885 = vld [vmem:[%s3 + $0x550] sm:$0xf]
  %v1886 = vld [vmem:[%s3 + $0x558] sm:$0xf]
  %v1887 = vld [vmem:[%s3 + $0x560] sm:$0xf]
  %v1888 = vld [vmem:[%s3 + $0x568] sm:$0xf]
  %v1889 = vld [vmem:[%s3 + $0x570] sm:$0xf]
  %v1890 = vld [vmem:[%s3 + $0x578] sm:$0xf]
  %v1891 = vld [vmem:[%s3 + $0x580] sm:$0xf]
  %v1892 = vld [vmem:[%s3 + $0x588] sm:$0xf]
  %v1893 = vld [vmem:[%s3 + $0x590] sm:$0xf]
  %v1894 = vld [vmem:[%s3 + $0x598] sm:$0xf]
  %v1915 = vunpack.c.l.b16 %v1875
  %v1916 = vunpack.c.l.b16 %v1876
  %v1917 = vunpack.c.l.b16 %v1877
  %v1918 = vunpack.c.l.b16 %v1878
  %v1919 = vunpack.c.l.b16 %v1879
  %v1920 = vunpack.c.l.b16 %v1880
  %v1921 = vunpack.c.l.b16 %v1881
  %v1922 = vunpack.c.l.b16 %v1882
  %v1923 = vunpack.c.l.b16 %v1883
  %v1924 = vunpack.c.l.b16 %v1884
  %v1925 = vunpack.c.l.b16 %v1885
  %v1926 = vunpack.c.l.b16 %v1886
  %v1927 = vunpack.c.l.b16 %v1887
  %v1928 = vunpack.c.l.b16 %v1888
  %v1929 = vunpack.c.l.b16 %v1889
  %v1930 = vunpack.c.l.b16 %v1890
  %v1931 = vunpack.c.l.b16 %v1891
  %v1932 = vunpack.c.l.b16 %v1892
  %v1933 = vunpack.c.l.b16 %v1893
  %v1934 = vunpack.c.l.b16 %v1894
  %v1935 = vpack.c.b16 %v1916, %v1915
  %v1936 = vpack.c.b16 %v1918, %v1917
  %v1937 = vpack.c.b16 %v1920, %v1919
  %v1938 = vpack.c.b16 %v1922, %v1921
  %v1939 = vpack.c.b16 %v1924, %v1923
  %v1940 = vpack.c.b16 %v1926, %v1925
  %v1941 = vpack.c.b16 %v1928, %v1927
  %v1942 = vpack.c.b16 %v1930, %v1929
  %v1943 = vpack.c.b16 %v1932, %v1931
  %v1944 = vpack.c.b16 %v1934, %v1933
  %v1956 = vsel %vm493, %v1874, 0
  %1958 = vmatpush.bf16.msra.mxu0 %v1942
  %1959 = vmatpush.bf16.msra.mxu0 %v1941
  %1960 = vmatpush.bf16.msra.mxu0 %v1940
  %1961 = vmatpush.bf16.msra.mxu0 %v1939
  %1962 = vmatpush.bf16.msra.mxu0 %v1938
  %1963 = vmatpush.bf16.msra.mxu0 %v1937
  %1964 = vmatpush.bf16.msra.mxu0 %v1936
  %1965 = vmatpush.bf16.msra.mxu0 %v1935
  %1966 = vmatmul.bf16.gmra.mxu0 %v1873
  %v1967 = vpop.f32.mrf.mxu0
  %v1968 = vadd.f32 0.0, %v1967
  %v1969 = vpop.f32.mrf.mxu0
  %v1970 = vadd.f32 0.0, %v1969
  %1971 = vdwg.mxu0
  %1972 = vmatpush.bf16.msra.mxu0 0
  %1973 = vmatpush.bf16.msra.mxu0 0
  %1974 = vmatpush.bf16.msra.mxu0 0
  %1975 = vmatpush.bf16.msra.mxu0 0
  %1976 = vmatpush.bf16.msra.mxu0 0
  %1977 = vmatpush.bf16.msra.mxu0 0
  %1978 = vmatpush.bf16.msra.mxu0 %v1944
  %1979 = vmatpush.bf16.msra.mxu0 %v1943
  %1980 = vmatmul.bf16.gmra.mxu0 %v1956
  %v1981 = vpop.f32.mrf.mxu0
  %v1982 = vadd.f32 %v1968, %v1981
  %v1983 = vpop.f32.mrf.mxu0
  %v1984 = vadd.f32 %v1970, %v1983
  %1985 = vdwg.mxu0
  %v1986 = vadd.f32 %v1790, %v1982
  %v1987 = vadd.f32 %v1791, %v1984
  %s1988 = scalar_lea.vmem %s0, 144
  %v1989 = vld [vmem:[%s1988] sm:$0xff]
  %v1990 = vld [vmem:[%s1988 + $0x8] sm:$0xff]
  %v1993 = vunpack.c.l.b16 %v1989
  %v1994 = vunpack.c.h.b16 %v1989
  %v1995 = vunpack.c.l.b16 %v1990
  %v1996 = vunpack.c.h.b16 %v1990
  %v1997 = vpack.c.b16 %v1995, %v1993
  %v1998 = vpack.c.b16 %v1996, %v1994
  %v2001 = vsel %vm231, %v1998, 0
  %2003 = vmatpush.bf16.msra.mxu0 %v183
  %2004 = vmatpush.bf16.msra.mxu0 %v181
  %2005 = vmatpush.bf16.msra.mxu0 %v179
  %2006 = vmatpush.bf16.msra.mxu0 %v177
  %2007 = vmatpush.bf16.msra.mxu0 %v175
  %2008 = vmatpush.bf16.msra.mxu0 %v173
  %2009 = vmatpush.bf16.msra.mxu0 %v171
  %2010 = vmatpush.bf16.msra.mxu0 %v169
  %2011 = vmatmul.bf16.gmra.mxu0 %v1997
  %v2012 = vpop.f32.mrf.mxu0
  %v2013 = vadd.f32 %v58, %v2012
  %v2014 = vpop.f32.mrf.mxu0
  %v2015 = vadd.f32 %v58, %v2014
  %2016 = vdwg.mxu0
  %2017 = vmatpush.bf16.msra.mxu0 %v237
  %2018 = vmatpush.bf16.msra.mxu0 %v197
  %2019 = vmatpush.bf16.msra.mxu0 %v195
  %2020 = vmatpush.bf16.msra.mxu0 %v193
  %2021 = vmatpush.bf16.msra.mxu0 %v191
  %2022 = vmatpush.bf16.msra.mxu0 %v189
  %2023 = vmatpush.bf16.msra.mxu0 %v187
  %2024 = vmatpush.bf16.msra.mxu0 %v185
  %2025 = vmatmul.bf16.gmra.mxu0 %v2001
  %v2026 = vpop.f32.mrf.mxu0
  %v2027 = vadd.f32 %v2013, %v2026
  %v2028 = vpop.f32.mrf.mxu0
  %v2029 = vadd.f32 %v2015, %v2028
  %2030 = vdwg.mxu0
  %2031 = vmatpush.bf16.msra.mxu0 %v184
  %2032 = vmatpush.bf16.msra.mxu0 %v182
  %2033 = vmatpush.bf16.msra.mxu0 %v180
  %2034 = vmatpush.bf16.msra.mxu0 %v178
  %2035 = vmatpush.bf16.msra.mxu0 %v176
  %2036 = vmatpush.bf16.msra.mxu0 %v174
  %2037 = vmatpush.bf16.msra.mxu0 %v172
  %2038 = vmatpush.bf16.msra.mxu0 %v170
  %2039 = vmatmul.bf16.gmra.mxu0 %v1997
  %v2040 = vpop.f32.mrf.mxu0
  %v2041 = vadd.f32 %v59, %v2040
  %v2042 = vpop.f32.mrf.mxu0
  %v2043 = vadd.f32 %v59, %v2042
  %2044 = vdwg.mxu0
  %2045 = vmatpush.bf16.msra.mxu0 %v240
  %2046 = vmatpush.bf16.msra.mxu0 %v198
  %2047 = vmatpush.bf16.msra.mxu0 %v196
  %2048 = vmatpush.bf16.msra.mxu0 %v194
  %2049 = vmatpush.bf16.msra.mxu0 %v192
  %2050 = vmatpush.bf16.msra.mxu0 %v190
  %2051 = vmatpush.bf16.msra.mxu0 %v188
  %2052 = vmatpush.bf16.msra.mxu0 %v186
  %2053 = vmatmul.bf16.gmra.mxu0 %v2001
  %v2054 = vpop.f32.mrf.mxu0
  %v2055 = vadd.f32 %v2041, %v2054
  %v2056 = vpop.f32.mrf.mxu0
  %v2057 = vadd.f32 %v2043, %v2056
  %2058 = vdwg.mxu0
  %v2059 = vpack.c.bf16 %v2029, %v2027
  %v2060 = vpack.c.bf16 %v2057, %v2055
  %v2061 = vunpack.c.l.bf16 %v2059
  %v2062 = vunpack.c.l.bf16 %v2060
  %v2063 = vunpack.c.h.bf16 %v2059
  %v2064 = vunpack.c.h.bf16 %v2060
  %v2065 = vtanh.pop %v2061
  %v2066 = vtanh.pop %v2062
  %v2067 = vtanh.pop %v2063
  %v2068 = vtanh.pop %v2064
  %v2069 = vpack.c.bf16 %v2067, %v2065
  %v2070 = vpack.c.bf16 %v2068, %v2066
  %v2071 = vld [vmem:[%s3 + $0x5a0] sm:$0xf]
  %v2072 = vld [vmem:[%s3 + $0x5a8] sm:$0xf]
  %v2073 = vld [vmem:[%s3 + $0x5b0] sm:$0xf]
  %v2074 = vld [vmem:[%s3 + $0x5b8] sm:$0xf]
  %v2075 = vld [vmem:[%s3 + $0x5c0] sm:$0xf]
  %v2076 = vld [vmem:[%s3 + $0x5c8] sm:$0xf]
  %v2077 = vld [vmem:[%s3 + $0x5d0] sm:$0xf]
  %v2078 = vld [vmem:[%s3 + $0x5d8] sm:$0xf]
  %v2079 = vld [vmem:[%s3 + $0x5e0] sm:$0xf]
  %v2080 = vld [vmem:[%s3 + $0x5e8] sm:$0xf]
  %v2081 = vld [vmem:[%s3 + $0x5f0] sm:$0xf]
  %v2082 = vld [vmem:[%s3 + $0x5f8] sm:$0xf]
  %v2083 = vld [vmem:[%s3 + $0x600] sm:$0xf]
  %v2084 = vld [vmem:[%s3 + $0x608] sm:$0xf]
  %v2085 = vld [vmem:[%s3 + $0x610] sm:$0xf]
  %v2086 = vld [vmem:[%s3 + $0x618] sm:$0xf]
  %v2087 = vld [vmem:[%s3 + $0x620] sm:$0xf]
  %v2088 = vld [vmem:[%s3 + $0x628] sm:$0xf]
  %v2089 = vld [vmem:[%s3 + $0x630] sm:$0xf]
  %v2090 = vld [vmem:[%s3 + $0x638] sm:$0xf]
  %v2111 = vunpack.c.l.b16 %v2071
  %v2112 = vunpack.c.l.b16 %v2072
  %v2113 = vunpack.c.l.b16 %v2073
  %v2114 = vunpack.c.l.b16 %v2074
  %v2115 = vunpack.c.l.b16 %v2075
  %v2116 = vunpack.c.l.b16 %v2076
  %v2117 = vunpack.c.l.b16 %v2077
  %v2118 = vunpack.c.l.b16 %v2078
  %v2119 = vunpack.c.l.b16 %v2079
  %v2120 = vunpack.c.l.b16 %v2080
  %v2121 = vunpack.c.l.b16 %v2081
  %v2122 = vunpack.c.l.b16 %v2082
  %v2123 = vunpack.c.l.b16 %v2083
  %v2124 = vunpack.c.l.b16 %v2084
  %v2125 = vunpack.c.l.b16 %v2085
  %v2126 = vunpack.c.l.b16 %v2086
  %v2127 = vunpack.c.l.b16 %v2087
  %v2128 = vunpack.c.l.b16 %v2088
  %v2129 = vunpack.c.l.b16 %v2089
  %v2130 = vunpack.c.l.b16 %v2090
  %v2131 = vpack.c.b16 %v2112, %v2111
  %v2132 = vpack.c.b16 %v2114, %v2113
  %v2133 = vpack.c.b16 %v2116, %v2115
  %v2134 = vpack.c.b16 %v2118, %v2117
  %v2135 = vpack.c.b16 %v2120, %v2119
  %v2136 = vpack.c.b16 %v2122, %v2121
  %v2137 = vpack.c.b16 %v2124, %v2123
  %v2138 = vpack.c.b16 %v2126, %v2125
  %v2139 = vpack.c.b16 %v2128, %v2127
  %v2140 = vpack.c.b16 %v2130, %v2129
  %v2152 = vsel %vm493, %v2070, 0
  %2154 = vmatpush.bf16.msra.mxu0 %v2138
  %2155 = vmatpush.bf16.msra.mxu0 %v2137
  %2156 = vmatpush.bf16.msra.mxu0 %v2136
  %2157 = vmatpush.bf16.msra.mxu0 %v2135
  %2158 = vmatpush.bf16.msra.mxu0 %v2134
  %2159 = vmatpush.bf16.msra.mxu0 %v2133
  %2160 = vmatpush.bf16.msra.mxu0 %v2132
  %2161 = vmatpush.bf16.msra.mxu0 %v2131
  %2162 = vmatmul.bf16.gmra.mxu0 %v2069
  %v2163 = vpop.f32.mrf.mxu0
  %v2164 = vadd.f32 0.0, %v2163
  %v2165 = vpop.f32.mrf.mxu0
  %v2166 = vadd.f32 0.0, %v2165
  %2167 = vdwg.mxu0
  %2168 = vmatpush.bf16.msra.mxu0 0
  %2169 = vmatpush.bf16.msra.mxu0 0
  %2170 = vmatpush.bf16.msra.mxu0 0
  %2171 = vmatpush.bf16.msra.mxu0 0
  %2172 = vmatpush.bf16.msra.mxu0 0
  %2173 = vmatpush.bf16.msra.mxu0 0
  %2174 = vmatpush.bf16.msra.mxu0 %v2140
  %2175 = vmatpush.bf16.msra.mxu0 %v2139
  %2176 = vmatmul.bf16.gmra.mxu0 %v2152
  %v2177 = vpop.f32.mrf.mxu0
  %v2178 = vadd.f32 %v2164, %v2177
  %v2179 = vpop.f32.mrf.mxu0
  %v2180 = vadd.f32 %v2166, %v2179
  %2181 = vdwg.mxu0
  %v2182 = vadd.f32 %v1986, %v2178
  %v2183 = vadd.f32 %v1987, %v2180
  %v2184 = vld [vmem:[%s5 + $0x20] ss:$0 sm:$0xff]
  %v2185 = vadd.f32 %v2182, %v2184
  %v2186 = vadd.f32 %v2183, %v2184
  %v2187 = vpack.c.bf16 %v2186, %v2185
  %v2188 = vunpack.c.l.bf16 %v2187
  %v2189 = vunpack.c.h.bf16 %v2187
  %v2190 = vtanh.pop %v2188
  %v2191 = vtanh.pop %v2189
  %v2192 = vpack.c.bf16 %v2191, %v2190
  %v2193 = vld [vmem:[%s4] sm:$0xf]
  %v2194 = vld [vmem:[%s4 + $0x4] sm:$0xf]
  %v2195 = vld [vmem:[%s4 + $0x8] sm:$0xf]
  %v2196 = vld [vmem:[%s4 + $0xc] sm:$0xf]
  %v2197 = vld [vmem:[%s4 + $0x10] sm:$0xf]
  %v2198 = vld [vmem:[%s4 + $0x14] sm:$0xf]
  %v2199 = vld [vmem:[%s4 + $0x18] sm:$0xf]
  %v2200 = vld [vmem:[%s4 + $0x1c] sm:$0xf]
  %v2201 = vld [vmem:[%s4 + $0x20] sm:$0xf]
  %v2202 = vld [vmem:[%s4 + $0x24] sm:$0xf]
  %v2203 = vld [vmem:[%s4 + $0x28] sm:$0xf]
  %v2204 = vld [vmem:[%s4 + $0x2c] sm:$0xf]
  %v2205 = vld [vmem:[%s4 + $0x30] sm:$0xf]
  %v2206 = vld [vmem:[%s4 + $0x34] sm:$0xf]
  %v2207 = vld [vmem:[%s4 + $0x38] sm:$0xf]
  %v2208 = vld [vmem:[%s4 + $0x3c] sm:$0xf]
  %v2209 = vld [vmem:[%s5 + $0x40] ss:$0 sm:$0xff]
  %v2226 = vunpack.c.l.b16 %v2193
  %v2227 = vunpack.c.l.b16 %v2194
  %v2228 = vunpack.c.l.b16 %v2195
  %v2229 = vunpack.c.l.b16 %v2196
  %v2230 = vunpack.c.l.b16 %v2197
  %v2231 = vunpack.c.l.b16 %v2198
  %v2232 = vunpack.c.l.b16 %v2199
  %v2233 = vunpack.c.l.b16 %v2200
  %v2234 = vunpack.c.l.b16 %v2201
  %v2235 = vunpack.c.l.b16 %v2202
  %v2236 = vunpack.c.l.b16 %v2203
  %v2237 = vunpack.c.l.b16 %v2204
  %v2238 = vunpack.c.l.b16 %v2205
  %v2239 = vunpack.c.l.b16 %v2206
  %v2240 = vunpack.c.l.b16 %v2207
  %v2241 = vunpack.c.l.b16 %v2208
  %v2242 = vpack.c.b16 %v2227, %v2226
  %v2243 = vpack.c.b16 %v2229, %v2228
  %v2244 = vpack.c.b16 %v2231, %v2230
  %v2245 = vpack.c.b16 %v2233, %v2232
  %v2246 = vpack.c.b16 %v2235, %v2234
  %v2247 = vpack.c.b16 %v2237, %v2236
  %v2248 = vpack.c.b16 %v2239, %v2238
  %v2249 = vpack.c.b16 %v2241, %v2240
  %2258 = vmatpush.bf16.msra.mxu0 %v2249
  %2259 = vmatpush.bf16.msra.mxu0 %v2248
  %2260 = vmatpush.bf16.msra.mxu0 %v2247
  %2261 = vmatpush.bf16.msra.mxu0 %v2246
  %2262 = vmatpush.bf16.msra.mxu0 %v2245
  %2263 = vmatpush.bf16.msra.mxu0 %v2244
  %2264 = vmatpush.bf16.msra.mxu0 %v2243
  %2265 = vmatpush.bf16.msra.mxu0 %v2242
  %2266 = vmatmul.bf16.gmra.mxu0 %v2192
  %v2267 = vpop.f32.mrf.mxu0
  %v2268 = vadd.f32 %v2209, %v2267
  %v2269 = vpop.f32.mrf.mxu0
  %v2270 = vadd.f32 %v2209, %v2269
  %2271 = vdwg.mxu0
  %v2272 = vmax.f32 %v2268, 0.0
  %v2273 = vmax.f32 %v2270, 0.0
  %v2274 = vpack.c.bf16 %v2273, %v2272
  %v2275 = vld [vmem:[%s4 + $0x80] sm:$0xf]
  %v2276 = vld [vmem:[%s4 + $0x84] sm:$0xf]
  %v2277 = vld [vmem:[%s4 + $0x88] sm:$0xf]
  %v2278 = vld [vmem:[%s4 + $0x8c] sm:$0xf]
  %v2279 = vld [vmem:[%s4 + $0x90] sm:$0xf]
  %v2280 = vld [vmem:[%s4 + $0x94] sm:$0xf]
  %v2281 = vld [vmem:[%s4 + $0x98] sm:$0xf]
  %v2282 = vld [vmem:[%s4 + $0x9c] sm:$0xf]
  %v2283 = vld [vmem:[%s4 + $0xa0] sm:$0xf]
  %v2284 = vld [vmem:[%s4 + $0xa4] sm:$0xf]
  %v2285 = vld [vmem:[%s4 + $0xa8] sm:$0xf]
  %v2286 = vld [vmem:[%s4 + $0xac] sm:$0xf]
  %v2287 = vld [vmem:[%s4 + $0xb0] sm:$0xf]
  %v2288 = vld [vmem:[%s4 + $0xb4] sm:$0xf]
  %v2289 = vld [vmem:[%s4 + $0xb8] sm:$0xf]
  %v2290 = vld [vmem:[%s4 + $0xbc] sm:$0xf]
  %v2291 = vld [vmem:[%s5 + $0x60] ss:$0 sm:$0xff]
  %v2308 = vunpack.c.l.b16 %v2275
  %v2309 = vunpack.c.l.b16 %v2276
  %v2310 = vunpack.c.l.b16 %v2277
  %v2311 = vunpack.c.l.b16 %v2278
  %v2312 = vunpack.c.l.b16 %v2279
  %v2313 = vunpack.c.l.b16 %v2280
  %v2314 = vunpack.c.l.b16 %v2281
  %v2315 = vunpack.c.l.b16 %v2282
  %v2316 = vunpack.c.l.b16 %v2283
  %v2317 = vunpack.c.l.b16 %v2284
  %v2318 = vunpack.c.l.b16 %v2285
  %v2319 = vunpack.c.l.b16 %v2286
  %v2320 = vunpack.c.l.b16 %v2287
  %v2321 = vunpack.c.l.b16 %v2288
  %v2322 = vunpack.c.l.b16 %v2289
  %v2323 = vunpack.c.l.b16 %v2290
  %v2324 = vpack.c.b16 %v2309, %v2308
  %v2325 = vpack.c.b16 %v2311, %v2310
  %v2326 = vpack.c.b16 %v2313, %v2312
  %v2327 = vpack.c.b16 %v2315, %v2314
  %v2328 = vpack.c.b16 %v2317, %v2316
  %v2329 = vpack.c.b16 %v2319, %v2318
  %v2330 = vpack.c.b16 %v2321, %v2320
  %v2331 = vpack.c.b16 %v2323, %v2322
  %2340 = vmatpush.bf16.msra.mxu0 %v2331
  %2341 = vmatpush.bf16.msra.mxu0 %v2330
  %2342 = vmatpush.bf16.msra.mxu0 %v2329
  %2343 = vmatpush.bf16.msra.mxu0 %v2328
  %2344 = vmatpush.bf16.msra.mxu0 %v2327
  %2345 = vmatpush.bf16.msra.mxu0 %v2326
  %2346 = vmatpush.bf16.msra.mxu0 %v2325
  %2347 = vmatpush.bf16.msra.mxu0 %v2324
  %2348 = vmatmul.bf16.gmra.mxu0 %v2274
  %v2349 = vpop.f32.mrf.mxu0
  %v2350 = vadd.f32 %v2291, %v2349
  %v2351 = vpop.f32.mrf.mxu0
  %v2352 = vadd.f32 %v2291, %v2351
  %2353 = vdwg.mxu0
  %2354 = vmax.xlane.f32.xlu0 %v2350
  %v2355 = vpop.xlane.xlu0 %2354
  %2356 = vmax.xlane.f32.xlu0 %v2352
  %v2357 = vpop.xlane.xlu0 %2356
  %v2358 = vsub.f32 %v2350, %v2355
  %v2359 = vsub.f32 %v2352, %v2357
  %v2360 = vmul.f32 %v2358, 1.442695
  %v2361 = vpow.pop %v2360
  %v2362 = vmul.f32 %v2359, 1.442695
  %v2363 = vpow.pop %v2362
  %2364 = vadd.xlane.f32.xlu0 %v2361
  %v2365 = vpop.xlane.xlu0 %2364
  %2366 = vadd.xlane.f32.xlu0 %v2363
  %v2367 = vpop.xlane.xlu0 %2366
  %v2368 = vlog2.pop %v2365
  %v2369 = vmul.f32 %v2368, 0.6931472
  %v2370 = vlog2.pop %v2367
  %v2371 = vmul.f32 %v2370, 0.6931472
  %v2372 = vsub.f32 %v2358, %v2369
  %v2373 = vsub.f32 %v2359, %v2371
  %v2374 = vld [vmem:[%s2 + $0x100] sm:$0xff]
  %v2375 = vld [vmem:[%s2 + $0x108] sm:$0xff]
  %v2376 = vld [vmem:[%s2 + $0x110] sm:$0xff]
  %v2377 = vld [vmem:[%s2 + $0x118] sm:$0xff]
  %v2378 = vld [vmem:[%s2 + $0x120] sm:$0xff]
  %v2379 = vld [vmem:[%s2 + $0x128] sm:$0xff]
  %v2380 = vld [vmem:[%s2 + $0x130] sm:$0xff]
  %v2381 = vld [vmem:[%s2 + $0x138] sm:$0xff]
  %v2382 = vld [vmem:[%s2 + $0x140] sm:$0xff]
  %v2383 = vld [vmem:[%s2 + $0x148] sm:$0xff]
  %v2384 = vld [vmem:[%s2 + $0x150] sm:$0xff]
  %v2385 = vld [vmem:[%s2 + $0x158] sm:$0xff]
  %v2386 = vld [vmem:[%s2 + $0x160] sm:$0xff]
  %v2387 = vld [vmem:[%s2 + $0x168] sm:$0xff]
  %v2388 = vld [vmem:[%s2 + $0x170] sm:$0xff]
  %v2389 = vld [vmem:[%s2 + $0x178] sm:$0xff]
  %v2390 = vld [vmem:[%s2 + $0x180] sm:$0xff]
  %v2391 = vld [vmem:[%s2 + $0x188] sm:$0xff]
  %v2392 = vld [vmem:[%s2 + $0x190] sm:$0xff]
  %v2393 = vld [vmem:[%s2 + $0x198] sm:$0xff]
  %v2394 = vld [vmem:[%s2 + $0x1a0] sm:$0xff]
  %v2395 = vld [vmem:[%s2 + $0x1a8] sm:$0xff]
  %v2396 = vld [vmem:[%s2 + $0x1b0] sm:$0xff]
  %v2397 = vld [vmem:[%s2 + $0x1b8] sm:$0xff]
  %v2398 = vld [vmem:[%s2 + $0x1c0] sm:$0xff]
  %v2399 = vld [vmem:[%s2 + $0x1c8] sm:$0xff]
  %v2400 = vld [vmem:[%s2 + $0x1d0] sm:$0xff]
  %v2401 = vld [vmem:[%s2 + $0x1d8] sm:$0xff]
  %v2402 = vld [vmem:[%s2 + $0x1e0] sm:$0xff]
  %v2403 = vld [vmem:[%s2 + $0x1e8] sm:$0xff]
  %v2404 = vld [vmem:[%s2 + $0x1f0] sm:$0xff]
  %v2405 = vld [vmem:[%s2 + $0x1f8] sm:$0x11]
  %s2406 = scalar_lea.vmem %s5, 16
  %v2407 = vld [vmem:[%s2406] ss:$8 sm:$0x3]
  %v2409 = vperm.slane %v2407, 0
  %v2410 = vperm.slane %v2407, 1
  %v2413 = vld [vmem:[%s1] sm:$0xff]
  %v2414 = vld [vmem:[%s1 + $0x8] sm:$0xff]
  %v2417 = vunpack.c.l.b16 %v2413
  %v2418 = vunpack.c.h.b16 %v2413
  %v2419 = vunpack.c.l.b16 %v2414
  %v2420 = vunpack.c.h.b16 %v2414
  %v2421 = vpack.c.b16 %v2419, %v2417
  %v2422 = vpack.c.b16 %v2420, %v2418
  %v2456 = vunpack.c.l.b16 %v2374
  %v2457 = vunpack.c.h.b16 %v2374
  %v2458 = vunpack.c.l.b16 %v2375
  %v2459 = vunpack.c.h.b16 %v2375
  %v2460 = vunpack.c.l.b16 %v2376
  %v2461 = vunpack.c.h.b16 %v2376
  %v2462 = vunpack.c.l.b16 %v2377
  %v2463 = vunpack.c.h.b16 %v2377
  %v2464 = vunpack.c.l.b16 %v2378
  %v2465 = vunpack.c.h.b16 %v2378
  %v2466 = vunpack.c.l.b16 %v2379
  %v2467 = vunpack.c.h.b16 %v2379
  %v2468 = vunpack.c.l.b16 %v2380
  %v2469 = vunpack.c.h.b16 %v2380
  %v2470 = vunpack.c.l.b16 %v2381
  %v2471 = vunpack.c.h.b16 %v2381
  %v2472 = vunpack.c.l.b16 %v2382
  %v2473 = vunpack.c.h.b16 %v2382
  %v2474 = vunpack.c.l.b16 %v2383
  %v2475 = vunpack.c.h.b16 %v2383
  %v2476 = vunpack.c.l.b16 %v2384
  %v2477 = vunpack.c.h.b16 %v2384
  %v2478 = vunpack.c.l.b16 %v2385
  %v2479 = vunpack.c.h.b16 %v2385
  %v2480 = vunpack.c.l.b16 %v2386
  %v2481 = vunpack.c.h.b16 %v2386
  %v2482 = vunpack.c.l.b16 %v2387
  %v2483 = vunpack.c.h.b16 %v2387
  %v2484 = vunpack.c.l.b16 %v2388
  %v2485 = vunpack.c.h.b16 %v2388
  %v2486 = vunpack.c.l.b16 %v2389
  %v2487 = vunpack.c.h.b16 %v2389
  %v2488 = vunpack.c.l.b16 %v2390
  %v2489 = vunpack.c.h.b16 %v2390
  %v2490 = vunpack.c.l.b16 %v2391
  %v2491 = vunpack.c.h.b16 %v2391
  %v2492 = vunpack.c.l.b16 %v2392
  %v2493 = vunpack.c.h.b16 %v2392
  %v2494 = vunpack.c.l.b16 %v2393
  %v2495 = vunpack.c.h.b16 %v2393
  %v2496 = vunpack.c.l.b16 %v2394
  %v2497 = vunpack.c.h.b16 %v2394
  %v2498 = vunpack.c.l.b16 %v2395
  %v2499 = vunpack.c.h.b16 %v2395
  %v2500 = vunpack.c.l.b16 %v2396
  %v2501 = vunpack.c.h.b16 %v2396
  %v2502 = vunpack.c.l.b16 %v2397
  %v2503 = vunpack.c.h.b16 %v2397
  %v2504 = vunpack.c.l.b16 %v2398
  %v2505 = vunpack.c.h.b16 %v2398
  %v2506 = vunpack.c.l.b16 %v2399
  %v2507 = vunpack.c.h.b16 %v2399
  %v2508 = vunpack.c.l.b16 %v2400
  %v2509 = vunpack.c.h.b16 %v2400
  %v2510 = vunpack.c.l.b16 %v2401
  %v2511 = vunpack.c.h.b16 %v2401
  %v2512 = vunpack.c.l.b16 %v2402
  %v2513 = vunpack.c.h.b16 %v2402
  %v2514 = vunpack.c.l.b16 %v2403
  %v2515 = vunpack.c.h.b16 %v2403
  %v2516 = vunpack.c.l.b16 %v2404
  %v2517 = vunpack.c.h.b16 %v2404
  %v2518 = vunpack.c.l.b16 %v2405
  %v2519 = vunpack.c.h.b16 %v2405
  %v2520 = vpack.c.b16 %v2458, %v2456
  %v2521 = vpack.c.b16 %v2459, %v2457
  %v2522 = vpack.c.b16 %v2462, %v2460
  %v2523 = vpack.c.b16 %v2463, %v2461
  %v2524 = vpack.c.b16 %v2466, %v2464
  %v2525 = vpack.c.b16 %v2467, %v2465
  %v2526 = vpack.c.b16 %v2470, %v2468
  %v2527 = vpack.c.b16 %v2471, %v2469
  %v2528 = vpack.c.b16 %v2474, %v2472
  %v2529 = vpack.c.b16 %v2475, %v2473
  %v2530 = vpack.c.b16 %v2478, %v2476
  %v2531 = vpack.c.b16 %v2479, %v2477
  %v2532 = vpack.c.b16 %v2482, %v2480
  %v2533 = vpack.c.b16 %v2483, %v2481
  %v2534 = vpack.c.b16 %v2486, %v2484
  %v2535 = vpack.c.b16 %v2487, %v2485
  %v2536 = vpack.c.b16 %v2490, %v2488
  %v2537 = vpack.c.b16 %v2491, %v2489
  %v2538 = vpack.c.b16 %v2494, %v2492
  %v2539 = vpack.c.b16 %v2495, %v2493
  %v2540 = vpack.c.b16 %v2498, %v2496
  %v2541 = vpack.c.b16 %v2499, %v2497
  %v2542 = vpack.c.b16 %v2502, %v2500
  %v2543 = vpack.c.b16 %v2503, %v2501
  %v2544 = vpack.c.b16 %v2506, %v2504
  %v2545 = vpack.c.b16 %v2507, %v2505
  %v2546 = vpack.c.b16 %v2510, %v2508
  %v2547 = vpack.c.b16 %v2511, %v2509
  %v2548 = vpack.c.b16 %v2514, %v2512
  %v2549 = vpack.c.b16 %v2515, %v2513
  %v2550 = vpack.c.b16 %v2518, %v2516
  %v2551 = vpack.c.b16 %v2519, %v2517
  %v2583 = vsel %vm231, %v2422, 0
  %v2586 = vsel %vm235, %v2550, 0
  %v2589 = vsel %vm235, %v2551, 0
  %2591 = vmatpush.bf16.msra.mxu0 %v2534
  %2592 = vmatpush.bf16.msra.mxu0 %v2532
  %2593 = vmatpush.bf16.msra.mxu0 %v2530
  %2594 = vmatpush.bf16.msra.mxu0 %v2528
  %2595 = vmatpush.bf16.msra.mxu0 %v2526
  %2596 = vmatpush.bf16.msra.mxu0 %v2524
  %2597 = vmatpush.bf16.msra.mxu0 %v2522
  %2598 = vmatpush.bf16.msra.mxu0 %v2520
  %2599 = vmatmul.bf16.gmra.mxu0 %v2421
  %v2600 = vpop.f32.mrf.mxu0
  %v2601 = vadd.f32 %v2409, %v2600
  %v2602 = vpop.f32.mrf.mxu0
  %v2603 = vadd.f32 %v2409, %v2602
  %2604 = vdwg.mxu0
  %2605 = vmatpush.bf16.msra.mxu0 %v2586
  %2606 = vmatpush.bf16.msra.mxu0 %v2548
  %2607 = vmatpush.bf16.msra.mxu0 %v2546
  %2608 = vmatpush.bf16.msra.mxu0 %v2544
  %2609 = vmatpush.bf16.msra.mxu0 %v2542
  %2610 = vmatpush.bf16.msra.mxu0 %v2540
  %2611 = vmatpush.bf16.msra.mxu0 %v2538
  %2612 = vmatpush.bf16.msra.mxu0 %v2536
  %2613 = vmatmul.bf16.gmra.mxu0 %v2583
  %v2614 = vpop.f32.mrf.mxu0
  %v2615 = vadd.f32 %v2601, %v2614
  %v2616 = vpop.f32.mrf.mxu0
  %v2617 = vadd.f32 %v2603, %v2616
  %2618 = vdwg.mxu0
  %2619 = vmatpush.bf16.msra.mxu0 %v2535
  %2620 = vmatpush.bf16.msra.mxu0 %v2533
  %2621 = vmatpush.bf16.msra.mxu0 %v2531
  %2622 = vmatpush.bf16.msra.mxu0 %v2529
  %2623 = vmatpush.bf16.msra.mxu0 %v2527
  %2624 = vmatpush.bf16.msra.mxu0 %v2525
  %2625 = vmatpush.bf16.msra.mxu0 %v2523
  %2626 = vmatpush.bf16.msra.mxu0 %v2521
  %2627 = vmatmul.bf16.gmra.mxu0 %v2421
  %v2628 = vpop.f32.mrf.mxu0
  %v2629 = vadd.f32 %v2410, %v2628
  %v2630 = vpop.f32.mrf.mxu0
  %v2631 = vadd.f32 %v2410, %v2630
  %2632 = vdwg.mxu0
  %2633 = vmatpush.bf16.msra.mxu0 %v2589
  %2634 = vmatpush.bf16.msra.mxu0 %v2549
  %2635 = vmatpush.bf16.msra.mxu0 %v2547
  %2636 = vmatpush.bf16.msra.mxu0 %v2545
  %2637 = vmatpush.bf16.msra.mxu0 %v2543
  %2638 = vmatpush.bf16.msra.mxu0 %v2541
  %2639 = vmatpush.bf16.msra.mxu0 %v2539
  %2640 = vmatpush.bf16.msra.mxu0 %v2537
  %2641 = vmatmul.bf16.gmra.mxu0 %v2583
  %v2642 = vpop.f32.mrf.mxu0
  %v2643 = vadd.f32 %v2629, %v2642
  %v2644 = vpop.f32.mrf.mxu0
  %v2645 = vadd.f32 %v2631, %v2644
  %2646 = vdwg.mxu0
  %v2647 = vpack.c.bf16 %v2617, %v2615
  %v2648 = vpack.c.bf16 %v2645, %v2643
  %v2649 = vunpack.c.l.bf16 %v2647
  %v2650 = vunpack.c.l.bf16 %v2648
  %v2651 = vunpack.c.h.bf16 %v2647
  %v2652 = vunpack.c.h.bf16 %v2648
  %v2653 = vtanh.pop %v2649
  %v2654 = vtanh.pop %v2650
  %v2655 = vtanh.pop %v2651
  %v2656 = vtanh.pop %v2652
  %v2657 = vpack.c.bf16 %v2655, %v2653
  %v2658 = vpack.c.bf16 %v2656, %v2654
  %v2659 = vld [vmem:[%s3 + $0x4] sm:$0xf]
  %v2660 = vld [vmem:[%s3 + $0xc] sm:$0xf]
  %v2661 = vld [vmem:[%s3 + $0x14] sm:$0xf]
  %v2662 = vld [vmem:[%s3 + $0x1c] sm:$0xf]
  %v2663 = vld [vmem:[%s3 + $0x24] sm:$0xf]
  %v2664 = vld [vmem:[%s3 + $0x2c] sm:$0xf]
  %v2665 = vld [vmem:[%s3 + $0x34] sm:$0xf]
  %v2666 = vld [vmem:[%s3 + $0x3c] sm:$0xf]
  %v2667 = vld [vmem:[%s3 + $0x44] sm:$0xf]
  %v2668 = vld [vmem:[%s3 + $0x4c] sm:$0xf]
  %v2669 = vld [vmem:[%s3 + $0x54] sm:$0xf]
  %v2670 = vld [vmem:[%s3 + $0x5c] sm:$0xf]
  %v2671 = vld [vmem:[%s3 + $0x64] sm:$0xf]
  %v2672 = vld [vmem:[%s3 + $0x6c] sm:$0xf]
  %v2673 = vld [vmem:[%s3 + $0x74] sm:$0xf]
  %v2674 = vld [vmem:[%s3 + $0x7c] sm:$0xf]
  %v2675 = vld [vmem:[%s3 + $0x84] sm:$0xf]
  %v2676 = vld [vmem:[%s3 + $0x8c] sm:$0xf]
  %v2677 = vld [vmem:[%s3 + $0x94] sm:$0xf]
  %v2678 = vld [vmem:[%s3 + $0x9c] sm:$0xf]
  %s2679 = scalar_lea.vmem %s1, 16
  %v2680 = vld [vmem:[%s2679] sm:$0xff]
  %v2681 = vld [vmem:[%s2679 + $0x8] sm:$0xff]
  %v2684 = vunpack.c.l.b16 %v2680
  %v2685 = vunpack.c.h.b16 %v2680
  %v2686 = vunpack.c.l.b16 %v2681
  %v2687 = vunpack.c.h.b16 %v2681
  %v2688 = vpack.c.b16 %v2686, %v2684
  %v2689 = vpack.c.b16 %v2687, %v2685
  %v2692 = vsel %vm231, %v2689, 0
  %2694 = vmatpush.bf16.msra.mxu0 %v2534
  %2695 = vmatpush.bf16.msra.mxu0 %v2532
  %2696 = vmatpush.bf16.msra.mxu0 %v2530
  %2697 = vmatpush.bf16.msra.mxu0 %v2528
  %2698 = vmatpush.bf16.msra.mxu0 %v2526
  %2699 = vmatpush.bf16.msra.mxu0 %v2524
  %2700 = vmatpush.bf16.msra.mxu0 %v2522
  %2701 = vmatpush.bf16.msra.mxu0 %v2520
  %2702 = vmatmul.bf16.gmra.mxu0 %v2688
  %v2703 = vpop.f32.mrf.mxu0
  %v2704 = vadd.f32 %v2409, %v2703
  %v2705 = vpop.f32.mrf.mxu0
  %v2706 = vadd.f32 %v2409, %v2705
  %2707 = vdwg.mxu0
  %2708 = vmatpush.bf16.msra.mxu0 %v2586
  %2709 = vmatpush.bf16.msra.mxu0 %v2548
  %2710 = vmatpush.bf16.msra.mxu0 %v2546
  %2711 = vmatpush.bf16.msra.mxu0 %v2544
  %2712 = vmatpush.bf16.msra.mxu0 %v2542
  %2713 = vmatpush.bf16.msra.mxu0 %v2540
  %2714 = vmatpush.bf16.msra.mxu0 %v2538
  %2715 = vmatpush.bf16.msra.mxu0 %v2536
  %2716 = vmatmul.bf16.gmra.mxu0 %v2692
  %v2717 = vpop.f32.mrf.mxu0
  %v2718 = vadd.f32 %v2704, %v2717
  %v2719 = vpop.f32.mrf.mxu0
  %v2720 = vadd.f32 %v2706, %v2719
  %2721 = vdwg.mxu0
  %2722 = vmatpush.bf16.msra.mxu0 %v2535
  %2723 = vmatpush.bf16.msra.mxu0 %v2533
  %2724 = vmatpush.bf16.msra.mxu0 %v2531
  %2725 = vmatpush.bf16.msra.mxu0 %v2529
  %2726 = vmatpush.bf16.msra.mxu0 %v2527
  %2727 = vmatpush.bf16.msra.mxu0 %v2525
  %2728 = vmatpush.bf16.msra.mxu0 %v2523
  %2729 = vmatpush.bf16.msra.mxu0 %v2521
  %2730 = vmatmul.bf16.gmra.mxu0 %v2688
  %v2731 = vpop.f32.mrf.mxu0
  %v2732 = vadd.f32 %v2410, %v2731
  %v2733 = vpop.f32.mrf.mxu0
  %v2734 = vadd.f32 %v2410, %v2733
  %2735 = vdwg.mxu0
  %2736 = vmatpush.bf16.msra.mxu0 %v2589
  %2737 = vmatpush.bf16.msra.mxu0 %v2549
  %2738 = vmatpush.bf16.msra.mxu0 %v2547
  %2739 = vmatpush.bf16.msra.mxu0 %v2545
  %2740 = vmatpush.bf16.msra.mxu0 %v2543
  %2741 = vmatpush.bf16.msra.mxu0 %v2541
  %2742 = vmatpush.bf16.msra.mxu0 %v2539
  %2743 = vmatpush.bf16.msra.mxu0 %v2537
  %2744 = vmatmul.bf16.gmra.mxu0 %v2692
  %v2745 = vpop.f32.mrf.mxu0
  %v2746 = vadd.f32 %v2732, %v2745
  %v2747 = vpop.f32.mrf.mxu0
  %v2748 = vadd.f32 %v2734, %v2747
  %2749 = vdwg.mxu0
  %v2750 = vpack.c.bf16 %v2720, %v2718
  %v2751 = vpack.c.bf16 %v2748, %v2746
  %v2752 = vunpack.c.l.bf16 %v2750
  %v2753 = vunpack.c.l.bf16 %v2751
  %v2754 = vunpack.c.h.bf16 %v2750
  %v2755 = vunpack.c.h.bf16 %v2751
  %v2756 = vtanh.pop %v2752
  %v2757 = vtanh.pop %v2753
  %v2758 = vtanh.pop %v2754
  %v2759 = vtanh.pop %v2755
  %v2760 = vpack.c.bf16 %v2758, %v2756
  %v2761 = vpack.c.bf16 %v2759, %v2757
  %v2762 = vld [vmem:[%s3 + $0xa4] sm:$0xf]
  %v2763 = vld [vmem:[%s3 + $0xac] sm:$0xf]
  %v2764 = vld [vmem:[%s3 + $0xb4] sm:$0xf]
  %v2765 = vld [vmem:[%s3 + $0xbc] sm:$0xf]
  %v2766 = vld [vmem:[%s3 + $0xc4] sm:$0xf]
  %v2767 = vld [vmem:[%s3 + $0xcc] sm:$0xf]
  %v2768 = vld [vmem:[%s3 + $0xd4] sm:$0xf]
  %v2769 = vld [vmem:[%s3 + $0xdc] sm:$0xf]
  %v2770 = vld [vmem:[%s3 + $0xe4] sm:$0xf]
  %v2771 = vld [vmem:[%s3 + $0xec] sm:$0xf]
  %v2772 = vld [vmem:[%s3 + $0xf4] sm:$0xf]
  %v2773 = vld [vmem:[%s3 + $0xfc] sm:$0xf]
  %v2774 = vld [vmem:[%s3 + $0x104] sm:$0xf]
  %v2775 = vld [vmem:[%s3 + $0x10c] sm:$0xf]
  %v2776 = vld [vmem:[%s3 + $0x114] sm:$0xf]
  %v2777 = vld [vmem:[%s3 + $0x11c] sm:$0xf]
  %v2778 = vld [vmem:[%s3 + $0x124] sm:$0xf]
  %v2779 = vld [vmem:[%s3 + $0x12c] sm:$0xf]
  %v2780 = vld [vmem:[%s3 + $0x134] sm:$0xf]
  %v2781 = vld [vmem:[%s3 + $0x13c] sm:$0xf]
  %v2802 = vunpack.c.l.b16 %v2762
  %v2803 = vunpack.c.l.b16 %v2763
  %v2804 = vunpack.c.l.b16 %v2764
  %v2805 = vunpack.c.l.b16 %v2765
  %v2806 = vunpack.c.l.b16 %v2766
  %v2807 = vunpack.c.l.b16 %v2767
  %v2808 = vunpack.c.l.b16 %v2768
  %v2809 = vunpack.c.l.b16 %v2769
  %v2810 = vunpack.c.l.b16 %v2770
  %v2811 = vunpack.c.l.b16 %v2771
  %v2812 = vunpack.c.l.b16 %v2772
  %v2813 = vunpack.c.l.b16 %v2773
  %v2814 = vunpack.c.l.b16 %v2774
  %v2815 = vunpack.c.l.b16 %v2775
  %v2816 = vunpack.c.l.b16 %v2776
  %v2817 = vunpack.c.l.b16 %v2777
  %v2818 = vunpack.c.l.b16 %v2778
  %v2819 = vunpack.c.l.b16 %v2779
  %v2820 = vunpack.c.l.b16 %v2780
  %v2821 = vunpack.c.l.b16 %v2781
  %v2822 = vpack.c.b16 %v2803, %v2802
  %v2823 = vpack.c.b16 %v2805, %v2804
  %v2824 = vpack.c.b16 %v2807, %v2806
  %v2825 = vpack.c.b16 %v2809, %v2808
  %v2826 = vpack.c.b16 %v2811, %v2810
  %v2827 = vpack.c.b16 %v2813, %v2812
  %v2828 = vpack.c.b16 %v2815, %v2814
  %v2829 = vpack.c.b16 %v2817, %v2816
  %v2830 = vpack.c.b16 %v2819, %v2818
  %v2831 = vpack.c.b16 %v2821, %v2820
  %v2843 = vsel %vm493, %v2761, 0
  %2845 = vmatpush.bf16.msra.mxu0 %v2829
  %2846 = vmatpush.bf16.msra.mxu0 %v2828
  %2847 = vmatpush.bf16.msra.mxu0 %v2827
  %2848 = vmatpush.bf16.msra.mxu0 %v2826
  %2849 = vmatpush.bf16.msra.mxu0 %v2825
  %2850 = vmatpush.bf16.msra.mxu0 %v2824
  %2851 = vmatpush.bf16.msra.mxu0 %v2823
  %2852 = vmatpush.bf16.msra.mxu0 %v2822
  %2853 = vmatmul.bf16.gmra.mxu0 %v2760
  %v2854 = vpop.f32.mrf.mxu0
  %v2855 = vadd.f32 0.0, %v2854
  %v2856 = vpop.f32.mrf.mxu0
  %v2857 = vadd.f32 0.0, %v2856
  %2858 = vdwg.mxu0
  %2859 = vmatpush.bf16.msra.mxu0 0
  %2860 = vmatpush.bf16.msra.mxu0 0
  %2861 = vmatpush.bf16.msra.mxu0 0
  %2862 = vmatpush.bf16.msra.mxu0 0
  %2863 = vmatpush.bf16.msra.mxu0 0
  %2864 = vmatpush.bf16.msra.mxu0 0
  %2865 = vmatpush.bf16.msra.mxu0 %v2831
  %2866 = vmatpush.bf16.msra.mxu0 %v2830
  %2867 = vmatmul.bf16.gmra.mxu0 %v2843
  %v2868 = vpop.f32.mrf.mxu0
  %v2869 = vadd.f32 %v2855, %v2868
  %v2870 = vpop.f32.mrf.mxu0
  %v2871 = vadd.f32 %v2857, %v2870
  %2872 = vdwg.mxu0
  %v2893 = vunpack.c.l.b16 %v2659
  %v2894 = vunpack.c.l.b16 %v2660
  %v2895 = vunpack.c.l.b16 %v2661
  %v2896 = vunpack.c.l.b16 %v2662
  %v2897 = vunpack.c.l.b16 %v2663
  %v2898 = vunpack.c.l.b16 %v2664
  %v2899 = vunpack.c.l.b16 %v2665
  %v2900 = vunpack.c.l.b16 %v2666
  %v2901 = vunpack.c.l.b16 %v2667
  %v2902 = vunpack.c.l.b16 %v2668
  %v2903 = vunpack.c.l.b16 %v2669
  %v2904 = vunpack.c.l.b16 %v2670
  %v2905 = vunpack.c.l.b16 %v2671
  %v2906 = vunpack.c.l.b16 %v2672
  %v2907 = vunpack.c.l.b16 %v2673
  %v2908 = vunpack.c.l.b16 %v2674
  %v2909 = vunpack.c.l.b16 %v2675
  %v2910 = vunpack.c.l.b16 %v2676
  %v2911 = vunpack.c.l.b16 %v2677
  %v2912 = vunpack.c.l.b16 %v2678
  %v2913 = vpack.c.b16 %v2894, %v2893
  %v2914 = vpack.c.b16 %v2896, %v2895
  %v2915 = vpack.c.b16 %v2898, %v2897
  %v2916 = vpack.c.b16 %v2900, %v2899
  %v2917 = vpack.c.b16 %v2902, %v2901
  %v2918 = vpack.c.b16 %v2904, %v2903
  %v2919 = vpack.c.b16 %v2906, %v2905
  %v2920 = vpack.c.b16 %v2908, %v2907
  %v2921 = vpack.c.b16 %v2910, %v2909
  %v2922 = vpack.c.b16 %v2912, %v2911
  %v2934 = vsel %vm493, %v2658, 0
  %2936 = vmatpush.bf16.msra.mxu0 %v2920
  %2937 = vmatpush.bf16.msra.mxu0 %v2919
  %2938 = vmatpush.bf16.msra.mxu0 %v2918
  %2939 = vmatpush.bf16.msra.mxu0 %v2917
  %2940 = vmatpush.bf16.msra.mxu0 %v2916
  %2941 = vmatpush.bf16.msra.mxu0 %v2915
  %2942 = vmatpush.bf16.msra.mxu0 %v2914
  %2943 = vmatpush.bf16.msra.mxu0 %v2913
  %2944 = vmatmul.bf16.gmra.mxu0 %v2657
  %v2945 = vpop.f32.mrf.mxu0
  %v2946 = vadd.f32 %v2869, %v2945
  %v2947 = vpop.f32.mrf.mxu0
  %v2948 = vadd.f32 %v2871, %v2947
  %2949 = vdwg.mxu0
  %2950 = vmatpush.bf16.msra.mxu0 0
  %2951 = vmatpush.bf16.msra.mxu0 0
  %2952 = vmatpush.bf16.msra.mxu0 0
  %2953 = vmatpush.bf16.msra.mxu0 0
  %2954 = vmatpush.bf16.msra.mxu0 0
  %2955 = vmatpush.bf16.msra.mxu0 0
  %2956 = vmatpush.bf16.msra.mxu0 %v2922
  %2957 = vmatpush.bf16.msra.mxu0 %v2921
  %2958 = vmatmul.bf16.gmra.mxu0 %v2934
  %v2959 = vpop.f32.mrf.mxu0
  %v2960 = vadd.f32 %v2946, %v2959
  %v2961 = vpop.f32.mrf.mxu0
  %v2962 = vadd.f32 %v2948, %v2961
  %2963 = vdwg.mxu0
  %s2964 = scalar_lea.vmem %s1, 32
  %v2965 = vld [vmem:[%s2964] sm:$0xff]
  %v2966 = vld [vmem:[%s2964 + $0x8] sm:$0xff]
  %v2969 = vunpack.c.l.b16 %v2965
  %v2970 = vunpack.c.h.b16 %v2965
  %v2971 = vunpack.c.l.b16 %v2966
  %v2972 = vunpack.c.h.b16 %v2966
  %v2973 = vpack.c.b16 %v2971, %v2969
  %v2974 = vpack.c.b16 %v2972, %v2970
  %v2977 = vsel %vm231, %v2974, 0
  %2979 = vmatpush.bf16.msra.mxu0 %v2534
  %2980 = vmatpush.bf16.msra.mxu0 %v2532
  %2981 = vmatpush.bf16.msra.mxu0 %v2530
  %2982 = vmatpush.bf16.msra.mxu0 %v2528
  %2983 = vmatpush.bf16.msra.mxu0 %v2526
  %2984 = vmatpush.bf16.msra.mxu0 %v2524
  %2985 = vmatpush.bf16.msra.mxu0 %v2522
  %2986 = vmatpush.bf16.msra.mxu0 %v2520
  %2987 = vmatmul.bf16.gmra.mxu0 %v2973
  %v2988 = vpop.f32.mrf.mxu0
  %v2989 = vadd.f32 %v2409, %v2988
  %v2990 = vpop.f32.mrf.mxu0
  %v2991 = vadd.f32 %v2409, %v2990
  %2992 = vdwg.mxu0
  %2993 = vmatpush.bf16.msra.mxu0 %v2586
  %2994 = vmatpush.bf16.msra.mxu0 %v2548
  %2995 = vmatpush.bf16.msra.mxu0 %v2546
  %2996 = vmatpush.bf16.msra.mxu0 %v2544
  %2997 = vmatpush.bf16.msra.mxu0 %v2542
  %2998 = vmatpush.bf16.msra.mxu0 %v2540
  %2999 = vmatpush.bf16.msra.mxu0 %v2538
  %3000 = vmatpush.bf16.msra.mxu0 %v2536
  %3001 = vmatmul.bf16.gmra.mxu0 %v2977
  %v3002 = vpop.f32.mrf.mxu0
  %v3003 = vadd.f32 %v2989, %v3002
  %v3004 = vpop.f32.mrf.mxu0
  %v3005 = vadd.f32 %v2991, %v3004
  %3006 = vdwg.mxu0
  %3007 = vmatpush.bf16.msra.mxu0 %v2535
  %3008 = vmatpush.bf16.msra.mxu0 %v2533
  %3009 = vmatpush.bf16.msra.mxu0 %v2531
  %3010 = vmatpush.bf16.msra.mxu0 %v2529
  %3011 = vmatpush.bf16.msra.mxu0 %v2527
  %3012 = vmatpush.bf16.msra.mxu0 %v2525
  %3013 = vmatpush.bf16.msra.mxu0 %v2523
  %3014 = vmatpush.bf16.msra.mxu0 %v2521
  %3015 = vmatmul.bf16.gmra.mxu0 %v2973
  %v3016 = vpop.f32.mrf.mxu0
  %v3017 = vadd.f32 %v2410, %v3016
  %v3018 = vpop.f32.mrf.mxu0
  %v3019 = vadd.f32 %v2410, %v3018
  %3020 = vdwg.mxu0
  %3021 = vmatpush.bf16.msra.mxu0 %v2589
  %3022 = vmatpush.bf16.msra.mxu0 %v2549
  %3023 = vmatpush.bf16.msra.mxu0 %v2547
  %3024 = vmatpush.bf16.msra.mxu0 %v2545
  %3025 = vmatpush.bf16.msra.mxu0 %v2543
  %3026 = vmatpush.bf16.msra.mxu0 %v2541
  %3027 = vmatpush.bf16.msra.mxu0 %v2539
  %3028 = vmatpush.bf16.msra.mxu0 %v2537
  %3029 = vmatmul.bf16.gmra.mxu0 %v2977
  %v3030 = vpop.f32.mrf.mxu0
  %v3031 = vadd.f32 %v3017, %v3030
  %v3032 = vpop.f32.mrf.mxu0
  %v3033 = vadd.f32 %v3019, %v3032
  %3034 = vdwg.mxu0
  %v3035 = vpack.c.bf16 %v3005, %v3003
  %v3036 = vpack.c.bf16 %v3033, %v3031
  %v3037 = vunpack.c.l.bf16 %v3035
  %v3038 = vunpack.c.l.bf16 %v3036
  %v3039 = vunpack.c.h.bf16 %v3035
  %v3040 = vunpack.c.h.bf16 %v3036
  %v3041 = vtanh.pop %v3037
  %v3042 = vtanh.pop %v3038
  %v3043 = vtanh.pop %v3039
  %v3044 = vtanh.pop %v3040
  %v3045 = vpack.c.bf16 %v3043, %v3041
  %v3046 = vpack.c.bf16 %v3044, %v3042
  %v3047 = vld [vmem:[%s3 + $0x144] sm:$0xf]
  %v3048 = vld [vmem:[%s3 + $0x14c] sm:$0xf]
  %v3049 = vld [vmem:[%s3 + $0x154] sm:$0xf]
  %v3050 = vld [vmem:[%s3 + $0x15c] sm:$0xf]
  %v3051 = vld [vmem:[%s3 + $0x164] sm:$0xf]
  %v3052 = vld [vmem:[%s3 + $0x16c] sm:$0xf]
  %v3053 = vld [vmem:[%s3 + $0x174] sm:$0xf]
  %v3054 = vld [vmem:[%s3 + $0x17c] sm:$0xf]
  %v3055 = vld [vmem:[%s3 + $0x184] sm:$0xf]
  %v3056 = vld [vmem:[%s3 + $0x18c] sm:$0xf]
  %v3057 = vld [vmem:[%s3 + $0x194] sm:$0xf]
  %v3058 = vld [vmem:[%s3 + $0x19c] sm:$0xf]
  %v3059 = vld [vmem:[%s3 + $0x1a4] sm:$0xf]
  %v3060 = vld [vmem:[%s3 + $0x1ac] sm:$0xf]
  %v3061 = vld [vmem:[%s3 + $0x1b4] sm:$0xf]
  %v3062 = vld [vmem:[%s3 + $0x1bc] sm:$0xf]
  %v3063 = vld [vmem:[%s3 + $0x1c4] sm:$0xf]
  %v3064 = vld [vmem:[%s3 + $0x1cc] sm:$0xf]
  %v3065 = vld [vmem:[%s3 + $0x1d4] sm:$0xf]
  %v3066 = vld [vmem:[%s3 + $0x1dc] sm:$0xf]
  %v3087 = vunpack.c.l.b16 %v3047
  %v3088 = vunpack.c.l.b16 %v3048
  %v3089 = vunpack.c.l.b16 %v3049
  %v3090 = vunpack.c.l.b16 %v3050
  %v3091 = vunpack.c.l.b16 %v3051
  %v3092 = vunpack.c.l.b16 %v3052
  %v3093 = vunpack.c.l.b16 %v3053
  %v3094 = vunpack.c.l.b16 %v3054
  %v3095 = vunpack.c.l.b16 %v3055
  %v3096 = vunpack.c.l.b16 %v3056
  %v3097 = vunpack.c.l.b16 %v3057
  %v3098 = vunpack.c.l.b16 %v3058
  %v3099 = vunpack.c.l.b16 %v3059
  %v3100 = vunpack.c.l.b16 %v3060
  %v3101 = vunpack.c.l.b16 %v3061
  %v3102 = vunpack.c.l.b16 %v3062
  %v3103 = vunpack.c.l.b16 %v3063
  %v3104 = vunpack.c.l.b16 %v3064
  %v3105 = vunpack.c.l.b16 %v3065
  %v3106 = vunpack.c.l.b16 %v3066
  %v3107 = vpack.c.b16 %v3088, %v3087
  %v3108 = vpack.c.b16 %v3090, %v3089
  %v3109 = vpack.c.b16 %v3092, %v3091
  %v3110 = vpack.c.b16 %v3094, %v3093
  %v3111 = vpack.c.b16 %v3096, %v3095
  %v3112 = vpack.c.b16 %v3098, %v3097
  %v3113 = vpack.c.b16 %v3100, %v3099
  %v3114 = vpack.c.b16 %v3102, %v3101
  %v3115 = vpack.c.b16 %v3104, %v3103
  %v3116 = vpack.c.b16 %v3106, %v3105
  %v3128 = vsel %vm493, %v3046, 0
  %3130 = vmatpush.bf16.msra.mxu0 %v3114
  %3131 = vmatpush.bf16.msra.mxu0 %v3113
  %3132 = vmatpush.bf16.msra.mxu0 %v3112
  %3133 = vmatpush.bf16.msra.mxu0 %v3111
  %3134 = vmatpush.bf16.msra.mxu0 %v3110
  %3135 = vmatpush.bf16.msra.mxu0 %v3109
  %3136 = vmatpush.bf16.msra.mxu0 %v3108
  %3137 = vmatpush.bf16.msra.mxu0 %v3107
  %3138 = vmatmul.bf16.gmra.mxu0 %v3045
  %v3139 = vpop.f32.mrf.mxu0
  %v3140 = vadd.f32 0.0, %v3139
  %v3141 = vpop.f32.mrf.mxu0
  %v3142 = vadd.f32 0.0, %v3141
  %3143 = vdwg.mxu0
  %3144 = vmatpush.bf16.msra.mxu0 0
  %3145 = vmatpush.bf16.msra.mxu0 0
  %3146 = vmatpush.bf16.msra.mxu0 0
  %3147 = vmatpush.bf16.msra.mxu0 0
  %3148 = vmatpush.bf16.msra.mxu0 0
  %3149 = vmatpush.bf16.msra.mxu0 0
  %3150 = vmatpush.bf16.msra.mxu0 %v3116
  %3151 = vmatpush.bf16.msra.mxu0 %v3115
  %3152 = vmatmul.bf16.gmra.mxu0 %v3128
  %v3153 = vpop.f32.mrf.mxu0
  %v3154 = vadd.f32 %v3140, %v3153
  %v3155 = vpop.f32.mrf.mxu0
  %v3156 = vadd.f32 %v3142, %v3155
  %3157 = vdwg.mxu0
  %v3158 = vadd.f32 %v2960, %v3154
  %v3159 = vadd.f32 %v2962, %v3156
  %s3160 = scalar_lea.vmem %s1, 48
  %v3161 = vld [vmem:[%s3160] sm:$0xff]
  %v3162 = vld [vmem:[%s3160 + $0x8] sm:$0xff]
  %v3165 = vunpack.c.l.b16 %v3161
  %v3166 = vunpack.c.h.b16 %v3161
  %v3167 = vunpack.c.l.b16 %v3162
  %v3168 = vunpack.c.h.b16 %v3162
  %v3169 = vpack.c.b16 %v3167, %v3165
  %v3170 = vpack.c.b16 %v3168, %v3166
  %v3173 = vsel %vm231, %v3170, 0
  %3175 = vmatpush.bf16.msra.mxu0 %v2534
  %3176 = vmatpush.bf16.msra.mxu0 %v2532
  %3177 = vmatpush.bf16.msra.mxu0 %v2530
  %3178 = vmatpush.bf16.msra.mxu0 %v2528
  %3179 = vmatpush.bf16.msra.mxu0 %v2526
  %3180 = vmatpush.bf16.msra.mxu0 %v2524
  %3181 = vmatpush.bf16.msra.mxu0 %v2522
  %3182 = vmatpush.bf16.msra.mxu0 %v2520
  %3183 = vmatmul.bf16.gmra.mxu0 %v3169
  %v3184 = vpop.f32.mrf.mxu0
  %v3185 = vadd.f32 %v2409, %v3184
  %v3186 = vpop.f32.mrf.mxu0
  %v3187 = vadd.f32 %v2409, %v3186
  %3188 = vdwg.mxu0
  %3189 = vmatpush.bf16.msra.mxu0 %v2586
  %3190 = vmatpush.bf16.msra.mxu0 %v2548
  %3191 = vmatpush.bf16.msra.mxu0 %v2546
  %3192 = vmatpush.bf16.msra.mxu0 %v2544
  %3193 = vmatpush.bf16.msra.mxu0 %v2542
  %3194 = vmatpush.bf16.msra.mxu0 %v2540
  %3195 = vmatpush.bf16.msra.mxu0 %v2538
  %3196 = vmatpush.bf16.msra.mxu0 %v2536
  %3197 = vmatmul.bf16.gmra.mxu0 %v3173
  %v3198 = vpop.f32.mrf.mxu0
  %v3199 = vadd.f32 %v3185, %v3198
  %v3200 = vpop.f32.mrf.mxu0
  %v3201 = vadd.f32 %v3187, %v3200
  %3202 = vdwg.mxu0
  %3203 = vmatpush.bf16.msra.mxu0 %v2535
  %3204 = vmatpush.bf16.msra.mxu0 %v2533
  %3205 = vmatpush.bf16.msra.mxu0 %v2531
  %3206 = vmatpush.bf16.msra.mxu0 %v2529
  %3207 = vmatpush.bf16.msra.mxu0 %v2527
  %3208 = vmatpush.bf16.msra.mxu0 %v2525
  %3209 = vmatpush.bf16.msra.mxu0 %v2523
  %3210 = vmatpush.bf16.msra.mxu0 %v2521
  %3211 = vmatmul.bf16.gmra.mxu0 %v3169
  %v3212 = vpop.f32.mrf.mxu0
  %v3213 = vadd.f32 %v2410, %v3212
  %v3214 = vpop.f32.mrf.mxu0
  %v3215 = vadd.f32 %v2410, %v3214
  %3216 = vdwg.mxu0
  %3217 = vmatpush.bf16.msra.mxu0 %v2589
  %3218 = vmatpush.bf16.msra.mxu0 %v2549
  %3219 = vmatpush.bf16.msra.mxu0 %v2547
  %3220 = vmatpush.bf16.msra.mxu0 %v2545
  %3221 = vmatpush.bf16.msra.mxu0 %v2543
  %3222 = vmatpush.bf16.msra.mxu0 %v2541
  %3223 = vmatpush.bf16.msra.mxu0 %v2539
  %3224 = vmatpush.bf16.msra.mxu0 %v2537
  %3225 = vmatmul.bf16.gmra.mxu0 %v3173
  %v3226 = vpop.f32.mrf.mxu0
  %v3227 = vadd.f32 %v3213, %v3226
  %v3228 = vpop.f32.mrf.mxu0
  %v3229 = vadd.f32 %v3215, %v3228
  %3230 = vdwg.mxu0
  %v3231 = vpack.c.bf16 %v3201, %v3199
  %v3232 = vpack.c.bf16 %v3229, %v3227
  %v3233 = vunpack.c.l.bf16 %v3231
  %v3234 = vunpack.c.l.bf16 %v3232
  %v3235 = vunpack.c.h.bf16 %v3231
  %v3236 = vunpack.c.h.bf16 %v3232
  %v3237 = vtanh.pop %v3233
  %v3238 = vtanh.pop %v3234
  %v3239 = vtanh.pop %v3235
  %v3240 = vtanh.pop %v3236
  %v3241 = vpack.c.bf16 %v3239, %v3237
  %v3242 = vpack.c.bf16 %v3240, %v3238
  %v3243 = vld [vmem:[%s3 + $0x1e4] sm:$0xf]
  %v3244 = vld [vmem:[%s3 + $0x1ec] sm:$0xf]
  %v3245 = vld [vmem:[%s3 + $0x1f4] sm:$0xf]
  %v3246 = vld [vmem:[%s3 + $0x1fc] sm:$0xf]
  %v3247 = vld [vmem:[%s3 + $0x204] sm:$0xf]
  %v3248 = vld [vmem:[%s3 + $0x20c] sm:$0xf]
  %v3249 = vld [vmem:[%s3 + $0x214] sm:$0xf]
  %v3250 = vld [vmem:[%s3 + $0x21c] sm:$0xf]
  %v3251 = vld [vmem:[%s3 + $0x224] sm:$0xf]
  %v3252 = vld [vmem:[%s3 + $0x22c] sm:$0xf]
  %v3253 = vld [vmem:[%s3 + $0x234] sm:$0xf]
  %v3254 = vld [vmem:[%s3 + $0x23c] sm:$0xf]
  %v3255 = vld [vmem:[%s3 + $0x244] sm:$0xf]
  %v3256 = vld [vmem:[%s3 + $0x24c] sm:$0xf]
  %v3257 = vld [vmem:[%s3 + $0x254] sm:$0xf]
  %v3258 = vld [vmem:[%s3 + $0x25c] sm:$0xf]
  %v3259 = vld [vmem:[%s3 + $0x264] sm:$0xf]
  %v3260 = vld [vmem:[%s3 + $0x26c] sm:$0xf]
  %v3261 = vld [vmem:[%s3 + $0x274] sm:$0xf]
  %v3262 = vld [vmem:[%s3 + $0x27c] sm:$0xf]
  %v3283 = vunpack.c.l.b16 %v3243
  %v3284 = vunpack.c.l.b16 %v3244
  %v3285 = vunpack.c.l.b16 %v3245
  %v3286 = vunpack.c.l.b16 %v3246
  %v3287 = vunpack.c.l.b16 %v3247
  %v3288 = vunpack.c.l.b16 %v3248
  %v3289 = vunpack.c.l.b16 %v3249
  %v3290 = vunpack.c.l.b16 %v3250
  %v3291 = vunpack.c.l.b16 %v3251
  %v3292 = vunpack.c.l.b16 %v3252
  %v3293 = vunpack.c.l.b16 %v3253
  %v3294 = vunpack.c.l.b16 %v3254
  %v3295 = vunpack.c.l.b16 %v3255
  %v3296 = vunpack.c.l.b16 %v3256
  %v3297 = vunpack.c.l.b16 %v3257
  %v3298 = vunpack.c.l.b16 %v3258
  %v3299 = vunpack.c.l.b16 %v3259
  %v3300 = vunpack.c.l.b16 %v3260
  %v3301 = vunpack.c.l.b16 %v3261
  %v3302 = vunpack.c.l.b16 %v3262
  %v3303 = vpack.c.b16 %v3284, %v3283
  %v3304 = vpack.c.b16 %v3286, %v3285
  %v3305 = vpack.c.b16 %v3288, %v3287
  %v3306 = vpack.c.b16 %v3290, %v3289
  %v3307 = vpack.c.b16 %v3292, %v3291
  %v3308 = vpack.c.b16 %v3294, %v3293
  %v3309 = vpack.c.b16 %v3296, %v3295
  %v3310 = vpack.c.b16 %v3298, %v3297
  %v3311 = vpack.c.b16 %v3300, %v3299
  %v3312 = vpack.c.b16 %v3302, %v3301
  %v3324 = vsel %vm493, %v3242, 0
  %3326 = vmatpush.bf16.msra.mxu0 %v3310
  %3327 = vmatpush.bf16.msra.mxu0 %v3309
  %3328 = vmatpush.bf16.msra.mxu0 %v3308
  %3329 = vmatpush.bf16.msra.mxu0 %v3307
  %3330 = vmatpush.bf16.msra.mxu0 %v3306
  %3331 = vmatpush.bf16.msra.mxu0 %v3305
  %3332 = vmatpush.bf16.msra.mxu0 %v3304
  %3333 = vmatpush.bf16.msra.mxu0 %v3303
  %3334 = vmatmul.bf16.gmra.mxu0 %v3241
  %v3335 = vpop.f32.mrf.mxu0
  %v3336 = vadd.f32 0.0, %v3335
  %v3337 = vpop.f32.mrf.mxu0
  %v3338 = vadd.f32 0.0, %v3337
  %3339 = vdwg.mxu0
  %3340 = vmatpush.bf16.msra.mxu0 0
  %3341 = vmatpush.bf16.msra.mxu0 0
  %3342 = vmatpush.bf16.msra.mxu0 0
  %3343 = vmatpush.bf16.msra.mxu0 0
  %3344 = vmatpush.bf16.msra.mxu0 0
  %3345 = vmatpush.bf16.msra.mxu0 0
  %3346 = vmatpush.bf16.msra.mxu0 %v3312
  %3347 = vmatpush.bf16.msra.mxu0 %v3311
  %3348 = vmatmul.bf16.gmra.mxu0 %v3324
  %v3349 = vpop.f32.mrf.mxu0
  %v3350 = vadd.f32 %v3336, %v3349
  %v3351 = vpop.f32.mrf.mxu0
  %v3352 = vadd.f32 %v3338, %v3351
  %3353 = vdwg.mxu0
  %v3354 = vadd.f32 %v3158, %v3350
  %v3355 = vadd.f32 %v3159, %v3352
  %s3356 = scalar_lea.vmem %s1, 64
  %v3357 = vld [vmem:[%s3356] sm:$0xff]
  %v3358 = vld [vmem:[%s3356 + $0x8] sm:$0xff]
  %v3361 = vunpack.c.l.b16 %v3357
  %v3362 = vunpack.c.h.b16 %v3357
  %v3363 = vunpack.c.l.b16 %v3358
  %v3364 = vunpack.c.h.b16 %v3358
  %v3365 = vpack.c.b16 %v3363, %v3361
  %v3366 = vpack.c.b16 %v3364, %v3362
  %v3369 = vsel %vm231, %v3366, 0
  %3371 = vmatpush.bf16.msra.mxu0 %v2534
  %3372 = vmatpush.bf16.msra.mxu0 %v2532
  %3373 = vmatpush.bf16.msra.mxu0 %v2530
  %3374 = vmatpush.bf16.msra.mxu0 %v2528
  %3375 = vmatpush.bf16.msra.mxu0 %v2526
  %3376 = vmatpush.bf16.msra.mxu0 %v2524
  %3377 = vmatpush.bf16.msra.mxu0 %v2522
  %3378 = vmatpush.bf16.msra.mxu0 %v2520
  %3379 = vmatmul.bf16.gmra.mxu0 %v3365
  %v3380 = vpop.f32.mrf.mxu0
  %v3381 = vadd.f32 %v2409, %v3380
  %v3382 = vpop.f32.mrf.mxu0
  %v3383 = vadd.f32 %v2409, %v3382
  %3384 = vdwg.mxu0
  %3385 = vmatpush.bf16.msra.mxu0 %v2586
  %3386 = vmatpush.bf16.msra.mxu0 %v2548
  %3387 = vmatpush.bf16.msra.mxu0 %v2546
  %3388 = vmatpush.bf16.msra.mxu0 %v2544
  %3389 = vmatpush.bf16.msra.mxu0 %v2542
  %3390 = vmatpush.bf16.msra.mxu0 %v2540
  %3391 = vmatpush.bf16.msra.mxu0 %v2538
  %3392 = vmatpush.bf16.msra.mxu0 %v2536
  %3393 = vmatmul.bf16.gmra.mxu0 %v3369
  %v3394 = vpop.f32.mrf.mxu0
  %v3395 = vadd.f32 %v3381, %v3394
  %v3396 = vpop.f32.mrf.mxu0
  %v3397 = vadd.f32 %v3383, %v3396
  %3398 = vdwg.mxu0
  %3399 = vmatpush.bf16.msra.mxu0 %v2535
  %3400 = vmatpush.bf16.msra.mxu0 %v2533
  %3401 = vmatpush.bf16.msra.mxu0 %v2531
  %3402 = vmatpush.bf16.msra.mxu0 %v2529
  %3403 = vmatpush.bf16.msra.mxu0 %v2527
  %3404 = vmatpush.bf16.msra.mxu0 %v2525
  %3405 = vmatpush.bf16.msra.mxu0 %v2523
  %3406 = vmatpush.bf16.msra.mxu0 %v2521
  %3407 = vmatmul.bf16.gmra.mxu0 %v3365
  %v3408 = vpop.f32.mrf.mxu0
  %v3409 = vadd.f32 %v2410, %v3408
  %v3410 = vpop.f32.mrf.mxu0
  %v3411 = vadd.f32 %v2410, %v3410
  %3412 = vdwg.mxu0
  %3413 = vmatpush.bf16.msra.mxu0 %v2589
  %3414 = vmatpush.bf16.msra.mxu0 %v2549
  %3415 = vmatpush.bf16.msra.mxu0 %v2547
  %3416 = vmatpush.bf16.msra.mxu0 %v2545
  %3417 = vmatpush.bf16.msra.mxu0 %v2543
  %3418 = vmatpush.bf16.msra.mxu0 %v2541
  %3419 = vmatpush.bf16.msra.mxu0 %v2539
  %3420 = vmatpush.bf16.msra.mxu0 %v2537
  %3421 = vmatmul.bf16.gmra.mxu0 %v3369
  %v3422 = vpop.f32.mrf.mxu0
  %v3423 = vadd.f32 %v3409, %v3422
  %v3424 = vpop.f32.mrf.mxu0
  %v3425 = vadd.f32 %v3411, %v3424
  %3426 = vdwg.mxu0
  %v3427 = vpack.c.bf16 %v3397, %v3395
  %v3428 = vpack.c.bf16 %v3425, %v3423
  %v3429 = vunpack.c.l.bf16 %v3427
  %v3430 = vunpack.c.l.bf16 %v3428
  %v3431 = vunpack.c.h.bf16 %v3427
  %v3432 = vunpack.c.h.bf16 %v3428
  %v3433 = vtanh.pop %v3429
  %v3434 = vtanh.pop %v3430
  %v3435 = vtanh.pop %v3431
  %v3436 = vtanh.pop %v3432
  %v3437 = vpack.c.bf16 %v3435, %v3433
  %v3438 = vpack.c.bf16 %v3436, %v3434
  %v3439 = vld [vmem:[%s3 + $0x284] sm:$0xf]
  %v3440 = vld [vmem:[%s3 + $0x28c] sm:$0xf]
  %v3441 = vld [vmem:[%s3 + $0x294] sm:$0xf]
  %v3442 = vld [vmem:[%s3 + $0x29c] sm:$0xf]
  %v3443 = vld [vmem:[%s3 + $0x2a4] sm:$0xf]
  %v3444 = vld [vmem:[%s3 + $0x2ac] sm:$0xf]
  %v3445 = vld [vmem:[%s3 + $0x2b4] sm:$0xf]
  %v3446 = vld [vmem:[%s3 + $0x2bc] sm:$0xf]
  %v3447 = vld [vmem:[%s3 + $0x2c4] sm:$0xf]
  %v3448 = vld [vmem:[%s3 + $0x2cc] sm:$0xf]
  %v3449 = vld [vmem:[%s3 + $0x2d4] sm:$0xf]
  %v3450 = vld [vmem:[%s3 + $0x2dc] sm:$0xf]
  %v3451 = vld [vmem:[%s3 + $0x2e4] sm:$0xf]
  %v3452 = vld [vmem:[%s3 + $0x2ec] sm:$0xf]
  %v3453 = vld [vmem:[%s3 + $0x2f4] sm:$0xf]
  %v3454 = vld [vmem:[%s3 + $0x2fc] sm:$0xf]
  %v3455 = vld [vmem:[%s3 + $0x304] sm:$0xf]
  %v3456 = vld [vmem:[%s3 + $0x30c] sm:$0xf]
  %v3457 = vld [vmem:[%s3 + $0x314] sm:$0xf]
  %v3458 = vld [vmem:[%s3 + $0x31c] sm:$0xf]
  %v3479 = vunpack.c.l.b16 %v3439
  %v3480 = vunpack.c.l.b16 %v3440
  %v3481 = vunpack.c.l.b16 %v3441
  %v3482 = vunpack.c.l.b16 %v3442
  %v3483 = vunpack.c.l.b16 %v3443
  %v3484 = vunpack.c.l.b16 %v3444
  %v3485 = vunpack.c.l.b16 %v3445
  %v3486 = vunpack.c.l.b16 %v3446
  %v3487 = vunpack.c.l.b16 %v3447
  %v3488 = vunpack.c.l.b16 %v3448
  %v3489 = vunpack.c.l.b16 %v3449
  %v3490 = vunpack.c.l.b16 %v3450
  %v3491 = vunpack.c.l.b16 %v3451
  %v3492 = vunpack.c.l.b16 %v3452
  %v3493 = vunpack.c.l.b16 %v3453
  %v3494 = vunpack.c.l.b16 %v3454
  %v3495 = vunpack.c.l.b16 %v3455
  %v3496 = vunpack.c.l.b16 %v3456
  %v3497 = vunpack.c.l.b16 %v3457
  %v3498 = vunpack.c.l.b16 %v3458
  %v3499 = vpack.c.b16 %v3480, %v3479
  %v3500 = vpack.c.b16 %v3482, %v3481
  %v3501 = vpack.c.b16 %v3484, %v3483
  %v3502 = vpack.c.b16 %v3486, %v3485
  %v3503 = vpack.c.b16 %v3488, %v3487
  %v3504 = vpack.c.b16 %v3490, %v3489
  %v3505 = vpack.c.b16 %v3492, %v3491
  %v3506 = vpack.c.b16 %v3494, %v3493
  %v3507 = vpack.c.b16 %v3496, %v3495
  %v3508 = vpack.c.b16 %v3498, %v3497
  %v3520 = vsel %vm493, %v3438, 0
  %3522 = vmatpush.bf16.msra.mxu0 %v3506
  %3523 = vmatpush.bf16.msra.mxu0 %v3505
  %3524 = vmatpush.bf16.msra.mxu0 %v3504
  %3525 = vmatpush.bf16.msra.mxu0 %v3503
  %3526 = vmatpush.bf16.msra.mxu0 %v3502
  %3527 = vmatpush.bf16.msra.mxu0 %v3501
  %3528 = vmatpush.bf16.msra.mxu0 %v3500
  %3529 = vmatpush.bf16.msra.mxu0 %v3499
  %3530 = vmatmul.bf16.gmra.mxu0 %v3437
  %v3531 = vpop.f32.mrf.mxu0
  %v3532 = vadd.f32 0.0, %v3531
  %v3533 = vpop.f32.mrf.mxu0
  %v3534 = vadd.f32 0.0, %v3533
  %3535 = vdwg.mxu0
  %3536 = vmatpush.bf16.msra.mxu0 0
  %3537 = vmatpush.bf16.msra.mxu0 0
  %3538 = vmatpush.bf16.msra.mxu0 0
  %3539 = vmatpush.bf16.msra.mxu0 0
  %3540 = vmatpush.bf16.msra.mxu0 0
  %3541 = vmatpush.bf16.msra.mxu0 0
  %3542 = vmatpush.bf16.msra.mxu0 %v3508
  %3543 = vmatpush.bf16.msra.mxu0 %v3507
  %3544 = vmatmul.bf16.gmra.mxu0 %v3520
  %v3545 = vpop.f32.mrf.mxu0
  %v3546 = vadd.f32 %v3532, %v3545
  %v3547 = vpop.f32.mrf.mxu0
  %v3548 = vadd.f32 %v3534, %v3547
  %3549 = vdwg.mxu0
  %v3550 = vadd.f32 %v3354, %v3546
  %v3551 = vadd.f32 %v3355, %v3548
  %s3552 = scalar_lea.vmem %s1, 80
  %v3553 = vld [vmem:[%s3552] sm:$0xff]
  %v3554 = vld [vmem:[%s3552 + $0x8] sm:$0xff]
  %v3557 = vunpack.c.l.b16 %v3553
  %v3558 = vunpack.c.h.b16 %v3553
  %v3559 = vunpack.c.l.b16 %v3554
  %v3560 = vunpack.c.h.b16 %v3554
  %v3561 = vpack.c.b16 %v3559, %v3557
  %v3562 = vpack.c.b16 %v3560, %v3558
  %v3565 = vsel %vm231, %v3562, 0
  %3567 = vmatpush.bf16.msra.mxu0 %v2534
  %3568 = vmatpush.bf16.msra.mxu0 %v2532
  %3569 = vmatpush.bf16.msra.mxu0 %v2530
  %3570 = vmatpush.bf16.msra.mxu0 %v2528
  %3571 = vmatpush.bf16.msra.mxu0 %v2526
  %3572 = vmatpush.bf16.msra.mxu0 %v2524
  %3573 = vmatpush.bf16.msra.mxu0 %v2522
  %3574 = vmatpush.bf16.msra.mxu0 %v2520
  %3575 = vmatmul.bf16.gmra.mxu0 %v3561
  %v3576 = vpop.f32.mrf.mxu0
  %v3577 = vadd.f32 %v2409, %v3576
  %v3578 = vpop.f32.mrf.mxu0
  %v3579 = vadd.f32 %v2409, %v3578
  %3580 = vdwg.mxu0
  %3581 = vmatpush.bf16.msra.mxu0 %v2586
  %3582 = vmatpush.bf16.msra.mxu0 %v2548
  %3583 = vmatpush.bf16.msra.mxu0 %v2546
  %3584 = vmatpush.bf16.msra.mxu0 %v2544
  %3585 = vmatpush.bf16.msra.mxu0 %v2542
  %3586 = vmatpush.bf16.msra.mxu0 %v2540
  %3587 = vmatpush.bf16.msra.mxu0 %v2538
  %3588 = vmatpush.bf16.msra.mxu0 %v2536
  %3589 = vmatmul.bf16.gmra.mxu0 %v3565
  %v3590 = vpop.f32.mrf.mxu0
  %v3591 = vadd.f32 %v3577, %v3590
  %v3592 = vpop.f32.mrf.mxu0
  %v3593 = vadd.f32 %v3579, %v3592
  %3594 = vdwg.mxu0
  %3595 = vmatpush.bf16.msra.mxu0 %v2535
  %3596 = vmatpush.bf16.msra.mxu0 %v2533
  %3597 = vmatpush.bf16.msra.mxu0 %v2531
  %3598 = vmatpush.bf16.msra.mxu0 %v2529
  %3599 = vmatpush.bf16.msra.mxu0 %v2527
  %3600 = vmatpush.bf16.msra.mxu0 %v2525
  %3601 = vmatpush.bf16.msra.mxu0 %v2523
  %3602 = vmatpush.bf16.msra.mxu0 %v2521
  %3603 = vmatmul.bf16.gmra.mxu0 %v3561
  %v3604 = vpop.f32.mrf.mxu0
  %v3605 = vadd.f32 %v2410, %v3604
  %v3606 = vpop.f32.mrf.mxu0
  %v3607 = vadd.f32 %v2410, %v3606
  %3608 = vdwg.mxu0
  %3609 = vmatpush.bf16.msra.mxu0 %v2589
  %3610 = vmatpush.bf16.msra.mxu0 %v2549
  %3611 = vmatpush.bf16.msra.mxu0 %v2547
  %3612 = vmatpush.bf16.msra.mxu0 %v2545
  %3613 = vmatpush.bf16.msra.mxu0 %v2543
  %3614 = vmatpush.bf16.msra.mxu0 %v2541
  %3615 = vmatpush.bf16.msra.mxu0 %v2539
  %3616 = vmatpush.bf16.msra.mxu0 %v2537
  %3617 = vmatmul.bf16.gmra.mxu0 %v3565
  %v3618 = vpop.f32.mrf.mxu0
  %v3619 = vadd.f32 %v3605, %v3618
  %v3620 = vpop.f32.mrf.mxu0
  %v3621 = vadd.f32 %v3607, %v3620
  %3622 = vdwg.mxu0
  %v3623 = vpack.c.bf16 %v3593, %v3591
  %v3624 = vpack.c.bf16 %v3621, %v3619
  %v3625 = vunpack.c.l.bf16 %v3623
  %v3626 = vunpack.c.l.bf16 %v3624
  %v3627 = vunpack.c.h.bf16 %v3623
  %v3628 = vunpack.c.h.bf16 %v3624
  %v3629 = vtanh.pop %v3625
  %v3630 = vtanh.pop %v3626
  %v3631 = vtanh.pop %v3627
  %v3632 = vtanh.pop %v3628
  %v3633 = vpack.c.bf16 %v3631, %v3629
  %v3634 = vpack.c.bf16 %v3632, %v3630
  %v3635 = vld [vmem:[%s3 + $0x324] sm:$0xf]
  %v3636 = vld [vmem:[%s3 + $0x32c] sm:$0xf]
  %v3637 = vld [vmem:[%s3 + $0x334] sm:$0xf]
  %v3638 = vld [vmem:[%s3 + $0x33c] sm:$0xf]
  %v3639 = vld [vmem:[%s3 + $0x344] sm:$0xf]
  %v3640 = vld [vmem:[%s3 + $0x34c] sm:$0xf]
  %v3641 = vld [vmem:[%s3 + $0x354] sm:$0xf]
  %v3642 = vld [vmem:[%s3 + $0x35c] sm:$0xf]
  %v3643 = vld [vmem:[%s3 + $0x364] sm:$0xf]
  %v3644 = vld [vmem:[%s3 + $0x36c] sm:$0xf]
  %v3645 = vld [vmem:[%s3 + $0x374] sm:$0xf]
  %v3646 = vld [vmem:[%s3 + $0x37c] sm:$0xf]
  %v3647 = vld [vmem:[%s3 + $0x384] sm:$0xf]
  %v3648 = vld [vmem:[%s3 + $0x38c] sm:$0xf]
  %v3649 = vld [vmem:[%s3 + $0x394] sm:$0xf]
  %v3650 = vld [vmem:[%s3 + $0x39c] sm:$0xf]
  %v3651 = vld [vmem:[%s3 + $0x3a4] sm:$0xf]
  %v3652 = vld [vmem:[%s3 + $0x3ac] sm:$0xf]
  %v3653 = vld [vmem:[%s3 + $0x3b4] sm:$0xf]
  %v3654 = vld [vmem:[%s3 + $0x3bc] sm:$0xf]
  %v3675 = vunpack.c.l.b16 %v3635
  %v3676 = vunpack.c.l.b16 %v3636
  %v3677 = vunpack.c.l.b16 %v3637
  %v3678 = vunpack.c.l.b16 %v3638
  %v3679 = vunpack.c.l.b16 %v3639
  %v3680 = vunpack.c.l.b16 %v3640
  %v3681 = vunpack.c.l.b16 %v3641
  %v3682 = vunpack.c.l.b16 %v3642
  %v3683 = vunpack.c.l.b16 %v3643
  %v3684 = vunpack.c.l.b16 %v3644
  %v3685 = vunpack.c.l.b16 %v3645
  %v3686 = vunpack.c.l.b16 %v3646
  %v3687 = vunpack.c.l.b16 %v3647
  %v3688 = vunpack.c.l.b16 %v3648
  %v3689 = vunpack.c.l.b16 %v3649
  %v3690 = vunpack.c.l.b16 %v3650
  %v3691 = vunpack.c.l.b16 %v3651
  %v3692 = vunpack.c.l.b16 %v3652
  %v3693 = vunpack.c.l.b16 %v3653
  %v3694 = vunpack.c.l.b16 %v3654
  %v3695 = vpack.c.b16 %v3676, %v3675
  %v3696 = vpack.c.b16 %v3678, %v3677
  %v3697 = vpack.c.b16 %v3680, %v3679
  %v3698 = vpack.c.b16 %v3682, %v3681
  %v3699 = vpack.c.b16 %v3684, %v3683
  %v3700 = vpack.c.b16 %v3686, %v3685
  %v3701 = vpack.c.b16 %v3688, %v3687
  %v3702 = vpack.c.b16 %v3690, %v3689
  %v3703 = vpack.c.b16 %v3692, %v3691
  %v3704 = vpack.c.b16 %v3694, %v3693
  %v3716 = vsel %vm493, %v3634, 0
  %3718 = vmatpush.bf16.msra.mxu0 %v3702
  %3719 = vmatpush.bf16.msra.mxu0 %v3701
  %3720 = vmatpush.bf16.msra.mxu0 %v3700
  %3721 = vmatpush.bf16.msra.mxu0 %v3699
  %3722 = vmatpush.bf16.msra.mxu0 %v3698
  %3723 = vmatpush.bf16.msra.mxu0 %v3697
  %3724 = vmatpush.bf16.msra.mxu0 %v3696
  %3725 = vmatpush.bf16.msra.mxu0 %v3695
  %3726 = vmatmul.bf16.gmra.mxu0 %v3633
  %v3727 = vpop.f32.mrf.mxu0
  %v3728 = vadd.f32 0.0, %v3727
  %v3729 = vpop.f32.mrf.mxu0
  %v3730 = vadd.f32 0.0, %v3729
  %3731 = vdwg.mxu0
  %3732 = vmatpush.bf16.msra.mxu0 0
  %3733 = vmatpush.bf16.msra.mxu0 0
  %3734 = vmatpush.bf16.msra.mxu0 0
  %3735 = vmatpush.bf16.msra.mxu0 0
  %3736 = vmatpush.bf16.msra.mxu0 0
  %3737 = vmatpush.bf16.msra.mxu0 0
  %3738 = vmatpush.bf16.msra.mxu0 %v3704
  %3739 = vmatpush.bf16.msra.mxu0 %v3703
  %3740 = vmatmul.bf16.gmra.mxu0 %v3716
  %v3741 = vpop.f32.mrf.mxu0
  %v3742 = vadd.f32 %v3728, %v3741
  %v3743 = vpop.f32.mrf.mxu0
  %v3744 = vadd.f32 %v3730, %v3743
  %3745 = vdwg.mxu0
  %v3746 = vadd.f32 %v3550, %v3742
  %v3747 = vadd.f32 %v3551, %v3744
  %s3748 = scalar_lea.vmem %s1, 96
  %v3749 = vld [vmem:[%s3748] sm:$0xff]
  %v3750 = vld [vmem:[%s3748 + $0x8] sm:$0xff]
  %v3753 = vunpack.c.l.b16 %v3749
  %v3754 = vunpack.c.h.b16 %v3749
  %v3755 = vunpack.c.l.b16 %v3750
  %v3756 = vunpack.c.h.b16 %v3750
  %v3757 = vpack.c.b16 %v3755, %v3753
  %v3758 = vpack.c.b16 %v3756, %v3754
  %v3761 = vsel %vm231, %v3758, 0
  %3763 = vmatpush.bf16.msra.mxu0 %v2534
  %3764 = vmatpush.bf16.msra.mxu0 %v2532
  %3765 = vmatpush.bf16.msra.mxu0 %v2530
  %3766 = vmatpush.bf16.msra.mxu0 %v2528
  %3767 = vmatpush.bf16.msra.mxu0 %v2526
  %3768 = vmatpush.bf16.msra.mxu0 %v2524
  %3769 = vmatpush.bf16.msra.mxu0 %v2522
  %3770 = vmatpush.bf16.msra.mxu0 %v2520
  %3771 = vmatmul.bf16.gmra.mxu0 %v3757
  %v3772 = vpop.f32.mrf.mxu0
  %v3773 = vadd.f32 %v2409, %v3772
  %v3774 = vpop.f32.mrf.mxu0
  %v3775 = vadd.f32 %v2409, %v3774
  %3776 = vdwg.mxu0
  %3777 = vmatpush.bf16.msra.mxu0 %v2586
  %3778 = vmatpush.bf16.msra.mxu0 %v2548
  %3779 = vmatpush.bf16.msra.mxu0 %v2546
  %3780 = vmatpush.bf16.msra.mxu0 %v2544
  %3781 = vmatpush.bf16.msra.mxu0 %v2542
  %3782 = vmatpush.bf16.msra.mxu0 %v2540
  %3783 = vmatpush.bf16.msra.mxu0 %v2538
  %3784 = vmatpush.bf16.msra.mxu0 %v2536
  %3785 = vmatmul.bf16.gmra.mxu0 %v3761
  %v3786 = vpop.f32.mrf.mxu0
  %v3787 = vadd.f32 %v3773, %v3786
  %v3788 = vpop.f32.mrf.mxu0
  %v3789 = vadd.f32 %v3775, %v3788
  %3790 = vdwg.mxu0
  %3791 = vmatpush.bf16.msra.mxu0 %v2535
  %3792 = vmatpush.bf16.msra.mxu0 %v2533
  %3793 = vmatpush.bf16.msra.mxu0 %v2531
  %3794 = vmatpush.bf16.msra.mxu0 %v2529
  %3795 = vmatpush.bf16.msra.mxu0 %v2527
  %3796 = vmatpush.bf16.msra.mxu0 %v2525
  %3797 = vmatpush.bf16.msra.mxu0 %v2523
  %3798 = vmatpush.bf16.msra.mxu0 %v2521
  %3799 = vmatmul.bf16.gmra.mxu0 %v3757
  %v3800 = vpop.f32.mrf.mxu0
  %v3801 = vadd.f32 %v2410, %v3800
  %v3802 = vpop.f32.mrf.mxu0
  %v3803 = vadd.f32 %v2410, %v3802
  %3804 = vdwg.mxu0
  %3805 = vmatpush.bf16.msra.mxu0 %v2589
  %3806 = vmatpush.bf16.msra.mxu0 %v2549
  %3807 = vmatpush.bf16.msra.mxu0 %v2547
  %3808 = vmatpush.bf16.msra.mxu0 %v2545
  %3809 = vmatpush.bf16.msra.mxu0 %v2543
  %3810 = vmatpush.bf16.msra.mxu0 %v2541
  %3811 = vmatpush.bf16.msra.mxu0 %v2539
  %3812 = vmatpush.bf16.msra.mxu0 %v2537
  %3813 = vmatmul.bf16.gmra.mxu0 %v3761
  %v3814 = vpop.f32.mrf.mxu0
  %v3815 = vadd.f32 %v3801, %v3814
  %v3816 = vpop.f32.mrf.mxu0
  %v3817 = vadd.f32 %v3803, %v3816
  %3818 = vdwg.mxu0
  %v3819 = vpack.c.bf16 %v3789, %v3787
  %v3820 = vpack.c.bf16 %v3817, %v3815
  %v3821 = vunpack.c.l.bf16 %v3819
  %v3822 = vunpack.c.l.bf16 %v3820
  %v3823 = vunpack.c.h.bf16 %v3819
  %v3824 = vunpack.c.h.bf16 %v3820
  %v3825 = vtanh.pop %v3821
  %v3826 = vtanh.pop %v3822
  %v3827 = vtanh.pop %v3823
  %v3828 = vtanh.pop %v3824
  %v3829 = vpack.c.bf16 %v3827, %v3825
  %v3830 = vpack.c.bf16 %v3828, %v3826
  %v3831 = vld [vmem:[%s3 + $0x3c4] sm:$0xf]
  %v3832 = vld [vmem:[%s3 + $0x3cc] sm:$0xf]
  %v3833 = vld [vmem:[%s3 + $0x3d4] sm:$0xf]
  %v3834 = vld [vmem:[%s3 + $0x3dc] sm:$0xf]
  %v3835 = vld [vmem:[%s3 + $0x3e4] sm:$0xf]
  %v3836 = vld [vmem:[%s3 + $0x3ec] sm:$0xf]
  %v3837 = vld [vmem:[%s3 + $0x3f4] sm:$0xf]
  %v3838 = vld [vmem:[%s3 + $0x3fc] sm:$0xf]
  %v3839 = vld [vmem:[%s3 + $0x404] sm:$0xf]
  %v3840 = vld [vmem:[%s3 + $0x40c] sm:$0xf]
  %v3841 = vld [vmem:[%s3 + $0x414] sm:$0xf]
  %v3842 = vld [vmem:[%s3 + $0x41c] sm:$0xf]
  %v3843 = vld [vmem:[%s3 + $0x424] sm:$0xf]
  %v3844 = vld [vmem:[%s3 + $0x42c] sm:$0xf]
  %v3845 = vld [vmem:[%s3 + $0x434] sm:$0xf]
  %v3846 = vld [vmem:[%s3 + $0x43c] sm:$0xf]
  %v3847 = vld [vmem:[%s3 + $0x444] sm:$0xf]
  %v3848 = vld [vmem:[%s3 + $0x44c] sm:$0xf]
  %v3849 = vld [vmem:[%s3 + $0x454] sm:$0xf]
  %v3850 = vld [vmem:[%s3 + $0x45c] sm:$0xf]
  %v3871 = vunpack.c.l.b16 %v3831
  %v3872 = vunpack.c.l.b16 %v3832
  %v3873 = vunpack.c.l.b16 %v3833
  %v3874 = vunpack.c.l.b16 %v3834
  %v3875 = vunpack.c.l.b16 %v3835
  %v3876 = vunpack.c.l.b16 %v3836
  %v3877 = vunpack.c.l.b16 %v3837
  %v3878 = vunpack.c.l.b16 %v3838
  %v3879 = vunpack.c.l.b16 %v3839
  %v3880 = vunpack.c.l.b16 %v3840
  %v3881 = vunpack.c.l.b16 %v3841
  %v3882 = vunpack.c.l.b16 %v3842
  %v3883 = vunpack.c.l.b16 %v3843
  %v3884 = vunpack.c.l.b16 %v3844
  %v3885 = vunpack.c.l.b16 %v3845
  %v3886 = vunpack.c.l.b16 %v3846
  %v3887 = vunpack.c.l.b16 %v3847
  %v3888 = vunpack.c.l.b16 %v3848
  %v3889 = vunpack.c.l.b16 %v3849
  %v3890 = vunpack.c.l.b16 %v3850
  %v3891 = vpack.c.b16 %v3872, %v3871
  %v3892 = vpack.c.b16 %v3874, %v3873
  %v3893 = vpack.c.b16 %v3876, %v3875
  %v3894 = vpack.c.b16 %v3878, %v3877
  %v3895 = vpack.c.b16 %v3880, %v3879
  %v3896 = vpack.c.b16 %v3882, %v3881
  %v3897 = vpack.c.b16 %v3884, %v3883
  %v3898 = vpack.c.b16 %v3886, %v3885
  %v3899 = vpack.c.b16 %v3888, %v3887
  %v3900 = vpack.c.b16 %v3890, %v3889
  %v3912 = vsel %vm493, %v3830, 0
  %3914 = vmatpush.bf16.msra.mxu0 %v3898
  %3915 = vmatpush.bf16.msra.mxu0 %v3897
  %3916 = vmatpush.bf16.msra.mxu0 %v3896
  %3917 = vmatpush.bf16.msra.mxu0 %v3895
  %3918 = vmatpush.bf16.msra.mxu0 %v3894
  %3919 = vmatpush.bf16.msra.mxu0 %v3893
  %3920 = vmatpush.bf16.msra.mxu0 %v3892
  %3921 = vmatpush.bf16.msra.mxu0 %v3891
  %3922 = vmatmul.bf16.gmra.mxu0 %v3829
  %v3923 = vpop.f32.mrf.mxu0
  %v3924 = vadd.f32 0.0, %v3923
  %v3925 = vpop.f32.mrf.mxu0
  %v3926 = vadd.f32 0.0, %v3925
  %3927 = vdwg.mxu0
  %3928 = vmatpush.bf16.msra.mxu0 0
  %3929 = vmatpush.bf16.msra.mxu0 0
  %3930 = vmatpush.bf16.msra.mxu0 0
  %3931 = vmatpush.bf16.msra.mxu0 0
  %3932 = vmatpush.bf16.msra.mxu0 0
  %3933 = vmatpush.bf16.msra.mxu0 0
  %3934 = vmatpush.bf16.msra.mxu0 %v3900
  %3935 = vmatpush.bf16.msra.mxu0 %v3899
  %3936 = vmatmul.bf16.gmra.mxu0 %v3912
  %v3937 = vpop.f32.mrf.mxu0
  %v3938 = vadd.f32 %v3924, %v3937
  %v3939 = vpop.f32.mrf.mxu0
  %v3940 = vadd.f32 %v3926, %v3939
  %3941 = vdwg.mxu0
  %v3942 = vadd.f32 %v3746, %v3938
  %v3943 = vadd.f32 %v3747, %v3940
  %s3944 = scalar_lea.vmem %s1, 112
  %v3945 = vld [vmem:[%s3944] sm:$0xff]
  %v3946 = vld [vmem:[%s3944 + $0x8] sm:$0xff]
  %v3949 = vunpack.c.l.b16 %v3945
  %v3950 = vunpack.c.h.b16 %v3945
  %v3951 = vunpack.c.l.b16 %v3946
  %v3952 = vunpack.c.h.b16 %v3946
  %v3953 = vpack.c.b16 %v3951, %v3949
  %v3954 = vpack.c.b16 %v3952, %v3950
  %v3957 = vsel %vm231, %v3954, 0
  %3959 = vmatpush.bf16.msra.mxu0 %v2534
  %3960 = vmatpush.bf16.msra.mxu0 %v2532
  %3961 = vmatpush.bf16.msra.mxu0 %v2530
  %3962 = vmatpush.bf16.msra.mxu0 %v2528
  %3963 = vmatpush.bf16.msra.mxu0 %v2526
  %3964 = vmatpush.bf16.msra.mxu0 %v2524
  %3965 = vmatpush.bf16.msra.mxu0 %v2522
  %3966 = vmatpush.bf16.msra.mxu0 %v2520
  %3967 = vmatmul.bf16.gmra.mxu0 %v3953
  %v3968 = vpop.f32.mrf.mxu0
  %v3969 = vadd.f32 %v2409, %v3968
  %v3970 = vpop.f32.mrf.mxu0
  %v3971 = vadd.f32 %v2409, %v3970
  %3972 = vdwg.mxu0
  %3973 = vmatpush.bf16.msra.mxu0 %v2586
  %3974 = vmatpush.bf16.msra.mxu0 %v2548
  %3975 = vmatpush.bf16.msra.mxu0 %v2546
  %3976 = vmatpush.bf16.msra.mxu0 %v2544
  %3977 = vmatpush.bf16.msra.mxu0 %v2542
  %3978 = vmatpush.bf16.msra.mxu0 %v2540
  %3979 = vmatpush.bf16.msra.mxu0 %v2538
  %3980 = vmatpush.bf16.msra.mxu0 %v2536
  %3981 = vmatmul.bf16.gmra.mxu0 %v3957
  %v3982 = vpop.f32.mrf.mxu0
  %v3983 = vadd.f32 %v3969, %v3982
  %v3984 = vpop.f32.mrf.mxu0
  %v3985 = vadd.f32 %v3971, %v3984
  %3986 = vdwg.mxu0
  %3987 = vmatpush.bf16.msra.mxu0 %v2535
  %3988 = vmatpush.bf16.msra.mxu0 %v2533
  %3989 = vmatpush.bf16.msra.mxu0 %v2531
  %3990 = vmatpush.bf16.msra.mxu0 %v2529
  %3991 = vmatpush.bf16.msra.mxu0 %v2527
  %3992 = vmatpush.bf16.msra.mxu0 %v2525
  %3993 = vmatpush.bf16.msra.mxu0 %v2523
  %3994 = vmatpush.bf16.msra.mxu0 %v2521
  %3995 = vmatmul.bf16.gmra.mxu0 %v3953
  %v3996 = vpop.f32.mrf.mxu0
  %v3997 = vadd.f32 %v2410, %v3996
  %v3998 = vpop.f32.mrf.mxu0
  %v3999 = vadd.f32 %v2410, %v3998
  %4000 = vdwg.mxu0
  %4001 = vmatpush.bf16.msra.mxu0 %v2589
  %4002 = vmatpush.bf16.msra.mxu0 %v2549
  %4003 = vmatpush.bf16.msra.mxu0 %v2547
  %4004 = vmatpush.bf16.msra.mxu0 %v2545
  %4005 = vmatpush.bf16.msra.mxu0 %v2543
  %4006 = vmatpush.bf16.msra.mxu0 %v2541
  %4007 = vmatpush.bf16.msra.mxu0 %v2539
  %4008 = vmatpush.bf16.msra.mxu0 %v2537
  %4009 = vmatmul.bf16.gmra.mxu0 %v3957
  %v4010 = vpop.f32.mrf.mxu0
  %v4011 = vadd.f32 %v3997, %v4010
  %v4012 = vpop.f32.mrf.mxu0
  %v4013 = vadd.f32 %v3999, %v4012
  %4014 = vdwg.mxu0
  %v4015 = vpack.c.bf16 %v3985, %v3983
  %v4016 = vpack.c.bf16 %v4013, %v4011
  %v4017 = vunpack.c.l.bf16 %v4015
  %v4018 = vunpack.c.l.bf16 %v4016
  %v4019 = vunpack.c.h.bf16 %v4015
  %v4020 = vunpack.c.h.bf16 %v4016
  %v4021 = vtanh.pop %v4017
  %v4022 = vtanh.pop %v4018
  %v4023 = vtanh.pop %v4019
  %v4024 = vtanh.pop %v4020
  %v4025 = vpack.c.bf16 %v4023, %v4021
  %v4026 = vpack.c.bf16 %v4024, %v4022
  %v4027 = vld [vmem:[%s3 + $0x464] sm:$0xf]
  %v4028 = vld [vmem:[%s3 + $0x46c] sm:$0xf]
  %v4029 = vld [vmem:[%s3 + $0x474] sm:$0xf]
  %v4030 = vld [vmem:[%s3 + $0x47c] sm:$0xf]
  %v4031 = vld [vmem:[%s3 + $0x484] sm:$0xf]
  %v4032 = vld [vmem:[%s3 + $0x48c] sm:$0xf]
  %v4033 = vld [vmem:[%s3 + $0x494] sm:$0xf]
  %v4034 = vld [vmem:[%s3 + $0x49c] sm:$0xf]
  %v4035 = vld [vmem:[%s3 + $0x4a4] sm:$0xf]
  %v4036 = vld [vmem:[%s3 + $0x4ac] sm:$0xf]
  %v4037 = vld [vmem:[%s3 + $0x4b4] sm:$0xf]
  %v4038 = vld [vmem:[%s3 + $0x4bc] sm:$0xf]
  %v4039 = vld [vmem:[%s3 + $0x4c4] sm:$0xf]
  %v4040 = vld [vmem:[%s3 + $0x4cc] sm:$0xf]
  %v4041 = vld [vmem:[%s3 + $0x4d4] sm:$0xf]
  %v4042 = vld [vmem:[%s3 + $0x4dc] sm:$0xf]
  %v4043 = vld [vmem:[%s3 + $0x4e4] sm:$0xf]
  %v4044 = vld [vmem:[%s3 + $0x4ec] sm:$0xf]
  %v4045 = vld [vmem:[%s3 + $0x4f4] sm:$0xf]
  %v4046 = vld [vmem:[%s3 + $0x4fc] sm:$0xf]
  %v4067 = vunpack.c.l.b16 %v4027
  %v4068 = vunpack.c.l.b16 %v4028
  %v4069 = vunpack.c.l.b16 %v4029
  %v4070 = vunpack.c.l.b16 %v4030
  %v4071 = vunpack.c.l.b16 %v4031
  %v4072 = vunpack.c.l.b16 %v4032
  %v4073 = vunpack.c.l.b16 %v4033
  %v4074 = vunpack.c.l.b16 %v4034
  %v4075 = vunpack.c.l.b16 %v4035
  %v4076 = vunpack.c.l.b16 %v4036
  %v4077 = vunpack.c.l.b16 %v4037
  %v4078 = vunpack.c.l.b16 %v4038
  %v4079 = vunpack.c.l.b16 %v4039
  %v4080 = vunpack.c.l.b16 %v4040
  %v4081 = vunpack.c.l.b16 %v4041
  %v4082 = vunpack.c.l.b16 %v4042
  %v4083 = vunpack.c.l.b16 %v4043
  %v4084 = vunpack.c.l.b16 %v4044
  %v4085 = vunpack.c.l.b16 %v4045
  %v4086 = vunpack.c.l.b16 %v4046
  %v4087 = vpack.c.b16 %v4068, %v4067
  %v4088 = vpack.c.b16 %v4070, %v4069
  %v4089 = vpack.c.b16 %v4072, %v4071
  %v4090 = vpack.c.b16 %v4074, %v4073
  %v4091 = vpack.c.b16 %v4076, %v4075
  %v4092 = vpack.c.b16 %v4078, %v4077
  %v4093 = vpack.c.b16 %v4080, %v4079
  %v4094 = vpack.c.b16 %v4082, %v4081
  %v4095 = vpack.c.b16 %v4084, %v4083
  %v4096 = vpack.c.b16 %v4086, %v4085
  %v4108 = vsel %vm493, %v4026, 0
  %4110 = vmatpush.bf16.msra.mxu0 %v4094
  %4111 = vmatpush.bf16.msra.mxu0 %v4093
  %4112 = vmatpush.bf16.msra.mxu0 %v4092
  %4113 = vmatpush.bf16.msra.mxu0 %v4091
  %4114 = vmatpush.bf16.msra.mxu0 %v4090
  %4115 = vmatpush.bf16.msra.mxu0 %v4089
  %4116 = vmatpush.bf16.msra.mxu0 %v4088
  %4117 = vmatpush.bf16.msra.mxu0 %v4087
  %4118 = vmatmul.bf16.gmra.mxu0 %v4025
  %v4119 = vpop.f32.mrf.mxu0
  %v4120 = vadd.f32 0.0, %v4119
  %v4121 = vpop.f32.mrf.mxu0
  %v4122 = vadd.f32 0.0, %v4121
  %4123 = vdwg.mxu0
  %4124 = vmatpush.bf16.msra.mxu0 0
  %4125 = vmatpush.bf16.msra.mxu0 0
  %4126 = vmatpush.bf16.msra.mxu0 0
  %4127 = vmatpush.bf16.msra.mxu0 0
  %4128 = vmatpush.bf16.msra.mxu0 0
  %4129 = vmatpush.bf16.msra.mxu0 0
  %4130 = vmatpush.bf16.msra.mxu0 %v4096
  %4131 = vmatpush.bf16.msra.mxu0 %v4095
  %4132 = vmatmul.bf16.gmra.mxu0 %v4108
  %v4133 = vpop.f32.mrf.mxu0
  %v4134 = vadd.f32 %v4120, %v4133
  %v4135 = vpop.f32.mrf.mxu0
  %v4136 = vadd.f32 %v4122, %v4135
  %4137 = vdwg.mxu0
  %v4138 = vadd.f32 %v3942, %v4134
  %v4139 = vadd.f32 %v3943, %v4136
  %s4140 = scalar_lea.vmem %s1, 128
  %v4141 = vld [vmem:[%s4140] sm:$0xff]
  %v4142 = vld [vmem:[%s4140 + $0x8] sm:$0xff]
  %v4145 = vunpack.c.l.b16 %v4141
  %v4146 = vunpack.c.h.b16 %v4141
  %v4147 = vunpack.c.l.b16 %v4142
  %v4148 = vunpack.c.h.b16 %v4142
  %v4149 = vpack.c.b16 %v4147, %v4145
  %v4150 = vpack.c.b16 %v4148, %v4146
  %v4153 = vsel %vm231, %v4150, 0
  %4155 = vmatpush.bf16.msra.mxu0 %v2534
  %4156 = vmatpush.bf16.msra.mxu0 %v2532
  %4157 = vmatpush.bf16.msra.mxu0 %v2530
  %4158 = vmatpush.bf16.msra.mxu0 %v2528
  %4159 = vmatpush.bf16.msra.mxu0 %v2526
  %4160 = vmatpush.bf16.msra.mxu0 %v2524
  %4161 = vmatpush.bf16.msra.mxu0 %v2522
  %4162 = vmatpush.bf16.msra.mxu0 %v2520
  %4163 = vmatmul.bf16.gmra.mxu0 %v4149
  %v4164 = vpop.f32.mrf.mxu0
  %v4165 = vadd.f32 %v2409, %v4164
  %v4166 = vpop.f32.mrf.mxu0
  %v4167 = vadd.f32 %v2409, %v4166
  %4168 = vdwg.mxu0
  %4169 = vmatpush.bf16.msra.mxu0 %v2586
  %4170 = vmatpush.bf16.msra.mxu0 %v2548
  %4171 = vmatpush.bf16.msra.mxu0 %v2546
  %4172 = vmatpush.bf16.msra.mxu0 %v2544
  %4173 = vmatpush.bf16.msra.mxu0 %v2542
  %4174 = vmatpush.bf16.msra.mxu0 %v2540
  %4175 = vmatpush.bf16.msra.mxu0 %v2538
  %4176 = vmatpush.bf16.msra.mxu0 %v2536
  %4177 = vmatmul.bf16.gmra.mxu0 %v4153
  %v4178 = vpop.f32.mrf.mxu0
  %v4179 = vadd.f32 %v4165, %v4178
  %v4180 = vpop.f32.mrf.mxu0
  %v4181 = vadd.f32 %v4167, %v4180
  %4182 = vdwg.mxu0
  %4183 = vmatpush.bf16.msra.mxu0 %v2535
  %4184 = vmatpush.bf16.msra.mxu0 %v2533
  %4185 = vmatpush.bf16.msra.mxu0 %v2531
  %4186 = vmatpush.bf16.msra.mxu0 %v2529
  %4187 = vmatpush.bf16.msra.mxu0 %v2527
  %4188 = vmatpush.bf16.msra.mxu0 %v2525
  %4189 = vmatpush.bf16.msra.mxu0 %v2523
  %4190 = vmatpush.bf16.msra.mxu0 %v2521
  %4191 = vmatmul.bf16.gmra.mxu0 %v4149
  %v4192 = vpop.f32.mrf.mxu0
  %v4193 = vadd.f32 %v2410, %v4192
  %v4194 = vpop.f32.mrf.mxu0
  %v4195 = vadd.f32 %v2410, %v4194
  %4196 = vdwg.mxu0
  %4197 = vmatpush.bf16.msra.mxu0 %v2589
  %4198 = vmatpush.bf16.msra.mxu0 %v2549
  %4199 = vmatpush.bf16.msra.mxu0 %v2547
  %4200 = vmatpush.bf16.msra.mxu0 %v2545
  %4201 = vmatpush.bf16.msra.mxu0 %v2543
  %4202 = vmatpush.bf16.msra.mxu0 %v2541
  %4203 = vmatpush.bf16.msra.mxu0 %v2539
  %4204 = vmatpush.bf16.msra.mxu0 %v2537
  %4205 = vmatmul.bf16.gmra.mxu0 %v4153
  %v4206 = vpop.f32.mrf.mxu0
  %v4207 = vadd.f32 %v4193, %v4206
  %v4208 = vpop.f32.mrf.mxu0
  %v4209 = vadd.f32 %v4195, %v4208
  %4210 = vdwg.mxu0
  %v4211 = vpack.c.bf16 %v4181, %v4179
  %v4212 = vpack.c.bf16 %v4209, %v4207
  %v4213 = vunpack.c.l.bf16 %v4211
  %v4214 = vunpack.c.l.bf16 %v4212
  %v4215 = vunpack.c.h.bf16 %v4211
  %v4216 = vunpack.c.h.bf16 %v4212
  %v4217 = vtanh.pop %v4213
  %v4218 = vtanh.pop %v4214
  %v4219 = vtanh.pop %v4215
  %v4220 = vtanh.pop %v4216
  %v4221 = vpack.c.bf16 %v4219, %v4217
  %v4222 = vpack.c.bf16 %v4220, %v4218
  %v4223 = vld [vmem:[%s3 + $0x504] sm:$0xf]
  %v4224 = vld [vmem:[%s3 + $0x50c] sm:$0xf]
  %v4225 = vld [vmem:[%s3 + $0x514] sm:$0xf]
  %v4226 = vld [vmem:[%s3 + $0x51c] sm:$0xf]
  %v4227 = vld [vmem:[%s3 + $0x524] sm:$0xf]
  %v4228 = vld [vmem:[%s3 + $0x52c] sm:$0xf]
  %v4229 = vld [vmem:[%s3 + $0x534] sm:$0xf]
  %v4230 = vld [vmem:[%s3 + $0x53c] sm:$0xf]
  %v4231 = vld [vmem:[%s3 + $0x544] sm:$0xf]
  %v4232 = vld [vmem:[%s3 + $0x54c] sm:$0xf]
  %v4233 = vld [vmem:[%s3 + $0x554] sm:$0xf]
  %v4234 = vld [vmem:[%s3 + $0x55c] sm:$0xf]
  %v4235 = vld [vmem:[%s3 + $0x564] sm:$0xf]
  %v4236 = vld [vmem:[%s3 + $0x56c] sm:$0xf]
  %v4237 = vld [vmem:[%s3 + $0x574] sm:$0xf]
  %v4238 = vld [vmem:[%s3 + $0x57c] sm:$0xf]
  %v4239 = vld [vmem:[%s3 + $0x584] sm:$0xf]
  %v4240 = vld [vmem:[%s3 + $0x58c] sm:$0xf]
  %v4241 = vld [vmem:[%s3 + $0x594] sm:$0xf]
  %v4242 = vld [vmem:[%s3 + $0x59c] sm:$0xf]
  %v4263 = vunpack.c.l.b16 %v4223
  %v4264 = vunpack.c.l.b16 %v4224
  %v4265 = vunpack.c.l.b16 %v4225
  %v4266 = vunpack.c.l.b16 %v4226
  %v4267 = vunpack.c.l.b16 %v4227
  %v4268 = vunpack.c.l.b16 %v4228
  %v4269 = vunpack.c.l.b16 %v4229
  %v4270 = vunpack.c.l.b16 %v4230
  %v4271 = vunpack.c.l.b16 %v4231
  %v4272 = vunpack.c.l.b16 %v4232
  %v4273 = vunpack.c.l.b16 %v4233
  %v4274 = vunpack.c.l.b16 %v4234
  %v4275 = vunpack.c.l.b16 %v4235
  %v4276 = vunpack.c.l.b16 %v4236
  %v4277 = vunpack.c.l.b16 %v4237
  %v4278 = vunpack.c.l.b16 %v4238
  %v4279 = vunpack.c.l.b16 %v4239
  %v4280 = vunpack.c.l.b16 %v4240
  %v4281 = vunpack.c.l.b16 %v4241
  %v4282 = vunpack.c.l.b16 %v4242
  %v4283 = vpack.c.b16 %v4264, %v4263
  %v4284 = vpack.c.b16 %v4266, %v4265
  %v4285 = vpack.c.b16 %v4268, %v4267
  %v4286 = vpack.c.b16 %v4270, %v4269
  %v4287 = vpack.c.b16 %v4272, %v4271
  %v4288 = vpack.c.b16 %v4274, %v4273
  %v4289 = vpack.c.b16 %v4276, %v4275
  %v4290 = vpack.c.b16 %v4278, %v4277
  %v4291 = vpack.c.b16 %v4280, %v4279
  %v4292 = vpack.c.b16 %v4282, %v4281
  %v4304 = vsel %vm493, %v4222, 0
  %4306 = vmatpush.bf16.msra.mxu0 %v4290
  %4307 = vmatpush.bf16.msra.mxu0 %v4289
  %4308 = vmatpush.bf16.msra.mxu0 %v4288
  %4309 = vmatpush.bf16.msra.mxu0 %v4287
  %4310 = vmatpush.bf16.msra.mxu0 %v4286
  %4311 = vmatpush.bf16.msra.mxu0 %v4285
  %4312 = vmatpush.bf16.msra.mxu0 %v4284
  %4313 = vmatpush.bf16.msra.mxu0 %v4283
  %4314 = vmatmul.bf16.gmra.mxu0 %v4221
  %v4315 = vpop.f32.mrf.mxu0
  %v4316 = vadd.f32 0.0, %v4315
  %v4317 = vpop.f32.mrf.mxu0
  %v4318 = vadd.f32 0.0, %v4317
  %4319 = vdwg.mxu0
  %4320 = vmatpush.bf16.msra.mxu0 0
  %4321 = vmatpush.bf16.msra.mxu0 0
  %4322 = vmatpush.bf16.msra.mxu0 0
  %4323 = vmatpush.bf16.msra.mxu0 0
  %4324 = vmatpush.bf16.msra.mxu0 0
  %4325 = vmatpush.bf16.msra.mxu0 0
  %4326 = vmatpush.bf16.msra.mxu0 %v4292
  %4327 = vmatpush.bf16.msra.mxu0 %v4291
  %4328 = vmatmul.bf16.gmra.mxu0 %v4304
  %v4329 = vpop.f32.mrf.mxu0
  %v4330 = vadd.f32 %v4316, %v4329
  %v4331 = vpop.f32.mrf.mxu0
  %v4332 = vadd.f32 %v4318, %v4331
  %4333 = vdwg.mxu0
  %v4334 = vadd.f32 %v4138, %v4330
  %v4335 = vadd.f32 %v4139, %v4332
  %s4336 = scalar_lea.vmem %s1, 144
  %v4337 = vld [vmem:[%s4336] sm:$0xff]
  %v4338 = vld [vmem:[%s4336 + $0x8] sm:$0xff]
  %v4341 = vunpack.c.l.b16 %v4337
  %v4342 = vunpack.c.h.b16 %v4337
  %v4343 = vunpack.c.l.b16 %v4338
  %v4344 = vunpack.c.h.b16 %v4338
  %v4345 = vpack.c.b16 %v4343, %v4341
  %v4346 = vpack.c.b16 %v4344, %v4342
  %v4349 = vsel %vm231, %v4346, 0
  %4351 = vmatpush.bf16.msra.mxu0 %v2534
  %4352 = vmatpush.bf16.msra.mxu0 %v2532
  %4353 = vmatpush.bf16.msra.mxu0 %v2530
  %4354 = vmatpush.bf16.msra.mxu0 %v2528
  %4355 = vmatpush.bf16.msra.mxu0 %v2526
  %4356 = vmatpush.bf16.msra.mxu0 %v2524
  %4357 = vmatpush.bf16.msra.mxu0 %v2522
  %4358 = vmatpush.bf16.msra.mxu0 %v2520
  %4359 = vmatmul.bf16.gmra.mxu0 %v4345
  %v4360 = vpop.f32.mrf.mxu0
  %v4361 = vadd.f32 %v2409, %v4360
  %v4362 = vpop.f32.mrf.mxu0
  %v4363 = vadd.f32 %v2409, %v4362
  %4364 = vdwg.mxu0
  %4365 = vmatpush.bf16.msra.mxu0 %v2586
  %4366 = vmatpush.bf16.msra.mxu0 %v2548
  %4367 = vmatpush.bf16.msra.mxu0 %v2546
  %4368 = vmatpush.bf16.msra.mxu0 %v2544
  %4369 = vmatpush.bf16.msra.mxu0 %v2542
  %4370 = vmatpush.bf16.msra.mxu0 %v2540
  %4371 = vmatpush.bf16.msra.mxu0 %v2538
  %4372 = vmatpush.bf16.msra.mxu0 %v2536
  %4373 = vmatmul.bf16.gmra.mxu0 %v4349
  %v4374 = vpop.f32.mrf.mxu0
  %v4375 = vadd.f32 %v4361, %v4374
  %v4376 = vpop.f32.mrf.mxu0
  %v4377 = vadd.f32 %v4363, %v4376
  %4378 = vdwg.mxu0
  %4379 = vmatpush.bf16.msra.mxu0 %v2535
  %4380 = vmatpush.bf16.msra.mxu0 %v2533
  %4381 = vmatpush.bf16.msra.mxu0 %v2531
  %4382 = vmatpush.bf16.msra.mxu0 %v2529
  %4383 = vmatpush.bf16.msra.mxu0 %v2527
  %4384 = vmatpush.bf16.msra.mxu0 %v2525
  %4385 = vmatpush.bf16.msra.mxu0 %v2523
  %4386 = vmatpush.bf16.msra.mxu0 %v2521
  %4387 = vmatmul.bf16.gmra.mxu0 %v4345
  %v4388 = vpop.f32.mrf.mxu0
  %v4389 = vadd.f32 %v2410, %v4388
  %v4390 = vpop.f32.mrf.mxu0
  %v4391 = vadd.f32 %v2410, %v4390
  %4392 = vdwg.mxu0
  %4393 = vmatpush.bf16.msra.mxu0 %v2589
  %4394 = vmatpush.bf16.msra.mxu0 %v2549
  %4395 = vmatpush.bf16.msra.mxu0 %v2547
  %4396 = vmatpush.bf16.msra.mxu0 %v2545
  %4397 = vmatpush.bf16.msra.mxu0 %v2543
  %4398 = vmatpush.bf16.msra.mxu0 %v2541
  %4399 = vmatpush.bf16.msra.mxu0 %v2539
  %4400 = vmatpush.bf16.msra.mxu0 %v2537
  %4401 = vmatmul.bf16.gmra.mxu0 %v4349
  %v4402 = vpop.f32.mrf.mxu0
  %v4403 = vadd.f32 %v4389, %v4402
  %v4404 = vpop.f32.mrf.mxu0
  %v4405 = vadd.f32 %v4391, %v4404
  %4406 = vdwg.mxu0
  %v4407 = vpack.c.bf16 %v4377, %v4375
  %v4408 = vpack.c.bf16 %v4405, %v4403
  %v4409 = vunpack.c.l.bf16 %v4407
  %v4410 = vunpack.c.l.bf16 %v4408
  %v4411 = vunpack.c.h.bf16 %v4407
  %v4412 = vunpack.c.h.bf16 %v4408
  %v4413 = vtanh.pop %v4409
  %v4414 = vtanh.pop %v4410
  %v4415 = vtanh.pop %v4411
  %v4416 = vtanh.pop %v4412
  %v4417 = vpack.c.bf16 %v4415, %v4413
  %v4418 = vpack.c.bf16 %v4416, %v4414
  %v4419 = vld [vmem:[%s3 + $0x5a4] sm:$0xf]
  %v4420 = vld [vmem:[%s3 + $0x5ac] sm:$0xf]
  %v4421 = vld [vmem:[%s3 + $0x5b4] sm:$0xf]
  %v4422 = vld [vmem:[%s3 + $0x5bc] sm:$0xf]
  %v4423 = vld [vmem:[%s3 + $0x5c4] sm:$0xf]
  %v4424 = vld [vmem:[%s3 + $0x5cc] sm:$0xf]
  %v4425 = vld [vmem:[%s3 + $0x5d4] sm:$0xf]
  %v4426 = vld [vmem:[%s3 + $0x5dc] sm:$0xf]
  %v4427 = vld [vmem:[%s3 + $0x5e4] sm:$0xf]
  %v4428 = vld [vmem:[%s3 + $0x5ec] sm:$0xf]
  %v4429 = vld [vmem:[%s3 + $0x5f4] sm:$0xf]
  %v4430 = vld [vmem:[%s3 + $0x5fc] sm:$0xf]
  %v4431 = vld [vmem:[%s3 + $0x604] sm:$0xf]
  %v4432 = vld [vmem:[%s3 + $0x60c] sm:$0xf]
  %v4433 = vld [vmem:[%s3 + $0x614] sm:$0xf]
  %v4434 = vld [vmem:[%s3 + $0x61c] sm:$0xf]
  %v4435 = vld [vmem:[%s3 + $0x624] sm:$0xf]
  %v4436 = vld [vmem:[%s3 + $0x62c] sm:$0xf]
  %v4437 = vld [vmem:[%s3 + $0x634] sm:$0xf]
  %v4438 = vld [vmem:[%s3 + $0x63c] sm:$0xf]
  %v4459 = vunpack.c.l.b16 %v4419
  %v4460 = vunpack.c.l.b16 %v4420
  %v4461 = vunpack.c.l.b16 %v4421
  %v4462 = vunpack.c.l.b16 %v4422
  %v4463 = vunpack.c.l.b16 %v4423
  %v4464 = vunpack.c.l.b16 %v4424
  %v4465 = vunpack.c.l.b16 %v4425
  %v4466 = vunpack.c.l.b16 %v4426
  %v4467 = vunpack.c.l.b16 %v4427
  %v4468 = vunpack.c.l.b16 %v4428
  %v4469 = vunpack.c.l.b16 %v4429
  %v4470 = vunpack.c.l.b16 %v4430
  %v4471 = vunpack.c.l.b16 %v4431
  %v4472 = vunpack.c.l.b16 %v4432
  %v4473 = vunpack.c.l.b16 %v4433
  %v4474 = vunpack.c.l.b16 %v4434
  %v4475 = vunpack.c.l.b16 %v4435
  %v4476 = vunpack.c.l.b16 %v4436
  %v4477 = vunpack.c.l.b16 %v4437
  %v4478 = vunpack.c.l.b16 %v4438
  %v4479 = vpack.c.b16 %v4460, %v4459
  %v4480 = vpack.c.b16 %v4462, %v4461
  %v4481 = vpack.c.b16 %v4464, %v4463
  %v4482 = vpack.c.b16 %v4466, %v4465
  %v4483 = vpack.c.b16 %v4468, %v4467
  %v4484 = vpack.c.b16 %v4470, %v4469
  %v4485 = vpack.c.b16 %v4472, %v4471
  %v4486 = vpack.c.b16 %v4474, %v4473
  %v4487 = vpack.c.b16 %v4476, %v4475
  %v4488 = vpack.c.b16 %v4478, %v4477
  %v4500 = vsel %vm493, %v4418, 0
  %4502 = vmatpush.bf16.msra.mxu0 %v4486
  %4503 = vmatpush.bf16.msra.mxu0 %v4485
  %4504 = vmatpush.bf16.msra.mxu0 %v4484
  %4505 = vmatpush.bf16.msra.mxu0 %v4483
  %4506 = vmatpush.bf16.msra.mxu0 %v4482
  %4507 = vmatpush.bf16.msra.mxu0 %v4481
  %4508 = vmatpush.bf16.msra.mxu0 %v4480
  %4509 = vmatpush.bf16.msra.mxu0 %v4479
  %4510 = vmatmul.bf16.gmra.mxu0 %v4417
  %v4511 = vpop.f32.mrf.mxu0
  %v4512 = vadd.f32 0.0, %v4511
  %v4513 = vpop.f32.mrf.mxu0
  %v4514 = vadd.f32 0.0, %v4513
  %4515 = vdwg.mxu0
  %4516 = vmatpush.bf16.msra.mxu0 0
  %4517 = vmatpush.bf16.msra.mxu0 0
  %4518 = vmatpush.bf16.msra.mxu0 0
  %4519 = vmatpush.bf16.msra.mxu0 0
  %4520 = vmatpush.bf16.msra.mxu0 0
  %4521 = vmatpush.bf16.msra.mxu0 0
  %4522 = vmatpush.bf16.msra.mxu0 %v4488
  %4523 = vmatpush.bf16.msra.mxu0 %v4487
  %4524 = vmatmul.bf16.gmra.mxu0 %v4500
  %v4525 = vpop.f32.mrf.mxu0
  %v4526 = vadd.f32 %v4512, %v4525
  %v4527 = vpop.f32.mrf.mxu0
  %v4528 = vadd.f32 %v4514, %v4527
  %4529 = vdwg.mxu0
  %v4530 = vadd.f32 %v4334, %v4526
  %v4531 = vadd.f32 %v4335, %v4528
  %v4532 = vld [vmem:[%s5 + $0x30] ss:$0 sm:$0xff]
  %v4533 = vadd.f32 %v4530, %v4532
  %v4534 = vadd.f32 %v4531, %v4532
  %v4535 = vpack.c.bf16 %v4534, %v4533
  %v4536 = vunpack.c.l.bf16 %v4535
  %v4537 = vunpack.c.h.bf16 %v4535
  %v4538 = vtanh.pop %v4536
  %v4539 = vtanh.pop %v4537
  %v4540 = vpack.c.bf16 %v4539, %v4538
  %v4541 = vld [vmem:[%s4 + $0x40] sm:$0xf]
  %v4542 = vld [vmem:[%s4 + $0x44] sm:$0xf]
  %v4543 = vld [vmem:[%s4 + $0x48] sm:$0xf]
  %v4544 = vld [vmem:[%s4 + $0x4c] sm:$0xf]
  %v4545 = vld [vmem:[%s4 + $0x50] sm:$0xf]
  %v4546 = vld [vmem:[%s4 + $0x54] sm:$0xf]
  %v4547 = vld [vmem:[%s4 + $0x58] sm:$0xf]
  %v4548 = vld [vmem:[%s4 + $0x5c] sm:$0xf]
  %v4549 = vld [vmem:[%s4 + $0x60] sm:$0xf]
  %v4550 = vld [vmem:[%s4 + $0x64] sm:$0xf]
  %v4551 = vld [vmem:[%s4 + $0x68] sm:$0xf]
  %v4552 = vld [vmem:[%s4 + $0x6c] sm:$0xf]
  %v4553 = vld [vmem:[%s4 + $0x70] sm:$0xf]
  %v4554 = vld [vmem:[%s4 + $0x74] sm:$0xf]
  %v4555 = vld [vmem:[%s4 + $0x78] sm:$0xf]
  %v4556 = vld [vmem:[%s4 + $0x7c] sm:$0xf]
  %v4557 = vld [vmem:[%s5 + $0x50] ss:$0 sm:$0xff]
  %v4574 = vunpack.c.l.b16 %v4541
  %v4575 = vunpack.c.l.b16 %v4542
  %v4576 = vunpack.c.l.b16 %v4543
  %v4577 = vunpack.c.l.b16 %v4544
  %v4578 = vunpack.c.l.b16 %v4545
  %v4579 = vunpack.c.l.b16 %v4546
  %v4580 = vunpack.c.l.b16 %v4547
  %v4581 = vunpack.c.l.b16 %v4548
  %v4582 = vunpack.c.l.b16 %v4549
  %v4583 = vunpack.c.l.b16 %v4550
  %v4584 = vunpack.c.l.b16 %v4551
  %v4585 = vunpack.c.l.b16 %v4552
  %v4586 = vunpack.c.l.b16 %v4553
  %v4587 = vunpack.c.l.b16 %v4554
  %v4588 = vunpack.c.l.b16 %v4555
  %v4589 = vunpack.c.l.b16 %v4556
  %v4590 = vpack.c.b16 %v4575, %v4574
  %v4591 = vpack.c.b16 %v4577, %v4576
  %v4592 = vpack.c.b16 %v4579, %v4578
  %v4593 = vpack.c.b16 %v4581, %v4580
  %v4594 = vpack.c.b16 %v4583, %v4582
  %v4595 = vpack.c.b16 %v4585, %v4584
  %v4596 = vpack.c.b16 %v4587, %v4586
  %v4597 = vpack.c.b16 %v4589, %v4588
  %4606 = vmatpush.bf16.msra.mxu0 %v4597
  %4607 = vmatpush.bf16.msra.mxu0 %v4596
  %4608 = vmatpush.bf16.msra.mxu0 %v4595
  %4609 = vmatpush.bf16.msra.mxu0 %v4594
  %4610 = vmatpush.bf16.msra.mxu0 %v4593
  %4611 = vmatpush.bf16.msra.mxu0 %v4592
  %4612 = vmatpush.bf16.msra.mxu0 %v4591
  %4613 = vmatpush.bf16.msra.mxu0 %v4590
  %4614 = vmatmul.bf16.gmra.mxu0 %v4540
  %v4615 = vpop.f32.mrf.mxu0
  %v4616 = vadd.f32 %v4557, %v4615
  %v4617 = vpop.f32.mrf.mxu0
  %v4618 = vadd.f32 %v4557, %v4617
  %4619 = vdwg.mxu0
  %v4620 = vmax.f32 %v4616, 0.0
  %v4621 = vmax.f32 %v4618, 0.0
  %v4622 = vpack.c.bf16 %v4621, %v4620
  %v4623 = vld [vmem:[%s4 + $0xc0] sm:$0xf]
  %v4624 = vld [vmem:[%s4 + $0xc4] sm:$0xf]
  %v4625 = vld [vmem:[%s4 + $0xc8] sm:$0xf]
  %v4626 = vld [vmem:[%s4 + $0xcc] sm:$0xf]
  %v4627 = vld [vmem:[%s4 + $0xd0] sm:$0xf]
  %v4628 = vld [vmem:[%s4 + $0xd4] sm:$0xf]
  %v4629 = vld [vmem:[%s4 + $0xd8] sm:$0xf]
  %v4630 = vld [vmem:[%s4 + $0xdc] sm:$0xf]
  %v4631 = vld [vmem:[%s4 + $0xe0] sm:$0xf]
  %v4632 = vld [vmem:[%s4 + $0xe4] sm:$0xf]
  %v4633 = vld [vmem:[%s4 + $0xe8] sm:$0xf]
  %v4634 = vld [vmem:[%s4 + $0xec] sm:$0xf]
  %v4635 = vld [vmem:[%s4 + $0xf0] sm:$0xf]
  %v4636 = vld [vmem:[%s4 + $0xf4] sm:$0xf]
  %v4637 = vld [vmem:[%s4 + $0xf8] sm:$0xf]
  %v4638 = vld [vmem:[%s4 + $0xfc] sm:$0xf]
  %v4639 = vld [vmem:[%s5 + $0x70] ss:$0 sm:$0xff]
  %v4656 = vunpack.c.l.b16 %v4623
  %v4657 = vunpack.c.l.b16 %v4624
  %v4658 = vunpack.c.l.b16 %v4625
  %v4659 = vunpack.c.l.b16 %v4626
  %v4660 = vunpack.c.l.b16 %v4627
  %v4661 = vunpack.c.l.b16 %v4628
  %v4662 = vunpack.c.l.b16 %v4629
  %v4663 = vunpack.c.l.b16 %v4630
  %v4664 = vunpack.c.l.b16 %v4631
  %v4665 = vunpack.c.l.b16 %v4632
  %v4666 = vunpack.c.l.b16 %v4633
  %v4667 = vunpack.c.l.b16 %v4634
  %v4668 = vunpack.c.l.b16 %v4635
  %v4669 = vunpack.c.l.b16 %v4636
  %v4670 = vunpack.c.l.b16 %v4637
  %v4671 = vunpack.c.l.b16 %v4638
  %v4672 = vpack.c.b16 %v4657, %v4656
  %v4673 = vpack.c.b16 %v4659, %v4658
  %v4674 = vpack.c.b16 %v4661, %v4660
  %v4675 = vpack.c.b16 %v4663, %v4662
  %v4676 = vpack.c.b16 %v4665, %v4664
  %v4677 = vpack.c.b16 %v4667, %v4666
  %v4678 = vpack.c.b16 %v4669, %v4668
  %v4679 = vpack.c.b16 %v4671, %v4670
  %4688 = vmatpush.bf16.msra.mxu0 %v4679
  %4689 = vmatpush.bf16.msra.mxu0 %v4678
  %4690 = vmatpush.bf16.msra.mxu0 %v4677
  %4691 = vmatpush.bf16.msra.mxu0 %v4676
  %4692 = vmatpush.bf16.msra.mxu0 %v4675
  %4693 = vmatpush.bf16.msra.mxu0 %v4674
  %4694 = vmatpush.bf16.msra.mxu0 %v4673
  %4695 = vmatpush.bf16.msra.mxu0 %v4672
  %4696 = vmatmul.bf16.gmra.mxu0 %v4622
  %v4697 = vpop.f32.mrf.mxu0
  %v4698 = vadd.f32 %v4639, %v4697
  %v4699 = vpop.f32.mrf.mxu0
  %v4700 = vadd.f32 %v4639, %v4699
  %4701 = vdwg.mxu0
  %4702 = vmax.xlane.f32.xlu0 %v4698
  %v4703 = vpop.xlane.xlu0 %4702
  %4704 = vmax.xlane.f32.xlu0 %v4700
  %v4705 = vpop.xlane.xlu0 %4704
  %v4706 = vsub.f32 %v4698, %v4703
  %v4707 = vsub.f32 %v4700, %v4705
  %v4708 = vmul.f32 %v4706, 1.442695
  %v4709 = vpow.pop %v4708
  %v4710 = vmul.f32 %v4707, 1.442695
  %v4711 = vpow.pop %v4710
  %4712 = vadd.xlane.f32.xlu0 %v4709
  %v4713 = vpop.xlane.xlu0 %4712
  %4714 = vadd.xlane.f32.xlu0 %v4711
  %v4715 = vpop.xlane.xlu0 %4714
  %v4716 = vlog2.pop %v4713
  %v4717 = vmul.f32 %v4716, 0.6931472
  %v4718 = vlog2.pop %v4715
  %v4719 = vmul.f32 %v4718, 0.6931472
  %v4720 = vsub.f32 %v4706, %v4717
  %v4721 = vsub.f32 %v4707, %v4719
  %v4722 = vpack.c.bf16 %v2373, %v2372
  %v4723 = vpack.c.bf16 %v4721, %v4720
  %v4724 = vld [vmem:[%s4 + $0x100] sm:$0xf]
  %v4725 = vld [vmem:[%s4 + $0x104] sm:$0xf]
  %v4726 = vld [vmem:[%s4 + $0x108] sm:$0xf]
  %v4727 = vld [vmem:[%s4 + $0x10c] sm:$0xf]
  %v4728 = vld [vmem:[%s4 + $0x110] sm:$0xf]
  %v4729 = vld [vmem:[%s4 + $0x114] sm:$0xf]
  %v4730 = vld [vmem:[%s4 + $0x118] sm:$0xf]
  %v4731 = vld [vmem:[%s4 + $0x11c] sm:$0xf]
  %v4732 = vld [vmem:[%s4 + $0x120] sm:$0xf]
  %v4733 = vld [vmem:[%s4 + $0x124] sm:$0xf]
  %v4734 = vld [vmem:[%s4 + $0x128] sm:$0xf]
  %v4735 = vld [vmem:[%s4 + $0x12c] sm:$0xf]
  %v4736 = vld [vmem:[%s4 + $0x130] sm:$0xf]
  %v4737 = vld [vmem:[%s4 + $0x134] sm:$0xf]
  %v4738 = vld [vmem:[%s4 + $0x138] sm:$0xf]
  %v4739 = vld [vmem:[%s4 + $0x13c] sm:$0xf]
  %v4740 = vld [vmem:[%s4 + $0x140] sm:$0xf]
  %v4741 = vld [vmem:[%s4 + $0x144] sm:$0xf]
  %v4742 = vld [vmem:[%s4 + $0x148] sm:$0xf]
  %v4743 = vld [vmem:[%s4 + $0x14c] sm:$0xf]
  %v4744 = vld [vmem:[%s4 + $0x150] sm:$0xf]
  %v4745 = vld [vmem:[%s4 + $0x154] sm:$0xf]
  %v4746 = vld [vmem:[%s4 + $0x158] sm:$0xf]
  %v4747 = vld [vmem:[%s4 + $0x15c] sm:$0xf]
  %v4748 = vld [vmem:[%s4 + $0x160] sm:$0xf]
  %v4749 = vld [vmem:[%s4 + $0x164] sm:$0xf]
  %v4750 = vld [vmem:[%s4 + $0x168] sm:$0xf]
  %v4751 = vld [vmem:[%s4 + $0x16c] sm:$0xf]
  %v4752 = vld [vmem:[%s4 + $0x170] sm:$0xf]
  %v4753 = vld [vmem:[%s4 + $0x174] sm:$0xf]
  %v4754 = vld [vmem:[%s4 + $0x178] sm:$0xf]
  %v4755 = vld [vmem:[%s4 + $0x17c] sm:$0xf]
  %v4756 = vld [vmem:[%s5 + $0x80] ss:$0 sm:$0xff]
  %v4789 = vunpack.c.l.b16 %v4724
  %v4790 = vunpack.c.l.b16 %v4725
  %v4791 = vunpack.c.l.b16 %v4726
  %v4792 = vunpack.c.l.b16 %v4727
  %v4793 = vunpack.c.l.b16 %v4728
  %v4794 = vunpack.c.l.b16 %v4729
  %v4795 = vunpack.c.l.b16 %v4730
  %v4796 = vunpack.c.l.b16 %v4731
  %v4797 = vunpack.c.l.b16 %v4732
  %v4798 = vunpack.c.l.b16 %v4733
  %v4799 = vunpack.c.l.b16 %v4734
  %v4800 = vunpack.c.l.b16 %v4735
  %v4801 = vunpack.c.l.b16 %v4736
  %v4802 = vunpack.c.l.b16 %v4737
  %v4803 = vunpack.c.l.b16 %v4738
  %v4804 = vunpack.c.l.b16 %v4739
  %v4805 = vunpack.c.l.b16 %v4740
  %v4806 = vunpack.c.l.b16 %v4741
  %v4807 = vunpack.c.l.b16 %v4742
  %v4808 = vunpack.c.l.b16 %v4743
  %v4809 = vunpack.c.l.b16 %v4744
  %v4810 = vunpack.c.l.b16 %v4745
  %v4811 = vunpack.c.l.b16 %v4746
  %v4812 = vunpack.c.l.b16 %v4747
  %v4813 = vunpack.c.l.b16 %v4748
  %v4814 = vunpack.c.l.b16 %v4749
  %v4815 = vunpack.c.l.b16 %v4750
  %v4816 = vunpack.c.l.b16 %v4751
  %v4817 = vunpack.c.l.b16 %v4752
  %v4818 = vunpack.c.l.b16 %v4753
  %v4819 = vunpack.c.l.b16 %v4754
  %v4820 = vunpack.c.l.b16 %v4755
  %v4821 = vpack.c.b16 %v4790, %v4789
  %v4822 = vpack.c.b16 %v4792, %v4791
  %v4823 = vpack.c.b16 %v4794, %v4793
  %v4824 = vpack.c.b16 %v4796, %v4795
  %v4825 = vpack.c.b16 %v4798, %v4797
  %v4826 = vpack.c.b16 %v4800, %v4799
  %v4827 = vpack.c.b16 %v4802, %v4801
  %v4828 = vpack.c.b16 %v4804, %v4803
  %v4829 = vpack.c.b16 %v4806, %v4805
  %v4830 = vpack.c.b16 %v4808, %v4807
  %v4831 = vpack.c.b16 %v4810, %v4809
  %v4832 = vpack.c.b16 %v4812, %v4811
  %v4833 = vpack.c.b16 %v4814, %v4813
  %v4834 = vpack.c.b16 %v4816, %v4815
  %v4835 = vpack.c.b16 %v4818, %v4817
  %v4836 = vpack.c.b16 %v4820, %v4819
  %4853 = vmatpush.bf16.msra.mxu0 %v4828
  %4854 = vmatpush.bf16.msra.mxu0 %v4827
  %4855 = vmatpush.bf16.msra.mxu0 %v4826
  %4856 = vmatpush.bf16.msra.mxu0 %v4825
  %4857 = vmatpush.bf16.msra.mxu0 %v4824
  %4858 = vmatpush.bf16.msra.mxu0 %v4823
  %4859 = vmatpush.bf16.msra.mxu0 %v4822
  %4860 = vmatpush.bf16.msra.mxu0 %v4821
  %4861 = vmatmul.bf16.gmra.mxu0 %v4722
  %v4862 = vpop.f32.mrf.mxu0
  %v4863 = vadd.f32 %v4756, %v4862
  %v4864 = vpop.f32.mrf.mxu0
  %v4865 = vadd.f32 %v4756, %v4864
  %4866 = vdwg.mxu0
  %4867 = vmatpush.bf16.msra.mxu0 %v4836
  %4868 = vmatpush.bf16.msra.mxu0 %v4835
  %4869 = vmatpush.bf16.msra.mxu0 %v4834
  %4870 = vmatpush.bf16.msra.mxu0 %v4833
  %4871 = vmatpush.bf16.msra.mxu0 %v4832
  %4872 = vmatpush.bf16.msra.mxu0 %v4831
  %4873 = vmatpush.bf16.msra.mxu0 %v4830
  %4874 = vmatpush.bf16.msra.mxu0 %v4829
  %4875 = vmatmul.bf16.gmra.mxu0 %v4723
  %v4876 = vpop.f32.mrf.mxu0
  %v4877 = vadd.f32 %v4863, %v4876
  %v4878 = vpop.f32.mrf.mxu0
  %v4879 = vadd.f32 %v4865, %v4878
  %4880 = vdwg.mxu0
  %v4881 = vmax.f32 %v4877, 0.0
  %v4882 = vmax.f32 %v4879, 0.0
  %v4883 = vpack.c.bf16 %v4882, %v4881
  %v4884 = vld [vmem:[%s4 + $0x180] sm:$0xf]
  %v4885 = vld [vmem:[%s4 + $0x184] sm:$0xf]
  %v4886 = vld [vmem:[%s4 + $0x188] sm:$0xf]
  %v4887 = vld [vmem:[%s4 + $0x18c] sm:$0xf]
  %v4888 = vld [vmem:[%s4 + $0x190] sm:$0xf]
  %v4889 = vld [vmem:[%s4 + $0x194] sm:$0xf]
  %v4890 = vld [vmem:[%s4 + $0x198] sm:$0xf]
  %v4891 = vld [vmem:[%s4 + $0x19c] sm:$0xf]
  %v4892 = vld [vmem:[%s4 + $0x1a0] sm:$0xf]
  %v4893 = vld [vmem:[%s4 + $0x1a4] sm:$0xf]
  %v4894 = vld [vmem:[%s4 + $0x1a8] sm:$0xf]
  %v4895 = vld [vmem:[%s4 + $0x1ac] sm:$0xf]
  %v4896 = vld [vmem:[%s4 + $0x1b0] sm:$0xf]
  %v4897 = vld [vmem:[%s4 + $0x1b4] sm:$0xf]
  %v4898 = vld [vmem:[%s4 + $0x1b8] sm:$0xf]
  %v4899 = vld [vmem:[%s4 + $0x1bc] sm:$0xf]
  %v4900 = vld [vmem:[%s5 + $0x90] ss:$0 sm:$0xff]
  %v4917 = vunpack.c.l.b16 %v4884
  %v4918 = vunpack.c.l.b16 %v4885
  %v4919 = vunpack.c.l.b16 %v4886
  %v4920 = vunpack.c.l.b16 %v4887
  %v4921 = vunpack.c.l.b16 %v4888
  %v4922 = vunpack.c.l.b16 %v4889
  %v4923 = vunpack.c.l.b16 %v4890
  %v4924 = vunpack.c.l.b16 %v4891
  %v4925 = vunpack.c.l.b16 %v4892
  %v4926 = vunpack.c.l.b16 %v4893
  %v4927 = vunpack.c.l.b16 %v4894
  %v4928 = vunpack.c.l.b16 %v4895
  %v4929 = vunpack.c.l.b16 %v4896
  %v4930 = vunpack.c.l.b16 %v4897
  %v4931 = vunpack.c.l.b16 %v4898
  %v4932 = vunpack.c.l.b16 %v4899
  %v4933 = vpack.c.b16 %v4918, %v4917
  %v4934 = vpack.c.b16 %v4920, %v4919
  %v4935 = vpack.c.b16 %v4922, %v4921
  %v4936 = vpack.c.b16 %v4924, %v4923
  %v4937 = vpack.c.b16 %v4926, %v4925
  %v4938 = vpack.c.b16 %v4928, %v4927
  %v4939 = vpack.c.b16 %v4930, %v4929
  %v4940 = vpack.c.b16 %v4932, %v4931
  %4949 = vmatpush.bf16.msra.mxu0 %v4940
  %4950 = vmatpush.bf16.msra.mxu0 %v4939
  %4951 = vmatpush.bf16.msra.mxu0 %v4938
  %4952 = vmatpush.bf16.msra.mxu0 %v4937
  %4953 = vmatpush.bf16.msra.mxu0 %v4936
  %4954 = vmatpush.bf16.msra.mxu0 %v4935
  %4955 = vmatpush.bf16.msra.mxu0 %v4934
  %4956 = vmatpush.bf16.msra.mxu0 %v4933
  %4957 = vmatmul.bf16.gmra.mxu0 %v4883
  %v4958 = vpop.f32.mrf.mxu0
  %v4959 = vadd.f32 %v4900, %v4958
  %v4960 = vpop.f32.mrf.mxu0
  %v4961 = vadd.f32 %v4900, %v4960
  %4962 = vdwg.mxu0
  %v4963 = vmax.f32 %v4959, 0.0
  %v4964 = vmax.f32 %v4961, 0.0
  %v4965 = vpack.c.bf16 %v4964, %v4963
  %v4966 = vld [vmem:[%s4 + $0x1c0] sm:$0xf]
  %v4967 = vld [vmem:[%s4 + $0x1c4] sm:$0xf]
  %v4968 = vld [vmem:[%s4 + $0x1c8] sm:$0xf]
  %v4969 = vld [vmem:[%s4 + $0x1cc] sm:$0xf]
  %v4970 = vld [vmem:[%s4 + $0x1d0] sm:$0xf]
  %v4971 = vld [vmem:[%s4 + $0x1d4] sm:$0xf]
  %v4972 = vld [vmem:[%s4 + $0x1d8] sm:$0xf]
  %v4973 = vld [vmem:[%s4 + $0x1dc] sm:$0xf]
  %v4974 = vld [vmem:[%s4 + $0x1e0] sm:$0xf]
  %v4975 = vld [vmem:[%s4 + $0x1e4] sm:$0xf]
  %v4976 = vld [vmem:[%s4 + $0x1e8] sm:$0xf]
  %v4977 = vld [vmem:[%s4 + $0x1ec] sm:$0xf]
  %v4978 = vld [vmem:[%s4 + $0x1f0] sm:$0xf]
  %v4979 = vld [vmem:[%s4 + $0x1f4] sm:$0xf]
  %v4980 = vld [vmem:[%s4 + $0x1f8] sm:$0xf]
  %v4981 = vld [vmem:[%s4 + $0x1fc] sm:$0xf]
  %v4982 = vld [vmem:[%s5 + $0xa0] ss:$0 sm:$0xff]
  %v4999 = vunpack.c.l.b16 %v4966
  %v5000 = vunpack.c.l.b16 %v4967
  %v5001 = vunpack.c.l.b16 %v4968
  %v5002 = vunpack.c.l.b16 %v4969
  %v5003 = vunpack.c.l.b16 %v4970
  %v5004 = vunpack.c.l.b16 %v4971
  %v5005 = vunpack.c.l.b16 %v4972
  %v5006 = vunpack.c.l.b16 %v4973
  %v5007 = vunpack.c.l.b16 %v4974
  %v5008 = vunpack.c.l.b16 %v4975
  %v5009 = vunpack.c.l.b16 %v4976
  %v5010 = vunpack.c.l.b16 %v4977
  %v5011 = vunpack.c.l.b16 %v4978
  %v5012 = vunpack.c.l.b16 %v4979
  %v5013 = vunpack.c.l.b16 %v4980
  %v5014 = vunpack.c.l.b16 %v4981
  %v5015 = vpack.c.b16 %v5000, %v4999
  %v5016 = vpack.c.b16 %v5002, %v5001
  %v5017 = vpack.c.b16 %v5004, %v5003
  %v5018 = vpack.c.b16 %v5006, %v5005
  %v5019 = vpack.c.b16 %v5008, %v5007
  %v5020 = vpack.c.b16 %v5010, %v5009
  %v5021 = vpack.c.b16 %v5012, %v5011
  %v5022 = vpack.c.b16 %v5014, %v5013
  %5031 = vmatpush.bf16.msra.mxu0 %v5022
  %5032 = vmatpush.bf16.msra.mxu0 %v5021
  %5033 = vmatpush.bf16.msra.mxu0 %v5020
  %5034 = vmatpush.bf16.msra.mxu0 %v5019
  %5035 = vmatpush.bf16.msra.mxu0 %v5018
  %5036 = vmatpush.bf16.msra.mxu0 %v5017
  %5037 = vmatpush.bf16.msra.mxu0 %v5016
  %5038 = vmatpush.bf16.msra.mxu0 %v5015
  %5039 = vmatmul.bf16.gmra.mxu0 %v4965
  %v5040 = vpop.f32.mrf.mxu0
  %v5041 = vadd.f32 %v4982, %v5040
  %v5042 = vpop.f32.mrf.mxu0
  %v5043 = vadd.f32 %v4982, %v5042
  %5044 = vdwg.mxu0
  %v5045 = vsub.f32 0.0, %v5041
  %v5046 = vsub.f32 0.0, %v5043
  %v5047 = vmul.f32 %v5045, 1.442695
  %v5048 = vpow.pop %v5047
  %v5049 = vmul.f32 %v5046, 1.442695
  %v5050 = vpow.pop %v5049
  %v5051 = vadd.f32 %v5048, 1.0
  %v5052 = vadd.f32 %v5050, 1.0
  %v5053 = vrcp.pop %v5051
  %v5054 = vmul.f32 %v5051, %v5053
  %v5055 = vsub.f32 1.0, %v5054
  %v5056 = vmul.f32 %v5053, %v5055
  %v5057 = vadd.f32 %v5053, %v5056
  %vm5058 = vweird.f32 %v5051
  %vm5059 = vweird.f32 %v5053
  %vm5060 = vmor %vm5058, %vm5059
  %v5061 = vsel %vm5060, %v5053, %v5057
  %v5062 = vand.u32 2147483647, %v5051
  %vm5063 = vcmp.eq.f32.partialorder %v5062, 8.507059e+37
  %v5064 = vand.u32 %v5051, 2147483648
  %v5065 = vor.u32 1.1754944e-38, %v5064
  %v5066 = vsel %vm5063, %v5065, %v5061
  %v5067 = vmul.f32 1.0, %v5066
  %v5068 = vrcp.pop %v5052
  %v5069 = vmul.f32 %v5052, %v5068
  %v5070 = vsub.f32 1.0, %v5069
  %v5071 = vmul.f32 %v5068, %v5070
  %v5072 = vadd.f32 %v5068, %v5071
  %vm5073 = vweird.f32 %v5052
  %vm5074 = vweird.f32 %v5068
  %vm5075 = vmor %vm5073, %vm5074
  %v5076 = vsel %vm5075, %v5068, %v5072
  %v5077 = vand.u32 2147483647, %v5052
  %vm5078 = vcmp.eq.f32.partialorder %v5077, 8.507059e+37
  %v5079 = vand.u32 %v5052, 2147483648
  %v5080 = vor.u32 1.1754944e-38, %v5079
  %v5081 = vsel %vm5078, %v5080, %v5076
  %v5082 = vmul.f32 1.0, %v5081
  %5083 = vst [vmem:[%s6] sm:$0xff] %v5067
  %5084 = vst [vmem:[%s6 + $0x8] sm:$0xff] %v5082
  // Predicated region
  $region26: #{sub_lenet5_forward.1} parent=0 // pred_check
    _
  $region27: #{sub_lenet5_forward.1} parent=0 // pred_check_branch
    %5086 = sbr.rel (0) target = $region29
  $region28: #{sub_lenet5_forward.1} parent=0 // pred_region
    _
  $region29: #{sub_lenet5_forward.1} parent=0 // pred_fallthru
    _
  // Predicated region
  $region30: #{sub_lenet5_forward.1} parent=0 // pred_check
    _
  $region31: #{sub_lenet5_forward.1} parent=0 // pred_check_branch
    %5088 = sbr.rel (0) target = $region33
  $region32: #{sub_lenet5_forward.1} parent=0 // pred_region
    _
  $region33: #{sub_lenet5_forward.1} parent=0 // pred_fallthru
    _

</llo_original>
